<compile_context>
chip_gen: v6e
topology: v6e:2x2x1
jax: 0.10.0
libtpu: 0.0.40
codegen_flags: <defaults>
</compile_context>

<pallas_src>
import math
from functools import partial

import jax
import jax.numpy as jnp
from jax.experimental import pallas as pl
from jax.experimental.pallas import tpu as pltpu

ALPHA = 0.25   # nn.PReLU() default single shared parameter
EPS = 1e-5     # nn.BatchNorm2d default eps
KMAX = 5       # largest branch kernel (kernel_size default [1, 3, 5])
P = KMAX // 2  # global spatial frame padding


def _prelu(v):
    return jnp.where(v > 0, v, ALPHA * v)


# ----------------------------------------------------------------------------
# Fused kernel: branches (1 matmul) -> concat -> Conv_f (1 matmul) -> BN -> PReLU
# ----------------------------------------------------------------------------
def _fused_kernel(x_ref, mask_ref, wb_ref, bb_ref, wf_ref, bf_ref, g_ref, bt_ref,
                  o_ref, p5_ref, xce_ref, pf_ref,
                  *, cin_p, cout, lp, wp, m, pad_f, inv_count):
    """
    x_ref   : (cin_p, 2*m + lp)   zero-extended flattened padded input frame
    mask_ref: (1, lp)             1.0 on valid (interior) frame columns
    wb_ref  : (3*cout, 25*cin_p)  branch weights embedded in the 5x5 tap space
    wf_ref  : (cout, 9*3*cout)    Conv_f weights
    o_ref   : (cout, lp)          output frame (interior extracted by wrapper)
    p5/xce/pf: VMEM scratch (branch patches / extended xc / Conv_f patches)
    """
    mask = mask_ref[...]                                       # (1, lp)

    # ---- three branch convs as ONE matmul over the 5x5 tap space ------------
    t = 0
    for kh in range(KMAX):
        for kw in range(KMAX):
            a = m + (kh - P) * wp + (kw - P)                   # static lane shift
            p5_ref[t * cin_p:(t + 1) * cin_p, :] = x_ref[:, a:a + lp]
            t += 1
    xc = jnp.dot(wb_ref[...], p5_ref[...], preferred_element_type=jnp.float32)
    xc = _prelu(xc + bb_ref[...])                              # (3*cout, lp)
    xc = xc * mask                                             # zero halo == Conv_f SAME pad

    # ---- Conv_f: second single matmul on patches of the in-VMEM xc ----------
    c3 = 3 * cout
    xce_ref[...] = jnp.zeros((c3, lp + 2 * pad_f), jnp.float32)
    xce_ref[:, pad_f:pad_f + lp] = xc
    t = 0
    for kh in range(3):
        for kw in range(3):
            a = pad_f + (kh - 1) * wp + (kw - 1)
            pf_ref[t * c3:(t + 1) * c3, :] = xce_ref[:, a:a + lp]
            t += 1
    xf = jnp.dot(wf_ref[...], pf_ref[...], preferred_element_type=jnp.float32)
    xf = xf + bf_ref[...]                                      # (cout, lp)

    # ---- BatchNorm2d (training-mode batch stats, biased var) + PReLU --------
    mean = jnp.sum(xf * mask, axis=1, keepdims=True) * inv_count      # (cout, 1)
    cen = (xf - mean) * mask
    var = jnp.sum(cen * cen, axis=1, keepdims=True) * inv_count
    y = (xf - mean) * jax.lax.rsqrt(var + EPS) * g_ref[...] + bt_ref[...]
    o_ref[...] = _prelu(y).astype(o_ref.dtype)


# ----------------------------------------------------------------------------
# Wrapper: NHWC in / NHWC out. Only cheap layout plumbing happens outside the
# kernel (transpose/pad/reshape of the 8 KB input and the small weights).
# ----------------------------------------------------------------------------
def conv_transition_forward(x, params):
    N, H, W, Cin = x.shape
    Cout = params["gamma"].shape[0]
    Hp, Wp = H + 2 * P, W + 2 * P
    Lraw = N * Hp * Wp
    LP = ((Lraw + 127) // 128) * 128          # lane-dense frame length
    M = P * Wp + P                            # max |tap shift| for the branches
    PAD_F = 128                               # lane-aligned halo for Conv_f taps
    cin_p = ((Cin + 7) // 8) * 8              # sublane-aligned input channels

    # input -> (cin_p, N, Hp, Wp) zero-padded frame -> flattened & extended
    xt = jnp.transpose(x, (3, 0, 1, 2))
    xt = jnp.pad(xt, ((0, cin_p - Cin), (0, 0), (P, P), (P, P)))
    x_ext = jnp.pad(xt.reshape(cin_p, Lraw), ((0, 0), (M, M + LP - Lraw)))

    # interior-column mask of the flattened frame
    fm = jnp.zeros((Hp, Wp), jnp.float32).at[P:P + H, P:P + W].set(1.0)
    mask = jnp.pad(jnp.tile(fm.reshape(-1), (N,)), (0, LP - Lraw)).reshape(1, LP)

    # branch weights zero-embedded into the 5x5 tap space (concat == row order)
    w1 = jnp.pad(params["w1"], ((P, P), (P, P), (0, 0), (0, 0)))
    w2 = jnp.pad(params["w2"], ((P - 1, P - 1), (P - 1, P - 1), (0, 0), (0, 0)))
    w_all = jnp.concatenate([w1, w2, params["w3"]], axis=-1)           # (5,5,Cin,3*Cout)
    w_all = jnp.pad(w_all, ((0, 0), (0, 0), (0, cin_p - Cin), (0, 0)))
    wb = w_all.reshape(KMAX * KMAX * cin_p, 3 * Cout).T                # (3*Cout, 25*cin_p)
    bb = jnp.concatenate([params["b1"], params["b2"], params["b3"]],
                         axis=1).reshape(3 * Cout, 1)
    wf = params["wf"].reshape(9 * 3 * Cout, Cout).T                    # (Cout, 27*Cout)
    bf = params["bf"].reshape(Cout, 1)
    gamma = params["gamma"].reshape(Cout, 1)
    beta = params["beta"].reshape(Cout, 1)

    kernel = partial(_fused_kernel, cin_p=cin_p, cout=Cout, lp=LP, wp=Wp,
                     m=M, pad_f=PAD_F, inv_count=1.0 / (N * H * W))
    yflat = pl.pallas_call(
        kernel,
        out_shape=jax.ShapeDtypeStruct((Cout, LP), jnp.float32),
        in_specs=[pl.BlockSpec(memory_space=pltpu.MemorySpace.VMEM)] * 8,
        out_specs=pl.BlockSpec(memory_space=pltpu.MemorySpace.VMEM),
        scratch_shapes=[
            pltpu.VMEM((KMAX * KMAX * cin_p, LP), jnp.float32),        # branch patches
            pltpu.VMEM((3 * Cout, LP + 2 * PAD_F), jnp.float32),       # extended xc
            pltpu.VMEM((9 * 3 * Cout, LP), jnp.float32),               # Conv_f patches
        ],
    )(x_ext, mask, wb, bb, wf, bf, gamma, beta)

    # drop the padded frame: (Cout, LP) -> (N, H, W, Cout)
    y = yflat[:, :Lraw].reshape(Cout, N, Hp, Wp)[:, :, P:P + H, P:P + W]
    return jnp.transpose(y, (1, 2, 3, 0))


# ----------------------------------------------------------------------------
# Deterministic init (mimics nn.Conv2d / nn.BatchNorm2d defaults) + JAX reference
# ----------------------------------------------------------------------------
def init_params(key, in_ch, out_ch, kernel_sizes=(1, 3, 5)):
    params = {}
    for name, K in zip(("1", "2", "3"), kernel_sizes):
        key, kw, kb = jax.random.split(key, 3)
        bound = 1.0 / math.sqrt(in_ch * K * K)
        params["w" + name] = jax.random.uniform(
            kw, (K, K, in_ch, out_ch), jnp.float32, -bound, bound)
        params["b" + name] = jax.random.uniform(
            kb, (1, out_ch), jnp.float32, -bound, bound)
    key, kw, kb = jax.random.split(key, 3)
    bound = 1.0 / math.sqrt(3 * out_ch * 3 * 3)
    params["wf"] = jax.random.uniform(
        kw, (3, 3, 3 * out_ch, out_ch), jnp.float32, -bound, bound)
    params["bf"] = jax.random.uniform(kb, (1, out_ch), jnp.float32, -bound, bound)
    params["gamma"] = jnp.ones((out_ch,), jnp.float32)
    params["beta"] = jnp.zeros((out_ch,), jnp.float32)
    return params


def ref_forward(x, params):
    def conv(v, w, b):
        y = jax.lax.conv_general_dilated(
            v, w, (1, 1), "SAME", dimension_numbers=("NHWC", "HWIO", "NHWC"))
        return y + b.reshape(1, 1, 1, -1)

    prelu = lambda v: jnp.where(v > 0, v, ALPHA * v)
    x1 = prelu(conv(x, params["w1"], params["b1"]))
    x2 = prelu(conv(x, params["w2"], params["b2"]))
    x3 = prelu(conv(x, params["w3"], params["b3"]))
    xc = jnp.concatenate([x1, x2, x3], axis=-1)
    xf = conv(xc, params["wf"], params["bf"])
    mean = xf.mean(axis=(0, 1, 2), keepdims=True)
    var = ((xf - mean) ** 2).mean(axis=(0, 1, 2), keepdims=True)
    y = (xf - mean) / jnp.sqrt(var + EPS) * params["gamma"] + params["beta"]
    return prelu(y)


if __name__ == "__main__":
    key = jax.random.PRNGKey(0)
    kx, kp = jax.random.split(key)

    N, C_IN, H, W, C_OUT = 2, 4, 16, 16, 8
    x_nchw = jax.random.normal(kx, (N, C_IN, H, W), jnp.float32)   # torch-style NCHW input
    params = init_params(kp, C_IN, C_OUT)

    x_nhwc = jnp.transpose(x_nchw, (0, 2, 3, 1))                   # NCHW -> NHWC
    out_nhwc = conv_transition_forward(x_nhwc, params)
    out_nhwc = jax.block_until_ready(out_nhwc)

    ref = ref_forward(x_nhwc, params)
    assert out_nhwc.shape == (N, H, W, C_OUT)
    assert jnp.allclose(out_nhwc, ref, atol=1e-4, rtol=1e-4), "mismatch vs JAX reference"

    out_nchw = jnp.transpose(out_nhwc, (0, 3, 1, 2))               # back to torch NCHW
    assert out_nchw.shape == (N, C_OUT, H, W)
    print("KERNEL_OK")
</pallas_src>

<mosaic_0001>
module attributes {stable_mosaic.version = 11 : i64} {
  func.func @_fused_kernel(%arg0: memref<8x980xf32, #tpu.memory_space<vmem>>, %arg1: memref<1x896xf32, #tpu.memory_space<vmem>>, %arg2: memref<24x200xf32, #tpu.memory_space<vmem>>, %arg3: memref<24x1xf32, #tpu.memory_space<vmem>>, %arg4: memref<8x216xf32, #tpu.memory_space<vmem>>, %arg5: memref<8x1xf32, #tpu.memory_space<vmem>>, %arg6: memref<8x1xf32, #tpu.memory_space<vmem>>, %arg7: memref<8x1xf32, #tpu.memory_space<vmem>>, %arg8: memref<8x896xf32, #tpu.memory_space<vmem>>, %arg9: memref<200x896xf32, #tpu.memory_space<vmem>>, %arg10: memref<24x1152xf32, #tpu.memory_space<vmem>>, %arg11: memref<216x896xf32, #tpu.memory_space<vmem>>) attributes {dimension_semantics = [], scalar_prefetch = 0 : i64, scratch_operands = 3 : i64, tpu.core_type = #tpu.core_type<tc>} {
    %c0 = arith.constant 0 : index
    %c0_0 = arith.constant 0 : index
    %0 = vector.load %arg1[%c0, %c0_0] : memref<1x896xf32, #tpu.memory_space<vmem>>, vector<1x896xf32>
    %c0_1 = arith.constant 0 : index
    %c0_2 = arith.constant 0 : index
    %1 = vector.load %arg0[%c0_1, %c0_2] : memref<8x980xf32, #tpu.memory_space<vmem>>, vector<8x896xf32>
    %c0_3 = arith.constant 0 : index
    %c0_4 = arith.constant 0 : index
    %2 = vector.load %arg9[%c0_3, %c0_4] : memref<200x896xf32, #tpu.memory_space<vmem>>, vector<8x896xf32>
    tpu.vector_store %arg9[%c0_3, %c0_4], %1 {strides = array<i32>} : memref<200x896xf32, #tpu.memory_space<vmem>>, vector<8x896xf32>,
    %c0_5 = arith.constant 0 : index
    %c1 = arith.constant 1 : index
    %3 = vector.load %arg0[%c0_5, %c1] : memref<8x980xf32, #tpu.memory_space<vmem>>, vector<8x896xf32>
    %c8 = arith.constant 8 : index
    %c0_6 = arith.constant 0 : index
    %4 = vector.load %arg9[%c8, %c0_6] : memref<200x896xf32, #tpu.memory_space<vmem>>, vector<8x896xf32>
    tpu.vector_store %arg9[%c8, %c0_6], %3 {strides = array<i32>} : memref<200x896xf32, #tpu.memory_space<vmem>>, vector<8x896xf32>,
    %c0_7 = arith.constant 0 : index
    %c2 = arith.constant 2 : index
    %5 = vector.load %arg0[%c0_7, %c2] : memref<8x980xf32, #tpu.memory_space<vmem>>, vector<8x896xf32>
    %c16 = arith.constant 16 : index
    %c0_8 = arith.constant 0 : index
    %6 = vector.load %arg9[%c16, %c0_8] : memref<200x896xf32, #tpu.memory_space<vmem>>, vector<8x896xf32>
    tpu.vector_store %arg9[%c16, %c0_8], %5 {strides = array<i32>} : memref<200x896xf32, #tpu.memory_space<vmem>>, vector<8x896xf32>,
    %c0_9 = arith.constant 0 : index
    %c3 = arith.constant 3 : index
    %7 = vector.load %arg0[%c0_9, %c3] : memref<8x980xf32, #tpu.memory_space<vmem>>, vector<8x896xf32>
    %c24 = arith.constant 24 : index
    %c0_10 = arith.constant 0 : index
    %8 = vector.load %arg9[%c24, %c0_10] : memref<200x896xf32, #tpu.memory_space<vmem>>, vector<8x896xf32>
    tpu.vector_store %arg9[%c24, %c0_10], %7 {strides = array<i32>} : memref<200x896xf32, #tpu.memory_space<vmem>>, vector<8x896xf32>,
    %c0_11 = arith.constant 0 : index
    %c4 = arith.constant 4 : index
    %9 = vector.load %arg0[%c0_11, %c4] : memref<8x980xf32, #tpu.memory_space<vmem>>, vector<8x896xf32>
    %c32 = arith.constant 32 : index
    %c0_12 = arith.constant 0 : index
    %10 = vector.load %arg9[%c32, %c0_12] : memref<200x896xf32, #tpu.memory_space<vmem>>, vector<8x896xf32>
    tpu.vector_store %arg9[%c32, %c0_12], %9 {strides = array<i32>} : memref<200x896xf32, #tpu.memory_space<vmem>>, vector<8x896xf32>,
    %c0_13 = arith.constant 0 : index
    %c20 = arith.constant 20 : index
    %11 = vector.load %arg0[%c0_13, %c20] : memref<8x980xf32, #tpu.memory_space<vmem>>, vector<8x896xf32>
    %c40 = arith.constant 40 : index
    %c0_14 = arith.constant 0 : index
    %12 = vector.load %arg9[%c40, %c0_14] : memref<200x896xf32, #tpu.memory_space<vmem>>, vector<8x896xf32>
    tpu.vector_store %arg9[%c40, %c0_14], %11 {strides = array<i32>} : memref<200x896xf32, #tpu.memory_space<vmem>>, vector<8x896xf32>,
    %c0_15 = arith.constant 0 : index
    %c21 = arith.constant 21 : index
    %13 = vector.load %arg0[%c0_15, %c21] : memref<8x980xf32, #tpu.memory_space<vmem>>, vector<8x896xf32>
    %c48 = arith.constant 48 : index
    %c0_16 = arith.constant 0 : index
    %14 = vector.load %arg9[%c48, %c0_16] : memref<200x896xf32, #tpu.memory_space<vmem>>, vector<8x896xf32>
    tpu.vector_store %arg9[%c48, %c0_16], %13 {strides = array<i32>} : memref<200x896xf32, #tpu.memory_space<vmem>>, vector<8x896xf32>,
    %c0_17 = arith.constant 0 : index
    %c22 = arith.constant 22 : index
    %15 = vector.load %arg0[%c0_17, %c22] : memref<8x980xf32, #tpu.memory_space<vmem>>, vector<8x896xf32>
    %c56 = arith.constant 56 : index
    %c0_18 = arith.constant 0 : index
    %16 = vector.load %arg9[%c56, %c0_18] : memref<200x896xf32, #tpu.memory_space<vmem>>, vector<8x896xf32>
    tpu.vector_store %arg9[%c56, %c0_18], %15 {strides = array<i32>} : memref<200x896xf32, #tpu.memory_space<vmem>>, vector<8x896xf32>,
    %c0_19 = arith.constant 0 : index
    %c23 = arith.constant 23 : index
    %17 = vector.load %arg0[%c0_19, %c23] : memref<8x980xf32, #tpu.memory_space<vmem>>, vector<8x896xf32>
    %c64 = arith.constant 64 : index
    %c0_20 = arith.constant 0 : index
    %18 = vector.load %arg9[%c64, %c0_20] : memref<200x896xf32, #tpu.memory_space<vmem>>, vector<8x896xf32>
    tpu.vector_store %arg9[%c64, %c0_20], %17 {strides = array<i32>} : memref<200x896xf32, #tpu.memory_space<vmem>>, vector<8x896xf32>,
    %c0_21 = arith.constant 0 : index
    %c24_22 = arith.constant 24 : index
    %19 = vector.load %arg0[%c0_21, %c24_22] : memref<8x980xf32, #tpu.memory_space<vmem>>, vector<8x896xf32>
    %c72 = arith.constant 72 : index
    %c0_23 = arith.constant 0 : index
    %20 = vector.load %arg9[%c72, %c0_23] : memref<200x896xf32, #tpu.memory_space<vmem>>, vector<8x896xf32>
    tpu.vector_store %arg9[%c72, %c0_23], %19 {strides = array<i32>} : memref<200x896xf32, #tpu.memory_space<vmem>>, vector<8x896xf32>,
    %c0_24 = arith.constant 0 : index
    %c40_25 = arith.constant 40 : index
    %21 = vector.load %arg0[%c0_24, %c40_25] : memref<8x980xf32, #tpu.memory_space<vmem>>, vector<8x896xf32>
    %c80 = arith.constant 80 : index
    %c0_26 = arith.constant 0 : index
    %22 = vector.load %arg9[%c80, %c0_26] : memref<200x896xf32, #tpu.memory_space<vmem>>, vector<8x896xf32>
    tpu.vector_store %arg9[%c80, %c0_26], %21 {strides = array<i32>} : memref<200x896xf32, #tpu.memory_space<vmem>>, vector<8x896xf32>,
    %c0_27 = arith.constant 0 : index
    %c41 = arith.constant 41 : index
    %23 = vector.load %arg0[%c0_27, %c41] : memref<8x980xf32, #tpu.memory_space<vmem>>, vector<8x896xf32>
    %c88 = arith.constant 88 : index
    %c0_28 = arith.constant 0 : index
    %24 = vector.load %arg9[%c88, %c0_28] : memref<200x896xf32, #tpu.memory_space<vmem>>, vector<8x896xf32>
    tpu.vector_store %arg9[%c88, %c0_28], %23 {strides = array<i32>} : memref<200x896xf32, #tpu.memory_space<vmem>>, vector<8x896xf32>,
    %c0_29 = arith.constant 0 : index
    %c42 = arith.constant 42 : index
    %25 = vector.load %arg0[%c0_29, %c42] : memref<8x980xf32, #tpu.memory_space<vmem>>, vector<8x896xf32>
    %c96 = arith.constant 96 : index
    %c0_30 = arith.constant 0 : index
    %26 = vector.load %arg9[%c96, %c0_30] : memref<200x896xf32, #tpu.memory_space<vmem>>, vector<8x896xf32>
    tpu.vector_store %arg9[%c96, %c0_30], %25 {strides = array<i32>} : memref<200x896xf32, #tpu.memory_space<vmem>>, vector<8x896xf32>,
    %c0_31 = arith.constant 0 : index
    %c43 = arith.constant 43 : index
    %27 = vector.load %arg0[%c0_31, %c43] : memref<8x980xf32, #tpu.memory_space<vmem>>, vector<8x896xf32>
    %c104 = arith.constant 104 : index
    %c0_32 = arith.constant 0 : index
    %28 = vector.load %arg9[%c104, %c0_32] : memref<200x896xf32, #tpu.memory_space<vmem>>, vector<8x896xf32>
    tpu.vector_store %arg9[%c104, %c0_32], %27 {strides = array<i32>} : memref<200x896xf32, #tpu.memory_space<vmem>>, vector<8x896xf32>,
    %c0_33 = arith.constant 0 : index
    %c44 = arith.constant 44 : index
    %29 = vector.load %arg0[%c0_33, %c44] : memref<8x980xf32, #tpu.memory_space<vmem>>, vector<8x896xf32>
    %c112 = arith.constant 112 : index
    %c0_34 = arith.constant 0 : index
    %30 = vector.load %arg9[%c112, %c0_34] : memref<200x896xf32, #tpu.memory_space<vmem>>, vector<8x896xf32>
    tpu.vector_store %arg9[%c112, %c0_34], %29 {strides = array<i32>} : memref<200x896xf32, #tpu.memory_space<vmem>>, vector<8x896xf32>,
    %c0_35 = arith.constant 0 : index
    %c60 = arith.constant 60 : index
    %31 = vector.load %arg0[%c0_35, %c60] : memref<8x980xf32, #tpu.memory_space<vmem>>, vector<8x896xf32>
    %c120 = arith.constant 120 : index
    %c0_36 = arith.constant 0 : index
    %32 = vector.load %arg9[%c120, %c0_36] : memref<200x896xf32, #tpu.memory_space<vmem>>, vector<8x896xf32>
    tpu.vector_store %arg9[%c120, %c0_36], %31 {strides = array<i32>} : memref<200x896xf32, #tpu.memory_space<vmem>>, vector<8x896xf32>,
    %c0_37 = arith.constant 0 : index
    %c61 = arith.constant 61 : index
    %33 = vector.load %arg0[%c0_37, %c61] : memref<8x980xf32, #tpu.memory_space<vmem>>, vector<8x896xf32>
    %c128 = arith.constant 128 : index
    %c0_38 = arith.constant 0 : index
    %34 = vector.load %arg9[%c128, %c0_38] : memref<200x896xf32, #tpu.memory_space<vmem>>, vector<8x896xf32>
    tpu.vector_store %arg9[%c128, %c0_38], %33 {strides = array<i32>} : memref<200x896xf32, #tpu.memory_space<vmem>>, vector<8x896xf32>,
    %c0_39 = arith.constant 0 : index
    %c62 = arith.constant 62 : index
    %35 = vector.load %arg0[%c0_39, %c62] : memref<8x980xf32, #tpu.memory_space<vmem>>, vector<8x896xf32>
    %c136 = arith.constant 136 : index
    %c0_40 = arith.constant 0 : index
    %36 = vector.load %arg9[%c136, %c0_40] : memref<200x896xf32, #tpu.memory_space<vmem>>, vector<8x896xf32>
    tpu.vector_store %arg9[%c136, %c0_40], %35 {strides = array<i32>} : memref<200x896xf32, #tpu.memory_space<vmem>>, vector<8x896xf32>,
    %c0_41 = arith.constant 0 : index
    %c63 = arith.constant 63 : index
    %37 = vector.load %arg0[%c0_41, %c63] : memref<8x980xf32, #tpu.memory_space<vmem>>, vector<8x896xf32>
    %c144 = arith.constant 144 : index
    %c0_42 = arith.constant 0 : index
    %38 = vector.load %arg9[%c144, %c0_42] : memref<200x896xf32, #tpu.memory_space<vmem>>, vector<8x896xf32>
    tpu.vector_store %arg9[%c144, %c0_42], %37 {strides = array<i32>} : memref<200x896xf32, #tpu.memory_space<vmem>>, vector<8x896xf32>,
    %c0_43 = arith.constant 0 : index
    %c64_44 = arith.constant 64 : index
    %39 = vector.load %arg0[%c0_43, %c64_44] : memref<8x980xf32, #tpu.memory_space<vmem>>, vector<8x896xf32>
    %c152 = arith.constant 152 : index
    %c0_45 = arith.constant 0 : index
    %40 = vector.load %arg9[%c152, %c0_45] : memref<200x896xf32, #tpu.memory_space<vmem>>, vector<8x896xf32>
    tpu.vector_store %arg9[%c152, %c0_45], %39 {strides = array<i32>} : memref<200x896xf32, #tpu.memory_space<vmem>>, vector<8x896xf32>,
    %c0_46 = arith.constant 0 : index
    %c80_47 = arith.constant 80 : index
    %41 = vector.load %arg0[%c0_46, %c80_47] : memref<8x980xf32, #tpu.memory_space<vmem>>, vector<8x896xf32>
    %c160 = arith.constant 160 : index
    %c0_48 = arith.constant 0 : index
    %42 = vector.load %arg9[%c160, %c0_48] : memref<200x896xf32, #tpu.memory_space<vmem>>, vector<8x896xf32>
    tpu.vector_store %arg9[%c160, %c0_48], %41 {strides = array<i32>} : memref<200x896xf32, #tpu.memory_space<vmem>>, vector<8x896xf32>,
    %c0_49 = arith.constant 0 : index
    %c81 = arith.constant 81 : index
    %43 = vector.load %arg0[%c0_49, %c81] : memref<8x980xf32, #tpu.memory_space<vmem>>, vector<8x896xf32>
    %c168 = arith.constant 168 : index
    %c0_50 = arith.constant 0 : index
    %44 = vector.load %arg9[%c168, %c0_50] : memref<200x896xf32, #tpu.memory_space<vmem>>, vector<8x896xf32>
    tpu.vector_store %arg9[%c168, %c0_50], %43 {strides = array<i32>} : memref<200x896xf32, #tpu.memory_space<vmem>>, vector<8x896xf32>,
    %c0_51 = arith.constant 0 : index
    %c82 = arith.constant 82 : index
    %45 = vector.load %arg0[%c0_51, %c82] : memref<8x980xf32, #tpu.memory_space<vmem>>, vector<8x896xf32>
    %c176 = arith.constant 176 : index
    %c0_52 = arith.constant 0 : index
    %46 = vector.load %arg9[%c176, %c0_52] : memref<200x896xf32, #tpu.memory_space<vmem>>, vector<8x896xf32>
    tpu.vector_store %arg9[%c176, %c0_52], %45 {strides = array<i32>} : memref<200x896xf32, #tpu.memory_space<vmem>>, vector<8x896xf32>,
    %c0_53 = arith.constant 0 : index
    %c83 = arith.constant 83 : index
    %47 = vector.load %arg0[%c0_53, %c83] : memref<8x980xf32, #tpu.memory_space<vmem>>, vector<8x896xf32>
    %c184 = arith.constant 184 : index
    %c0_54 = arith.constant 0 : index
    %48 = vector.load %arg9[%c184, %c0_54] : memref<200x896xf32, #tpu.memory_space<vmem>>, vector<8x896xf32>
    tpu.vector_store %arg9[%c184, %c0_54], %47 {strides = array<i32>} : memref<200x896xf32, #tpu.memory_space<vmem>>, vector<8x896xf32>,
    %c0_55 = arith.constant 0 : index
    %c84 = arith.constant 84 : index
    %49 = vector.load %arg0[%c0_55, %c84] : memref<8x980xf32, #tpu.memory_space<vmem>>, vector<8x896xf32>
    %c192 = arith.constant 192 : index
    %c0_56 = arith.constant 0 : index
    %50 = vector.load %arg9[%c192, %c0_56] : memref<200x896xf32, #tpu.memory_space<vmem>>, vector<8x896xf32>
    tpu.vector_store %arg9[%c192, %c0_56], %49 {strides = array<i32>} : memref<200x896xf32, #tpu.memory_space<vmem>>, vector<8x896xf32>,
    %c0_57 = arith.constant 0 : index
    %c0_58 = arith.constant 0 : index
    %51 = vector.load %arg2[%c0_57, %c0_58] : memref<24x200xf32, #tpu.memory_space<vmem>>, vector<24x200xf32>
    %c0_59 = arith.constant 0 : index
    %c0_60 = arith.constant 0 : index
    %52 = vector.load %arg9[%c0_59, %c0_60] : memref<200x896xf32, #tpu.memory_space<vmem>>, vector<200x896xf32>
    %cst = arith.constant dense<0.000000e+00> : vector<24x896xf32>
    %53 = tpu.matmul %51, %52, %cst {dimension_numbers = #tpu.dot_dimension_numbers<[1], [0], [0], [1], [0, 0, 1, 1], [], []>} : vector<24x200xf32>, vector<200x896xf32>, vector<24x896xf32> -> vector<24x896xf32>
    %c0_61 = arith.constant 0 : index
    %c0_62 = arith.constant 0 : index
    %54 = vector.load %arg3[%c0_61, %c0_62] : memref<24x1xf32, #tpu.memory_space<vmem>>, vector<24x1xf32>
    %55 = vector.broadcast %54 : vector<24x1xf32> to vector<24x896xf32>
    %56 = arith.addf %53, %55 : vector<24x896xf32>
    %cst_63 = arith.constant 0.000000e+00 : f32
    %57 = vector.broadcast %cst_63 : f32 to vector<24x896xf32>
    %58 = arith.cmpf ogt, %56, %57 : vector<24x896xf32>
    %cst_64 = arith.constant 2.500000e-01 : f32
    %59 = vector.broadcast %cst_64 : f32 to vector<24x896xf32>
    %60 = arith.mulf %59, %56 : vector<24x896xf32>
    %61 = arith.select %58, %56, %60 : vector<24x896xi1>, vector<24x896xf32>
    %62 = vector.broadcast %0 : vector<1x896xf32> to vector<24x896xf32>
    %63 = arith.mulf %61, %62 : vector<24x896xf32>
    %cst_65 = arith.constant 0.000000e+00 : f32
    %64 = vector.broadcast %cst_65 : f32 to vector<24x1152xf32>
    %c0_66 = arith.constant 0 : index
    %c0_67 = arith.constant 0 : index
    %65 = vector.load %arg10[%c0_66, %c0_67] : memref<24x1152xf32, #tpu.memory_space<vmem>>, vector<24x1152xf32>
    tpu.vector_store %arg10[%c0_66, %c0_67], %64 {strides = array<i32>} : memref<24x1152xf32, #tpu.memory_space<vmem>>, vector<24x1152xf32>,
    %c0_68 = arith.constant 0 : index
    %c128_69 = arith.constant 128 : index
    %66 = vector.load %arg10[%c0_68, %c128_69] : memref<24x1152xf32, #tpu.memory_space<vmem>>, vector<24x896xf32>
    tpu.vector_store %arg10[%c0_68, %c128_69], %63 {strides = array<i32>} : memref<24x1152xf32, #tpu.memory_space<vmem>>, vector<24x896xf32>,
    %c0_70 = arith.constant 0 : index
    %c107 = arith.constant 107 : index
    %67 = vector.load %arg10[%c0_70, %c107] : memref<24x1152xf32, #tpu.memory_space<vmem>>, vector<24x896xf32>
    %c0_71 = arith.constant 0 : index
    %c0_72 = arith.constant 0 : index
    %68 = vector.load %arg11[%c0_71, %c0_72] : memref<216x896xf32, #tpu.memory_space<vmem>>, vector<24x896xf32>
    tpu.vector_store %arg11[%c0_71, %c0_72], %67 {strides = array<i32>} : memref<216x896xf32, #tpu.memory_space<vmem>>, vector<24x896xf32>,
    %c0_73 = arith.constant 0 : index
    %c108 = arith.constant 108 : index
    %69 = vector.load %arg10[%c0_73, %c108] : memref<24x1152xf32, #tpu.memory_space<vmem>>, vector<24x896xf32>
    %c24_74 = arith.constant 24 : index
    %c0_75 = arith.constant 0 : index
    %70 = vector.load %arg11[%c24_74, %c0_75] : memref<216x896xf32, #tpu.memory_space<vmem>>, vector<24x896xf32>
    tpu.vector_store %arg11[%c24_74, %c0_75], %69 {strides = array<i32>} : memref<216x896xf32, #tpu.memory_space<vmem>>, vector<24x896xf32>,
    %c0_76 = arith.constant 0 : index
    %c109 = arith.constant 109 : index
    %71 = vector.load %arg10[%c0_76, %c109] : memref<24x1152xf32, #tpu.memory_space<vmem>>, vector<24x896xf32>
    %c48_77 = arith.constant 48 : index
    %c0_78 = arith.constant 0 : index
    %72 = vector.load %arg11[%c48_77, %c0_78] : memref<216x896xf32, #tpu.memory_space<vmem>>, vector<24x896xf32>
    tpu.vector_store %arg11[%c48_77, %c0_78], %71 {strides = array<i32>} : memref<216x896xf32, #tpu.memory_space<vmem>>, vector<24x896xf32>,
    %c0_79 = arith.constant 0 : index
    %c127 = arith.constant 127 : index
    %73 = vector.load %arg10[%c0_79, %c127] : memref<24x1152xf32, #tpu.memory_space<vmem>>, vector<24x896xf32>
    %c72_80 = arith.constant 72 : index
    %c0_81 = arith.constant 0 : index
    %74 = vector.load %arg11[%c72_80, %c0_81] : memref<216x896xf32, #tpu.memory_space<vmem>>, vector<24x896xf32>
    tpu.vector_store %arg11[%c72_80, %c0_81], %73 {strides = array<i32>} : memref<216x896xf32, #tpu.memory_space<vmem>>, vector<24x896xf32>,
    %c0_82 = arith.constant 0 : index
    %c128_83 = arith.constant 128 : index
    %75 = vector.load %arg10[%c0_82, %c128_83] : memref<24x1152xf32, #tpu.memory_space<vmem>>, vector<24x896xf32>
    %c96_84 = arith.constant 96 : index
    %c0_85 = arith.constant 0 : index
    %76 = vector.load %arg11[%c96_84, %c0_85] : memref<216x896xf32, #tpu.memory_space<vmem>>, vector<24x896xf32>
    tpu.vector_store %arg11[%c96_84, %c0_85], %75 {strides = array<i32>} : memref<216x896xf32, #tpu.memory_space<vmem>>, vector<24x896xf32>,
    %c0_86 = arith.constant 0 : index
    %c129 = arith.constant 129 : index
    %77 = vector.load %arg10[%c0_86, %c129] : memref<24x1152xf32, #tpu.memory_space<vmem>>, vector<24x896xf32>
    %c120_87 = arith.constant 120 : index
    %c0_88 = arith.constant 0 : index
    %78 = vector.load %arg11[%c120_87, %c0_88] : memref<216x896xf32, #tpu.memory_space<vmem>>, vector<24x896xf32>
    tpu.vector_store %arg11[%c120_87, %c0_88], %77 {strides = array<i32>} : memref<216x896xf32, #tpu.memory_space<vmem>>, vector<24x896xf32>,
    %c0_89 = arith.constant 0 : index
    %c147 = arith.constant 147 : index
    %79 = vector.load %arg10[%c0_89, %c147] : memref<24x1152xf32, #tpu.memory_space<vmem>>, vector<24x896xf32>
    %c144_90 = arith.constant 144 : index
    %c0_91 = arith.constant 0 : index
    %80 = vector.load %arg11[%c144_90, %c0_91] : memref<216x896xf32, #tpu.memory_space<vmem>>, vector<24x896xf32>
    tpu.vector_store %arg11[%c144_90, %c0_91], %79 {strides = array<i32>} : memref<216x896xf32, #tpu.memory_space<vmem>>, vector<24x896xf32>,
    %c0_92 = arith.constant 0 : index
    %c148 = arith.constant 148 : index
    %81 = vector.load %arg10[%c0_92, %c148] : memref<24x1152xf32, #tpu.memory_space<vmem>>, vector<24x896xf32>
    %c168_93 = arith.constant 168 : index
    %c0_94 = arith.constant 0 : index
    %82 = vector.load %arg11[%c168_93, %c0_94] : memref<216x896xf32, #tpu.memory_space<vmem>>, vector<24x896xf32>
    tpu.vector_store %arg11[%c168_93, %c0_94], %81 {strides = array<i32>} : memref<216x896xf32, #tpu.memory_space<vmem>>, vector<24x896xf32>,
    %c0_95 = arith.constant 0 : index
    %c149 = arith.constant 149 : index
    %83 = vector.load %arg10[%c0_95, %c149] : memref<24x1152xf32, #tpu.memory_space<vmem>>, vector<24x896xf32>
    %c192_96 = arith.constant 192 : index
    %c0_97 = arith.constant 0 : index
    %84 = vector.load %arg11[%c192_96, %c0_97] : memref<216x896xf32, #tpu.memory_space<vmem>>, vector<24x896xf32>
    tpu.vector_store %arg11[%c192_96, %c0_97], %83 {strides = array<i32>} : memref<216x896xf32, #tpu.memory_space<vmem>>, vector<24x896xf32>,
    %c0_98 = arith.constant 0 : index
    %c0_99 = arith.constant 0 : index
    %85 = vector.load %arg4[%c0_98, %c0_99] : memref<8x216xf32, #tpu.memory_space<vmem>>, vector<8x216xf32>
    %c0_100 = arith.constant 0 : index
    %c0_101 = arith.constant 0 : index
    %86 = vector.load %arg11[%c0_100, %c0_101] : memref<216x896xf32, #tpu.memory_space<vmem>>, vector<216x896xf32>
    %cst_102 = arith.constant dense<0.000000e+00> : vector<8x896xf32>
    %87 = tpu.matmul %85, %86, %cst_102 {dimension_numbers = #tpu.dot_dimension_numbers<[1], [0], [0], [1], [0, 0, 1, 1], [], []>} : vector<8x216xf32>, vector<216x896xf32>, vector<8x896xf32> -> vector<8x896xf32>
    %c0_103 = arith.constant 0 : index
    %c0_104 = arith.constant 0 : index
    %88 = vector.load %arg5[%c0_103, %c0_104] : memref<8x1xf32, #tpu.memory_space<vmem>>, vector<8x1xf32>
    %89 = vector.broadcast %88 : vector<8x1xf32> to vector<8x896xf32>
    %90 = arith.addf %87, %89 : vector<8x896xf32>
    %91 = vector.broadcast %0 : vector<1x896xf32> to vector<8x896xf32>
    %92 = arith.mulf %90, %91 : vector<8x896xf32>
    %cst_105 = arith.constant dense<0.000000e+00> : vector<8xf32>
    %93 = vector.multi_reduction <add>, %92, %cst_105 [1] : vector<8x896xf32> to vector<8xf32>
    %94 = vector.shape_cast %93 : vector<8xf32> to vector<8x1xf32>
    %cst_106 = arith.constant 0.001953125 : f32
    %95 = vector.broadcast %cst_106 : f32 to vector<8x1xf32>
    %96 = arith.mulf %94, %95 : vector<8x1xf32>
    %97 = vector.broadcast %96 : vector<8x1xf32> to vector<8x896xf32>
    %98 = arith.subf %90, %97 : vector<8x896xf32>
    %99 = vector.broadcast %0 : vector<1x896xf32> to vector<8x896xf32>
    %100 = arith.mulf %98, %99 : vector<8x896xf32>
    %101 = arith.mulf %100, %100 : vector<8x896xf32>
    %cst_107 = arith.constant dense<0.000000e+00> : vector<8xf32>
    %102 = vector.multi_reduction <add>, %101, %cst_107 [1] : vector<8x896xf32> to vector<8xf32>
    %103 = vector.shape_cast %102 : vector<8xf32> to vector<8x1xf32>
    %cst_108 = arith.constant 0.001953125 : f32
    %104 = vector.broadcast %cst_108 : f32 to vector<8x1xf32>
    %105 = arith.mulf %103, %104 : vector<8x1xf32>
    %106 = vector.broadcast %96 : vector<8x1xf32> to vector<8x896xf32>
    %107 = arith.subf %90, %106 : vector<8x896xf32>
    %cst_109 = arith.constant 9.99999974E-6 : f32
    %108 = vector.broadcast %cst_109 : f32 to vector<8x1xf32>
    %109 = arith.addf %105, %108 : vector<8x1xf32>
    %110 = math.rsqrt %109 : vector<8x1xf32>
    %111 = vector.broadcast %110 : vector<8x1xf32> to vector<8x896xf32>
    %112 = arith.mulf %107, %111 : vector<8x896xf32>
    %c0_110 = arith.constant 0 : index
    %c0_111 = arith.constant 0 : index
    %113 = vector.load %arg6[%c0_110, %c0_111] : memref<8x1xf32, #tpu.memory_space<vmem>>, vector<8x1xf32>
    %114 = vector.broadcast %113 : vector<8x1xf32> to vector<8x896xf32>
    %115 = arith.mulf %112, %114 : vector<8x896xf32>
    %c0_112 = arith.constant 0 : index
    %c0_113 = arith.constant 0 : index
    %116 = vector.load %arg7[%c0_112, %c0_113] : memref<8x1xf32, #tpu.memory_space<vmem>>, vector<8x1xf32>
    %117 = vector.broadcast %116 : vector<8x1xf32> to vector<8x896xf32>
    %118 = arith.addf %115, %117 : vector<8x896xf32>
    %cst_114 = arith.constant 0.000000e+00 : f32
    %119 = vector.broadcast %cst_114 : f32 to vector<8x896xf32>
    %120 = arith.cmpf ogt, %118, %119 : vector<8x896xf32>
    %cst_115 = arith.constant 2.500000e-01 : f32
    %121 = vector.broadcast %cst_115 : f32 to vector<8x896xf32>
    %122 = arith.mulf %121, %118 : vector<8x896xf32>
    %123 = arith.select %120, %118, %122 : vector<8x896xi1>, vector<8x896xf32>
    %c0_116 = arith.constant 0 : index
    %c0_117 = arith.constant 0 : index
    %124 = vector.load %arg8[%c0_116, %c0_117] : memref<8x896xf32, #tpu.memory_space<vmem>>, vector<8x896xf32>
    tpu.vector_store %arg8[%c0_116, %c0_117], %123 {strides = array<i32>} : memref<8x896xf32, #tpu.memory_space<vmem>>, vector<8x896xf32>,
    return
  }
}

</mosaic_0001>

<llo_original>
// kernel: tpu_custom_call.1
$region0: #{tpu_custom_call.1}
  #allocation0 [shape = 'u32[]', space=smem, size = 0x4, offset = 0x4, fixed_abs, tag = 'smem constant byte address 0x4 - core index']
  #allocation1 [shape = 'u32[144,128]{1,0:T(1,128)}', space=vmem, size = 0x12000, scoped, tag = 'internal scratch']
  #allocation2 [shape = 'f32[200,896]{1,0:T(8,128)}', space=vmem, size = 0xaf000, scoped, tag = 'scratch operand']
  #allocation3 [shape = 'f32[24,1152]{1,0:T(8,128)}', space=vmem, size = 0x1b000, scoped, tag = 'scratch operand']
  #allocation4 [shape = 'f32[216,896]{1,0:T(8,128)}', space=vmem, size = 0xbd000, scoped, tag = 'scratch operand']
  %s0 = inlined_call_operand.hbm [shape: f32[8,980], index: 0, kind: input, shape index: {}]
  %s1 = inlined_call_operand.vmem [shape: f32[1,896], index: 1, kind: input, shape index: {}]
  %s2 = inlined_call_operand.vmem [shape: f32[24,200], index: 2, kind: input, shape index: {}]
  %s3 = inlined_call_operand.vmem [shape: f32[24,1], index: 3, kind: input, shape index: {}]
  %s4 = inlined_call_operand.hbm [shape: f32[8,216], index: 4, kind: input, shape index: {}]
  %s5 = inlined_call_operand.vmem [shape: f32[8,1], index: 5, kind: input, shape index: {}]
  %s6 = inlined_call_operand.vmem [shape: f32[8,1], index: 6, kind: input, shape index: {}]
  %s7 = inlined_call_operand.vmem [shape: f32[8,1], index: 7, kind: input, shape index: {}]
  %s8 = inlined_call_operand.hbm [shape: f32[8,896], index: 8, kind: output, shape index: {}]
  %s9 = sld [smem:[#allocation0]]
  $region50: #{tpu_custom_call.1} parent=0
    _
  %s11 = ssub.s32 1, %s9
  %s12 = scalar_select 0, %s11, %s9
  $region1: #{tpu_custom_call.1} parent=0
    #allocation5 [shape = 'u8[32768]{0}', space=vmem, size = 0x8000, scoped, tag = 'input window, operand 0, single buffered']
    #allocation6 [shape = 's32[1]{0}', space=sflag, size = 0x4, scoped, tag = 'scoped memory for tpu_custom_call.1']
    #allocation7 [shape = 's32[1]{0}', space=sflag, size = 0x4, scoped, tag = 'scoped memory for tpu_custom_call.1']
    #allocation8 [shape = 'u8[8192]{0}', space=vmem, size = 0x2000, scoped, tag = 'input window, operand 4, single buffered']
    #allocation9 [shape = 's32[1]{0}', space=sflag, size = 0x4, scoped, tag = 'scoped memory for tpu_custom_call.1']
    #allocation10 [shape = 'u8[28672]{0}', space=vmem, size = 0x7000, scoped, tag = 'output window, operand 0, single buffered']
    %13 = vsyncpa [#allocation6], 0
    %14 = vsyncpa [#allocation9], 0
    %15 = vsyncpa [#allocation7], 0
    // Predicated region
    $region2: #{tpu_custom_call.1} parent=1 // pred_check
      _
    $region3: #{tpu_custom_call.1} parent=1 // pred_check_branch
      %17 = sbr.rel (0) target = $region5
    $region4: #{tpu_custom_call.1} parent=1 // pred_region
      %s19 = ssub.s32 1024, 1024
      %20 = vsyncadd [#allocation6], %s19
      %s22 = sshll.u32 [#allocation5], 4
      %s23 = int_to_ptr.vmem [resolvable:$true] %s22
      %25 = dma.hbm_to_vmem [thread:$0]  %s0, 1024, %s23, [#allocation6]
    $region5: #{tpu_custom_call.1} parent=1 // pred_fallthru
      _
    // Predicated region
    $region6: #{tpu_custom_call.1} parent=1 // pred_check
      _
    $region7: #{tpu_custom_call.1} parent=1 // pred_check_branch
      %27 = sbr.rel (0) target = $region9
    $region8: #{tpu_custom_call.1} parent=1 // pred_region
      _
    $region9: #{tpu_custom_call.1} parent=1 // pred_fallthru
      _
    // Predicated region
    $region10: #{tpu_custom_call.1} parent=1 // pred_check
      _
    $region11: #{tpu_custom_call.1} parent=1 // pred_check_branch
      %29 = sbr.rel (0) target = $region13
    $region12: #{tpu_custom_call.1} parent=1 // pred_region
      _
    $region13: #{tpu_custom_call.1} parent=1 // pred_fallthru
      _
    // Predicated region
    $region14: #{tpu_custom_call.1} parent=1 // pred_check
      _
    $region15: #{tpu_custom_call.1} parent=1 // pred_check_branch
      %31 = sbr.rel (0) target = $region17
    $region16: #{tpu_custom_call.1} parent=1 // pred_region
      _
    $region17: #{tpu_custom_call.1} parent=1 // pred_fallthru
      _
    // Predicated region
    $region18: #{tpu_custom_call.1} parent=1 // pred_check
      _
    $region19: #{tpu_custom_call.1} parent=1 // pred_check_branch
      %33 = sbr.rel (0) target = $region21
    $region20: #{tpu_custom_call.1} parent=1 // pred_region
      %s35 = ssub.s32 256, 256
      %36 = vsyncadd [#allocation9], %s35
      %s38 = sshll.u32 [#allocation8], 4
      %s39 = int_to_ptr.vmem [resolvable:$true] %s38
      %41 = dma.hbm_to_vmem [thread:$0]  %s4, 256, %s39, [#allocation9]
    $region21: #{tpu_custom_call.1} parent=1 // pred_fallthru
      _
    // Predicated region
    $region22: #{tpu_custom_call.1} parent=1 // pred_check
      _
    $region23: #{tpu_custom_call.1} parent=1 // pred_check_branch
      %43 = sbr.rel (0) target = $region25
    $region24: #{tpu_custom_call.1} parent=1 // pred_region
      _
    $region25: #{tpu_custom_call.1} parent=1 // pred_fallthru
      _
    // Predicated region
    $region26: #{tpu_custom_call.1} parent=1 // pred_check
      _
    $region27: #{tpu_custom_call.1} parent=1 // pred_check_branch
      %45 = sbr.rel (0) target = $region29
    $region28: #{tpu_custom_call.1} parent=1 // pred_region
      _
    $region29: #{tpu_custom_call.1} parent=1 // pred_fallthru
      _
    // Predicated region
    $region30: #{tpu_custom_call.1} parent=1 // pred_check
      _
    $region31: #{tpu_custom_call.1} parent=1 // pred_check_branch
      %47 = sbr.rel (0) target = $region33
    $region32: #{tpu_custom_call.1} parent=1 // pred_region
      _
    $region33: #{tpu_custom_call.1} parent=1 // pred_fallthru
      _
    // Predicated region
    $region34: #{tpu_custom_call.1} parent=1 // pred_check
      _
    $region35: #{tpu_custom_call.1} parent=1 // pred_check_branch
      %49 = sbr.rel (0) target = $region37
    $region36: #{tpu_custom_call.1} parent=1 // pred_region
      %50 = dma.done [#allocation6], 1024
    $region37: #{tpu_custom_call.1} parent=1 // pred_fallthru
      _
    // Predicated region
    $region38: #{tpu_custom_call.1} parent=1 // pred_check
      _
    $region39: #{tpu_custom_call.1} parent=1 // pred_check_branch
      %52 = sbr.rel (0) target = $region41
    $region40: #{tpu_custom_call.1} parent=1 // pred_region
      %53 = dma.done [#allocation9], 256
    $region41: #{tpu_custom_call.1} parent=1 // pred_fallthru
      _
    %v54 = vld [vmem:[%s1] sm:$0xff]
    %v55 = vld [vmem:[#allocation5] sm:$0xff]
    %v56 = vld [vmem:[#allocation5 + $0x8] sm:$0xff]
    %v57 = vld [vmem:[#allocation5 + $0x10] sm:$0xff]
    %v58 = vld [vmem:[#allocation5 + $0x18] sm:$0xff]
    %v59 = vld [vmem:[#allocation5 + $0x20] sm:$0xff]
    %v60 = vld [vmem:[#allocation5 + $0x28] sm:$0xff]
    %v61 = vld [vmem:[#allocation5 + $0x30] sm:$0xff]
    %62 = vst [vmem:[#allocation2] sm:$0xff] %v55
    %63 = vst [vmem:[#allocation2 + $0x8] sm:$0xff] %v56
    %64 = vst [vmem:[#allocation2 + $0x10] sm:$0xff] %v57
    %65 = vst [vmem:[#allocation2 + $0x18] sm:$0xff] %v58
    %66 = vst [vmem:[#allocation2 + $0x20] sm:$0xff] %v59
    %67 = vst [vmem:[#allocation2 + $0x28] sm:$0xff] %v60
    %68 = vst [vmem:[#allocation2 + $0x30] sm:$0xff] %v61
    %v69 = vld [vmem:[#allocation5] sm:$0xff]
    %v70 = vld [vmem:[#allocation5 + $0x8] sm:$0xff]
    %v71 = vld [vmem:[#allocation5 + $0x10] sm:$0xff]
    %v72 = vld [vmem:[#allocation5 + $0x18] sm:$0xff]
    %v73 = vld [vmem:[#allocation5 + $0x20] sm:$0xff]
    %v74 = vld [vmem:[#allocation5 + $0x28] sm:$0xff]
    %v75 = vld [vmem:[#allocation5 + $0x30] sm:$0xff]
    %v76 = vld [vmem:[#allocation5 + $0x38] sm:$0xff]
    %85 = vrot.lane.b32.xlu0 %v69, 127
    %v86 = vpop.permute.xlu0 %85
    %87 = vrot.lane.b32.xlu0 %v70, 127
    %v88 = vpop.permute.xlu0 %87
    %89 = vrot.lane.b32.xlu0 %v71, 127
    %v90 = vpop.permute.xlu0 %89
    %91 = vrot.lane.b32.xlu0 %v72, 127
    %v92 = vpop.permute.xlu0 %91
    %93 = vrot.lane.b32.xlu0 %v73, 127
    %v94 = vpop.permute.xlu0 %93
    %95 = vrot.lane.b32.xlu0 %v74, 127
    %v96 = vpop.permute.xlu0 %95
    %97 = vrot.lane.b32.xlu0 %v75, 127
    %v98 = vpop.permute.xlu0 %97
    %99 = vrot.lane.b32.xlu0 %v76, 127
    %v100 = vpop.permute.xlu0 %99
    %vm101 = vcmask 1039360
    %v102 = vsel %vm101, %v86, %v88
    %v103 = vsel %vm101, %v88, %v90
    %v104 = vsel %vm101, %v90, %v92
    %v105 = vsel %vm101, %v92, %v94
    %v106 = vsel %vm101, %v94, %v96
    %v107 = vsel %vm101, %v96, %v98
    %v108 = vsel %vm101, %v98, %v100
    %116 = vst [vmem:[#allocation2 + $0x38] sm:$0xff] %v102
    %117 = vst [vmem:[#allocation2 + $0x40] sm:$0xff] %v103
    %118 = vst [vmem:[#allocation2 + $0x48] sm:$0xff] %v104
    %119 = vst [vmem:[#allocation2 + $0x50] sm:$0xff] %v105
    %120 = vst [vmem:[#allocation2 + $0x58] sm:$0xff] %v106
    %121 = vst [vmem:[#allocation2 + $0x60] sm:$0xff] %v107
    %122 = vst [vmem:[#allocation2 + $0x68] sm:$0xff] %v108
    %v123 = vld [vmem:[#allocation5] sm:$0xff]
    %v124 = vld [vmem:[#allocation5 + $0x8] sm:$0xff]
    %v125 = vld [vmem:[#allocation5 + $0x10] sm:$0xff]
    %v126 = vld [vmem:[#allocation5 + $0x18] sm:$0xff]
    %v127 = vld [vmem:[#allocation5 + $0x20] sm:$0xff]
    %v128 = vld [vmem:[#allocation5 + $0x28] sm:$0xff]
    %v129 = vld [vmem:[#allocation5 + $0x30] sm:$0xff]
    %v130 = vld [vmem:[#allocation5 + $0x38] sm:$0xff]
    %139 = vrot.lane.b32.xlu0 %v123, 126
    %v140 = vpop.permute.xlu0 %139
    %141 = vrot.lane.b32.xlu0 %v124, 126
    %v142 = vpop.permute.xlu0 %141
    %143 = vrot.lane.b32.xlu0 %v125, 126
    %v144 = vpop.permute.xlu0 %143
    %145 = vrot.lane.b32.xlu0 %v126, 126
    %v146 = vpop.permute.xlu0 %145
    %147 = vrot.lane.b32.xlu0 %v127, 126
    %v148 = vpop.permute.xlu0 %147
    %149 = vrot.lane.b32.xlu0 %v128, 126
    %v150 = vpop.permute.xlu0 %149
    %151 = vrot.lane.b32.xlu0 %v129, 126
    %v152 = vpop.permute.xlu0 %151
    %153 = vrot.lane.b32.xlu0 %v130, 126
    %v154 = vpop.permute.xlu0 %153
    %vm155 = vcmask 1031168
    %v156 = vsel %vm155, %v140, %v142
    %v157 = vsel %vm155, %v142, %v144
    %v158 = vsel %vm155, %v144, %v146
    %v159 = vsel %vm155, %v146, %v148
    %v160 = vsel %vm155, %v148, %v150
    %v161 = vsel %vm155, %v150, %v152
    %v162 = vsel %vm155, %v152, %v154
    %170 = vst [vmem:[#allocation2 + $0x70] sm:$0xff] %v156
    %171 = vst [vmem:[#allocation2 + $0x78] sm:$0xff] %v157
    %172 = vst [vmem:[#allocation2 + $0x80] sm:$0xff] %v158
    %173 = vst [vmem:[#allocation2 + $0x88] sm:$0xff] %v159
    %174 = vst [vmem:[#allocation2 + $0x90] sm:$0xff] %v160
    %175 = vst [vmem:[#allocation2 + $0x98] sm:$0xff] %v161
    %176 = vst [vmem:[#allocation2 + $0xa0] sm:$0xff] %v162
    %v177 = vld [vmem:[#allocation5] sm:$0xff]
    %v178 = vld [vmem:[#allocation5 + $0x8] sm:$0xff]
    %v179 = vld [vmem:[#allocation5 + $0x10] sm:$0xff]
    %v180 = vld [vmem:[#allocation5 + $0x18] sm:$0xff]
    %v181 = vld [vmem:[#allocation5 + $0x20] sm:$0xff]
    %v182 = vld [vmem:[#allocation5 + $0x28] sm:$0xff]
    %v183 = vld [vmem:[#allocation5 + $0x30] sm:$0xff]
    %v184 = vld [vmem:[#allocation5 + $0x38] sm:$0xff]
    %193 = vrot.lane.b32.xlu0 %v177, 125
    %v194 = vpop.permute.xlu0 %193
    %195 = vrot.lane.b32.xlu0 %v178, 125
    %v196 = vpop.permute.xlu0 %195
    %197 = vrot.lane.b32.xlu0 %v179, 125
    %v198 = vpop.permute.xlu0 %197
    %199 = vrot.lane.b32.xlu0 %v180, 125
    %v200 = vpop.permute.xlu0 %199
    %201 = vrot.lane.b32.xlu0 %v181, 125
    %v202 = vpop.permute.xlu0 %201
    %203 = vrot.lane.b32.xlu0 %v182, 125
    %v204 = vpop.permute.xlu0 %203
    %205 = vrot.lane.b32.xlu0 %v183, 125
    %v206 = vpop.permute.xlu0 %205
    %207 = vrot.lane.b32.xlu0 %v184, 125
    %v208 = vpop.permute.xlu0 %207
    %vm209 = vcmask 1022976
    %v210 = vsel %vm209, %v194, %v196
    %v211 = vsel %vm209, %v196, %v198
    %v212 = vsel %vm209, %v198, %v200
    %v213 = vsel %vm209, %v200, %v202
    %v214 = vsel %vm209, %v202, %v204
    %v215 = vsel %vm209, %v204, %v206
    %v216 = vsel %vm209, %v206, %v208
    %224 = vst [vmem:[#allocation2 + $0xa8] sm:$0xff] %v210
    %225 = vst [vmem:[#allocation2 + $0xb0] sm:$0xff] %v211
    %226 = vst [vmem:[#allocation2 + $0xb8] sm:$0xff] %v212
    %227 = vst [vmem:[#allocation2 + $0xc0] sm:$0xff] %v213
    %228 = vst [vmem:[#allocation2 + $0xc8] sm:$0xff] %v214
    %229 = vst [vmem:[#allocation2 + $0xd0] sm:$0xff] %v215
    %230 = vst [vmem:[#allocation2 + $0xd8] sm:$0xff] %v216
    %v231 = vld [vmem:[#allocation5] sm:$0xff]
    %v232 = vld [vmem:[#allocation5 + $0x8] sm:$0xff]
    %v233 = vld [vmem:[#allocation5 + $0x10] sm:$0xff]
    %v234 = vld [vmem:[#allocation5 + $0x18] sm:$0xff]
    %v235 = vld [vmem:[#allocation5 + $0x20] sm:$0xff]
    %v236 = vld [vmem:[#allocation5 + $0x28] sm:$0xff]
    %v237 = vld [vmem:[#allocation5 + $0x30] sm:$0xff]
    %v238 = vld [vmem:[#allocation5 + $0x38] sm:$0xff]
    %247 = vrot.lane.b32.xlu0 %v231, 124
    %v248 = vpop.permute.xlu0 %247
    %249 = vrot.lane.b32.xlu0 %v232, 124
    %v250 = vpop.permute.xlu0 %249
    %251 = vrot.lane.b32.xlu0 %v233, 124
    %v252 = vpop.permute.xlu0 %251
    %253 = vrot.lane.b32.xlu0 %v234, 124
    %v254 = vpop.permute.xlu0 %253
    %255 = vrot.lane.b32.xlu0 %v235, 124
    %v256 = vpop.permute.xlu0 %255
    %257 = vrot.lane.b32.xlu0 %v236, 124
    %v258 = vpop.permute.xlu0 %257
    %259 = vrot.lane.b32.xlu0 %v237, 124
    %v260 = vpop.permute.xlu0 %259
    %261 = vrot.lane.b32.xlu0 %v238, 124
    %v262 = vpop.permute.xlu0 %261
    %vm263 = vcmask 1014784
    %v264 = vsel %vm263, %v248, %v250
    %v265 = vsel %vm263, %v250, %v252
    %v266 = vsel %vm263, %v252, %v254
    %v267 = vsel %vm263, %v254, %v256
    %v268 = vsel %vm263, %v256, %v258
    %v269 = vsel %vm263, %v258, %v260
    %v270 = vsel %vm263, %v260, %v262
    %278 = vst [vmem:[#allocation2 + $0xe0] sm:$0xff] %v264
    %279 = vst [vmem:[#allocation2 + $0xe8] sm:$0xff] %v265
    %280 = vst [vmem:[#allocation2 + $0xf0] sm:$0xff] %v266
    %281 = vst [vmem:[#allocation2 + $0xf8] sm:$0xff] %v267
    %282 = vst [vmem:[#allocation2 + $0x100] sm:$0xff] %v268
    %283 = vst [vmem:[#allocation2 + $0x108] sm:$0xff] %v269
    %284 = vst [vmem:[#allocation2 + $0x110] sm:$0xff] %v270
    %v285 = vld [vmem:[#allocation5] sm:$0xff]
    %v286 = vld [vmem:[#allocation5 + $0x8] sm:$0xff]
    %v287 = vld [vmem:[#allocation5 + $0x10] sm:$0xff]
    %v288 = vld [vmem:[#allocation5 + $0x18] sm:$0xff]
    %v289 = vld [vmem:[#allocation5 + $0x20] sm:$0xff]
    %v290 = vld [vmem:[#allocation5 + $0x28] sm:$0xff]
    %v291 = vld [vmem:[#allocation5 + $0x30] sm:$0xff]
    %v292 = vld [vmem:[#allocation5 + $0x38] sm:$0xff]
    %301 = vrot.lane.b32.xlu0 %v285, 108
    %v302 = vpop.permute.xlu0 %301
    %303 = vrot.lane.b32.xlu0 %v286, 108
    %v304 = vpop.permute.xlu0 %303
    %305 = vrot.lane.b32.xlu0 %v287, 108
    %v306 = vpop.permute.xlu0 %305
    %307 = vrot.lane.b32.xlu0 %v288, 108
    %v308 = vpop.permute.xlu0 %307
    %309 = vrot.lane.b32.xlu0 %v289, 108
    %v310 = vpop.permute.xlu0 %309
    %311 = vrot.lane.b32.xlu0 %v290, 108
    %v312 = vpop.permute.xlu0 %311
    %313 = vrot.lane.b32.xlu0 %v291, 108
    %v314 = vpop.permute.xlu0 %313
    %315 = vrot.lane.b32.xlu0 %v292, 108
    %v316 = vpop.permute.xlu0 %315
    %vm317 = vcmask 883712
    %v318 = vsel %vm317, %v302, %v304
    %v319 = vsel %vm317, %v304, %v306
    %v320 = vsel %vm317, %v306, %v308
    %v321 = vsel %vm317, %v308, %v310
    %v322 = vsel %vm317, %v310, %v312
    %v323 = vsel %vm317, %v312, %v314
    %v324 = vsel %vm317, %v314, %v316
    %332 = vst [vmem:[#allocation2 + $0x118] sm:$0xff] %v318
    %333 = vst [vmem:[#allocation2 + $0x120] sm:$0xff] %v319
    %334 = vst [vmem:[#allocation2 + $0x128] sm:$0xff] %v320
    %335 = vst [vmem:[#allocation2 + $0x130] sm:$0xff] %v321
    %336 = vst [vmem:[#allocation2 + $0x138] sm:$0xff] %v322
    %337 = vst [vmem:[#allocation2 + $0x140] sm:$0xff] %v323
    %338 = vst [vmem:[#allocation2 + $0x148] sm:$0xff] %v324
    %v339 = vld [vmem:[#allocation5] sm:$0xff]
    %v340 = vld [vmem:[#allocation5 + $0x8] sm:$0xff]
    %v341 = vld [vmem:[#allocation5 + $0x10] sm:$0xff]
    %v342 = vld [vmem:[#allocation5 + $0x18] sm:$0xff]
    %v343 = vld [vmem:[#allocation5 + $0x20] sm:$0xff]
    %v344 = vld [vmem:[#allocation5 + $0x28] sm:$0xff]
    %v345 = vld [vmem:[#allocation5 + $0x30] sm:$0xff]
    %v346 = vld [vmem:[#allocation5 + $0x38] sm:$0xff]
    %355 = vrot.lane.b32.xlu0 %v339, 107
    %v356 = vpop.permute.xlu0 %355
    %357 = vrot.lane.b32.xlu0 %v340, 107
    %v358 = vpop.permute.xlu0 %357
    %359 = vrot.lane.b32.xlu0 %v341, 107
    %v360 = vpop.permute.xlu0 %359
    %361 = vrot.lane.b32.xlu0 %v342, 107
    %v362 = vpop.permute.xlu0 %361
    %363 = vrot.lane.b32.xlu0 %v343, 107
    %v364 = vpop.permute.xlu0 %363
    %365 = vrot.lane.b32.xlu0 %v344, 107
    %v366 = vpop.permute.xlu0 %365
    %367 = vrot.lane.b32.xlu0 %v345, 107
    %v368 = vpop.permute.xlu0 %367
    %369 = vrot.lane.b32.xlu0 %v346, 107
    %v370 = vpop.permute.xlu0 %369
    %vm371 = vcmask 875520
    %v372 = vsel %vm371, %v356, %v358
    %v373 = vsel %vm371, %v358, %v360
    %v374 = vsel %vm371, %v360, %v362
    %v375 = vsel %vm371, %v362, %v364
    %v376 = vsel %vm371, %v364, %v366
    %v377 = vsel %vm371, %v366, %v368
    %v378 = vsel %vm371, %v368, %v370
    %386 = vst [vmem:[#allocation2 + $0x150] sm:$0xff] %v372
    %387 = vst [vmem:[#allocation2 + $0x158] sm:$0xff] %v373
    %388 = vst [vmem:[#allocation2 + $0x160] sm:$0xff] %v374
    %389 = vst [vmem:[#allocation2 + $0x168] sm:$0xff] %v375
    %390 = vst [vmem:[#allocation2 + $0x170] sm:$0xff] %v376
    %391 = vst [vmem:[#allocation2 + $0x178] sm:$0xff] %v377
    %392 = vst [vmem:[#allocation2 + $0x180] sm:$0xff] %v378
    %v393 = vld [vmem:[#allocation5] sm:$0xff]
    %v394 = vld [vmem:[#allocation5 + $0x8] sm:$0xff]
    %v395 = vld [vmem:[#allocation5 + $0x10] sm:$0xff]
    %v396 = vld [vmem:[#allocation5 + $0x18] sm:$0xff]
    %v397 = vld [vmem:[#allocation5 + $0x20] sm:$0xff]
    %v398 = vld [vmem:[#allocation5 + $0x28] sm:$0xff]
    %v399 = vld [vmem:[#allocation5 + $0x30] sm:$0xff]
    %v400 = vld [vmem:[#allocation5 + $0x38] sm:$0xff]
    %409 = vrot.lane.b32.xlu0 %v393, 106
    %v410 = vpop.permute.xlu0 %409
    %411 = vrot.lane.b32.xlu0 %v394, 106
    %v412 = vpop.permute.xlu0 %411
    %413 = vrot.lane.b32.xlu0 %v395, 106
    %v414 = vpop.permute.xlu0 %413
    %415 = vrot.lane.b32.xlu0 %v396, 106
    %v416 = vpop.permute.xlu0 %415
    %417 = vrot.lane.b32.xlu0 %v397, 106
    %v418 = vpop.permute.xlu0 %417
    %419 = vrot.lane.b32.xlu0 %v398, 106
    %v420 = vpop.permute.xlu0 %419
    %421 = vrot.lane.b32.xlu0 %v399, 106
    %v422 = vpop.permute.xlu0 %421
    %423 = vrot.lane.b32.xlu0 %v400, 106
    %v424 = vpop.permute.xlu0 %423
    %vm425 = vcmask 867328
    %v426 = vsel %vm425, %v410, %v412
    %v427 = vsel %vm425, %v412, %v414
    %v428 = vsel %vm425, %v414, %v416
    %v429 = vsel %vm425, %v416, %v418
    %v430 = vsel %vm425, %v418, %v420
    %v431 = vsel %vm425, %v420, %v422
    %v432 = vsel %vm425, %v422, %v424
    %440 = vst [vmem:[#allocation2 + $0x188] sm:$0xff] %v426
    %441 = vst [vmem:[#allocation2 + $0x190] sm:$0xff] %v427
    %442 = vst [vmem:[#allocation2 + $0x198] sm:$0xff] %v428
    %443 = vst [vmem:[#allocation2 + $0x1a0] sm:$0xff] %v429
    %444 = vst [vmem:[#allocation2 + $0x1a8] sm:$0xff] %v430
    %445 = vst [vmem:[#allocation2 + $0x1b0] sm:$0xff] %v431
    %446 = vst [vmem:[#allocation2 + $0x1b8] sm:$0xff] %v432
    %v447 = vld [vmem:[#allocation5] sm:$0xff]
    %v448 = vld [vmem:[#allocation5 + $0x8] sm:$0xff]
    %v449 = vld [vmem:[#allocation5 + $0x10] sm:$0xff]
    %v450 = vld [vmem:[#allocation5 + $0x18] sm:$0xff]
    %v451 = vld [vmem:[#allocation5 + $0x20] sm:$0xff]
    %v452 = vld [vmem:[#allocation5 + $0x28] sm:$0xff]
    %v453 = vld [vmem:[#allocation5 + $0x30] sm:$0xff]
    %v454 = vld [vmem:[#allocation5 + $0x38] sm:$0xff]
    %463 = vrot.lane.b32.xlu0 %v447, 105
    %v464 = vpop.permute.xlu0 %463
    %465 = vrot.lane.b32.xlu0 %v448, 105
    %v466 = vpop.permute.xlu0 %465
    %467 = vrot.lane.b32.xlu0 %v449, 105
    %v468 = vpop.permute.xlu0 %467
    %469 = vrot.lane.b32.xlu0 %v450, 105
    %v470 = vpop.permute.xlu0 %469
    %471 = vrot.lane.b32.xlu0 %v451, 105
    %v472 = vpop.permute.xlu0 %471
    %473 = vrot.lane.b32.xlu0 %v452, 105
    %v474 = vpop.permute.xlu0 %473
    %475 = vrot.lane.b32.xlu0 %v453, 105
    %v476 = vpop.permute.xlu0 %475
    %477 = vrot.lane.b32.xlu0 %v454, 105
    %v478 = vpop.permute.xlu0 %477
    %vm479 = vcmask 859136
    %v480 = vsel %vm479, %v464, %v466
    %v481 = vsel %vm479, %v466, %v468
    %v482 = vsel %vm479, %v468, %v470
    %v483 = vsel %vm479, %v470, %v472
    %v484 = vsel %vm479, %v472, %v474
    %v485 = vsel %vm479, %v474, %v476
    %v486 = vsel %vm479, %v476, %v478
    %494 = vst [vmem:[#allocation2 + $0x1c0] sm:$0xff] %v480
    %495 = vst [vmem:[#allocation2 + $0x1c8] sm:$0xff] %v481
    %496 = vst [vmem:[#allocation2 + $0x1d0] sm:$0xff] %v482
    %497 = vst [vmem:[#allocation2 + $0x1d8] sm:$0xff] %v483
    %498 = vst [vmem:[#allocation2 + $0x1e0] sm:$0xff] %v484
    %499 = vst [vmem:[#allocation2 + $0x1e8] sm:$0xff] %v485
    %500 = vst [vmem:[#allocation2 + $0x1f0] sm:$0xff] %v486
    %v501 = vld [vmem:[#allocation5] sm:$0xff]
    %v502 = vld [vmem:[#allocation5 + $0x8] sm:$0xff]
    %v503 = vld [vmem:[#allocation5 + $0x10] sm:$0xff]
    %v504 = vld [vmem:[#allocation5 + $0x18] sm:$0xff]
    %v505 = vld [vmem:[#allocation5 + $0x20] sm:$0xff]
    %v506 = vld [vmem:[#allocation5 + $0x28] sm:$0xff]
    %v507 = vld [vmem:[#allocation5 + $0x30] sm:$0xff]
    %v508 = vld [vmem:[#allocation5 + $0x38] sm:$0xff]
    %517 = vrot.lane.b32.xlu0 %v501, 104
    %v518 = vpop.permute.xlu0 %517
    %519 = vrot.lane.b32.xlu0 %v502, 104
    %v520 = vpop.permute.xlu0 %519
    %521 = vrot.lane.b32.xlu0 %v503, 104
    %v522 = vpop.permute.xlu0 %521
    %523 = vrot.lane.b32.xlu0 %v504, 104
    %v524 = vpop.permute.xlu0 %523
    %525 = vrot.lane.b32.xlu0 %v505, 104
    %v526 = vpop.permute.xlu0 %525
    %527 = vrot.lane.b32.xlu0 %v506, 104
    %v528 = vpop.permute.xlu0 %527
    %529 = vrot.lane.b32.xlu0 %v507, 104
    %v530 = vpop.permute.xlu0 %529
    %531 = vrot.lane.b32.xlu0 %v508, 104
    %v532 = vpop.permute.xlu0 %531
    %vm533 = vcmask 850944
    %v534 = vsel %vm533, %v518, %v520
    %v535 = vsel %vm533, %v520, %v522
    %v536 = vsel %vm533, %v522, %v524
    %v537 = vsel %vm533, %v524, %v526
    %v538 = vsel %vm533, %v526, %v528
    %v539 = vsel %vm533, %v528, %v530
    %v540 = vsel %vm533, %v530, %v532
    %548 = vst [vmem:[#allocation2 + $0x1f8] sm:$0xff] %v534
    %549 = vst [vmem:[#allocation2 + $0x200] sm:$0xff] %v535
    %550 = vst [vmem:[#allocation2 + $0x208] sm:$0xff] %v536
    %551 = vst [vmem:[#allocation2 + $0x210] sm:$0xff] %v537
    %552 = vst [vmem:[#allocation2 + $0x218] sm:$0xff] %v538
    %553 = vst [vmem:[#allocation2 + $0x220] sm:$0xff] %v539
    %554 = vst [vmem:[#allocation2 + $0x228] sm:$0xff] %v540
    %v555 = vld [vmem:[#allocation5] sm:$0xff]
    %v556 = vld [vmem:[#allocation5 + $0x8] sm:$0xff]
    %v557 = vld [vmem:[#allocation5 + $0x10] sm:$0xff]
    %v558 = vld [vmem:[#allocation5 + $0x18] sm:$0xff]
    %v559 = vld [vmem:[#allocation5 + $0x20] sm:$0xff]
    %v560 = vld [vmem:[#allocation5 + $0x28] sm:$0xff]
    %v561 = vld [vmem:[#allocation5 + $0x30] sm:$0xff]
    %v562 = vld [vmem:[#allocation5 + $0x38] sm:$0xff]
    %571 = vrot.lane.b32.xlu0 %v555, 88
    %v572 = vpop.permute.xlu0 %571
    %573 = vrot.lane.b32.xlu0 %v556, 88
    %v574 = vpop.permute.xlu0 %573
    %575 = vrot.lane.b32.xlu0 %v557, 88
    %v576 = vpop.permute.xlu0 %575
    %577 = vrot.lane.b32.xlu0 %v558, 88
    %v578 = vpop.permute.xlu0 %577
    %579 = vrot.lane.b32.xlu0 %v559, 88
    %v580 = vpop.permute.xlu0 %579
    %581 = vrot.lane.b32.xlu0 %v560, 88
    %v582 = vpop.permute.xlu0 %581
    %583 = vrot.lane.b32.xlu0 %v561, 88
    %v584 = vpop.permute.xlu0 %583
    %585 = vrot.lane.b32.xlu0 %v562, 88
    %v586 = vpop.permute.xlu0 %585
    %vm587 = vcmask 719872
    %v588 = vsel %vm587, %v572, %v574
    %v589 = vsel %vm587, %v574, %v576
    %v590 = vsel %vm587, %v576, %v578
    %v591 = vsel %vm587, %v578, %v580
    %v592 = vsel %vm587, %v580, %v582
    %v593 = vsel %vm587, %v582, %v584
    %v594 = vsel %vm587, %v584, %v586
    %602 = vst [vmem:[#allocation2 + $0x230] sm:$0xff] %v588
    %603 = vst [vmem:[#allocation2 + $0x238] sm:$0xff] %v589
    %604 = vst [vmem:[#allocation2 + $0x240] sm:$0xff] %v590
    %605 = vst [vmem:[#allocation2 + $0x248] sm:$0xff] %v591
    %606 = vst [vmem:[#allocation2 + $0x250] sm:$0xff] %v592
    %607 = vst [vmem:[#allocation2 + $0x258] sm:$0xff] %v593
    %608 = vst [vmem:[#allocation2 + $0x260] sm:$0xff] %v594
    %v609 = vld [vmem:[#allocation5] sm:$0xff]
    %v610 = vld [vmem:[#allocation5 + $0x8] sm:$0xff]
    %v611 = vld [vmem:[#allocation5 + $0x10] sm:$0xff]
    %v612 = vld [vmem:[#allocation5 + $0x18] sm:$0xff]
    %v613 = vld [vmem:[#allocation5 + $0x20] sm:$0xff]
    %v614 = vld [vmem:[#allocation5 + $0x28] sm:$0xff]
    %v615 = vld [vmem:[#allocation5 + $0x30] sm:$0xff]
    %v616 = vld [vmem:[#allocation5 + $0x38] sm:$0xff]
    %625 = vrot.lane.b32.xlu0 %v609, 87
    %v626 = vpop.permute.xlu0 %625
    %627 = vrot.lane.b32.xlu0 %v610, 87
    %v628 = vpop.permute.xlu0 %627
    %629 = vrot.lane.b32.xlu0 %v611, 87
    %v630 = vpop.permute.xlu0 %629
    %631 = vrot.lane.b32.xlu0 %v612, 87
    %v632 = vpop.permute.xlu0 %631
    %633 = vrot.lane.b32.xlu0 %v613, 87
    %v634 = vpop.permute.xlu0 %633
    %635 = vrot.lane.b32.xlu0 %v614, 87
    %v636 = vpop.permute.xlu0 %635
    %637 = vrot.lane.b32.xlu0 %v615, 87
    %v638 = vpop.permute.xlu0 %637
    %639 = vrot.lane.b32.xlu0 %v616, 87
    %v640 = vpop.permute.xlu0 %639
    %vm641 = vcmask 711680
    %v642 = vsel %vm641, %v626, %v628
    %v643 = vsel %vm641, %v628, %v630
    %v644 = vsel %vm641, %v630, %v632
    %v645 = vsel %vm641, %v632, %v634
    %v646 = vsel %vm641, %v634, %v636
    %v647 = vsel %vm641, %v636, %v638
    %v648 = vsel %vm641, %v638, %v640
    %656 = vst [vmem:[#allocation2 + $0x268] sm:$0xff] %v642
    %657 = vst [vmem:[#allocation2 + $0x270] sm:$0xff] %v643
    %658 = vst [vmem:[#allocation2 + $0x278] sm:$0xff] %v644
    %659 = vst [vmem:[#allocation2 + $0x280] sm:$0xff] %v645
    %660 = vst [vmem:[#allocation2 + $0x288] sm:$0xff] %v646
    %661 = vst [vmem:[#allocation2 + $0x290] sm:$0xff] %v647
    %662 = vst [vmem:[#allocation2 + $0x298] sm:$0xff] %v648
    %v663 = vld [vmem:[#allocation5] sm:$0xff]
    %v664 = vld [vmem:[#allocation5 + $0x8] sm:$0xff]
    %v665 = vld [vmem:[#allocation5 + $0x10] sm:$0xff]
    %v666 = vld [vmem:[#allocation5 + $0x18] sm:$0xff]
    %v667 = vld [vmem:[#allocation5 + $0x20] sm:$0xff]
    %v668 = vld [vmem:[#allocation5 + $0x28] sm:$0xff]
    %v669 = vld [vmem:[#allocation5 + $0x30] sm:$0xff]
    %v670 = vld [vmem:[#allocation5 + $0x38] sm:$0xff]
    %679 = vrot.lane.b32.xlu0 %v663, 86
    %v680 = vpop.permute.xlu0 %679
    %681 = vrot.lane.b32.xlu0 %v664, 86
    %v682 = vpop.permute.xlu0 %681
    %683 = vrot.lane.b32.xlu0 %v665, 86
    %v684 = vpop.permute.xlu0 %683
    %685 = vrot.lane.b32.xlu0 %v666, 86
    %v686 = vpop.permute.xlu0 %685
    %687 = vrot.lane.b32.xlu0 %v667, 86
    %v688 = vpop.permute.xlu0 %687
    %689 = vrot.lane.b32.xlu0 %v668, 86
    %v690 = vpop.permute.xlu0 %689
    %691 = vrot.lane.b32.xlu0 %v669, 86
    %v692 = vpop.permute.xlu0 %691
    %693 = vrot.lane.b32.xlu0 %v670, 86
    %v694 = vpop.permute.xlu0 %693
    %vm695 = vcmask 703488
    %v696 = vsel %vm695, %v680, %v682
    %v697 = vsel %vm695, %v682, %v684
    %v698 = vsel %vm695, %v684, %v686
    %v699 = vsel %vm695, %v686, %v688
    %v700 = vsel %vm695, %v688, %v690
    %v701 = vsel %vm695, %v690, %v692
    %v702 = vsel %vm695, %v692, %v694
    %710 = vst [vmem:[#allocation2 + $0x2a0] sm:$0xff] %v696
    %711 = vst [vmem:[#allocation2 + $0x2a8] sm:$0xff] %v697
    %712 = vst [vmem:[#allocation2 + $0x2b0] sm:$0xff] %v698
    %713 = vst [vmem:[#allocation2 + $0x2b8] sm:$0xff] %v699
    %714 = vst [vmem:[#allocation2 + $0x2c0] sm:$0xff] %v700
    %715 = vst [vmem:[#allocation2 + $0x2c8] sm:$0xff] %v701
    %716 = vst [vmem:[#allocation2 + $0x2d0] sm:$0xff] %v702
    %v717 = vld [vmem:[#allocation5] sm:$0xff]
    %v718 = vld [vmem:[#allocation5 + $0x8] sm:$0xff]
    %v719 = vld [vmem:[#allocation5 + $0x10] sm:$0xff]
    %v720 = vld [vmem:[#allocation5 + $0x18] sm:$0xff]
    %v721 = vld [vmem:[#allocation5 + $0x20] sm:$0xff]
    %v722 = vld [vmem:[#allocation5 + $0x28] sm:$0xff]
    %v723 = vld [vmem:[#allocation5 + $0x30] sm:$0xff]
    %v724 = vld [vmem:[#allocation5 + $0x38] sm:$0xff]
    %733 = vrot.lane.b32.xlu0 %v717, 85
    %v734 = vpop.permute.xlu0 %733
    %735 = vrot.lane.b32.xlu0 %v718, 85
    %v736 = vpop.permute.xlu0 %735
    %737 = vrot.lane.b32.xlu0 %v719, 85
    %v738 = vpop.permute.xlu0 %737
    %739 = vrot.lane.b32.xlu0 %v720, 85
    %v740 = vpop.permute.xlu0 %739
    %741 = vrot.lane.b32.xlu0 %v721, 85
    %v742 = vpop.permute.xlu0 %741
    %743 = vrot.lane.b32.xlu0 %v722, 85
    %v744 = vpop.permute.xlu0 %743
    %745 = vrot.lane.b32.xlu0 %v723, 85
    %v746 = vpop.permute.xlu0 %745
    %747 = vrot.lane.b32.xlu0 %v724, 85
    %v748 = vpop.permute.xlu0 %747
    %vm749 = vcmask 695296
    %v750 = vsel %vm749, %v734, %v736
    %v751 = vsel %vm749, %v736, %v738
    %v752 = vsel %vm749, %v738, %v740
    %v753 = vsel %vm749, %v740, %v742
    %v754 = vsel %vm749, %v742, %v744
    %v755 = vsel %vm749, %v744, %v746
    %v756 = vsel %vm749, %v746, %v748
    %764 = vst [vmem:[#allocation2 + $0x2d8] sm:$0xff] %v750
    %765 = vst [vmem:[#allocation2 + $0x2e0] sm:$0xff] %v751
    %766 = vst [vmem:[#allocation2 + $0x2e8] sm:$0xff] %v752
    %767 = vst [vmem:[#allocation2 + $0x2f0] sm:$0xff] %v753
    %768 = vst [vmem:[#allocation2 + $0x2f8] sm:$0xff] %v754
    %769 = vst [vmem:[#allocation2 + $0x300] sm:$0xff] %v755
    %770 = vst [vmem:[#allocation2 + $0x308] sm:$0xff] %v756
    %v771 = vld [vmem:[#allocation5] sm:$0xff]
    %v772 = vld [vmem:[#allocation5 + $0x8] sm:$0xff]
    %v773 = vld [vmem:[#allocation5 + $0x10] sm:$0xff]
    %v774 = vld [vmem:[#allocation5 + $0x18] sm:$0xff]
    %v775 = vld [vmem:[#allocation5 + $0x20] sm:$0xff]
    %v776 = vld [vmem:[#allocation5 + $0x28] sm:$0xff]
    %v777 = vld [vmem:[#allocation5 + $0x30] sm:$0xff]
    %v778 = vld [vmem:[#allocation5 + $0x38] sm:$0xff]
    %787 = vrot.lane.b32.xlu0 %v771, 84
    %v788 = vpop.permute.xlu0 %787
    %789 = vrot.lane.b32.xlu0 %v772, 84
    %v790 = vpop.permute.xlu0 %789
    %791 = vrot.lane.b32.xlu0 %v773, 84
    %v792 = vpop.permute.xlu0 %791
    %793 = vrot.lane.b32.xlu0 %v774, 84
    %v794 = vpop.permute.xlu0 %793
    %795 = vrot.lane.b32.xlu0 %v775, 84
    %v796 = vpop.permute.xlu0 %795
    %797 = vrot.lane.b32.xlu0 %v776, 84
    %v798 = vpop.permute.xlu0 %797
    %799 = vrot.lane.b32.xlu0 %v777, 84
    %v800 = vpop.permute.xlu0 %799
    %801 = vrot.lane.b32.xlu0 %v778, 84
    %v802 = vpop.permute.xlu0 %801
    %vm803 = vcmask 687104
    %v804 = vsel %vm803, %v788, %v790
    %v805 = vsel %vm803, %v790, %v792
    %v806 = vsel %vm803, %v792, %v794
    %v807 = vsel %vm803, %v794, %v796
    %v808 = vsel %vm803, %v796, %v798
    %v809 = vsel %vm803, %v798, %v800
    %v810 = vsel %vm803, %v800, %v802
    %818 = vst [vmem:[#allocation2 + $0x310] sm:$0xff] %v804
    %819 = vst [vmem:[#allocation2 + $0x318] sm:$0xff] %v805
    %820 = vst [vmem:[#allocation2 + $0x320] sm:$0xff] %v806
    %821 = vst [vmem:[#allocation2 + $0x328] sm:$0xff] %v807
    %822 = vst [vmem:[#allocation2 + $0x330] sm:$0xff] %v808
    %823 = vst [vmem:[#allocation2 + $0x338] sm:$0xff] %v809
    %824 = vst [vmem:[#allocation2 + $0x340] sm:$0xff] %v810
    %v825 = vld [vmem:[#allocation5] sm:$0xff]
    %v826 = vld [vmem:[#allocation5 + $0x8] sm:$0xff]
    %v827 = vld [vmem:[#allocation5 + $0x10] sm:$0xff]
    %v828 = vld [vmem:[#allocation5 + $0x18] sm:$0xff]
    %v829 = vld [vmem:[#allocation5 + $0x20] sm:$0xff]
    %v830 = vld [vmem:[#allocation5 + $0x28] sm:$0xff]
    %v831 = vld [vmem:[#allocation5 + $0x30] sm:$0xff]
    %v832 = vld [vmem:[#allocation5 + $0x38] sm:$0xff]
    %841 = vrot.lane.b32.xlu0 %v825, 68
    %v842 = vpop.permute.xlu0 %841
    %843 = vrot.lane.b32.xlu0 %v826, 68
    %v844 = vpop.permute.xlu0 %843
    %845 = vrot.lane.b32.xlu0 %v827, 68
    %v846 = vpop.permute.xlu0 %845
    %847 = vrot.lane.b32.xlu0 %v828, 68
    %v848 = vpop.permute.xlu0 %847
    %849 = vrot.lane.b32.xlu0 %v829, 68
    %v850 = vpop.permute.xlu0 %849
    %851 = vrot.lane.b32.xlu0 %v830, 68
    %v852 = vpop.permute.xlu0 %851
    %853 = vrot.lane.b32.xlu0 %v831, 68
    %v854 = vpop.permute.xlu0 %853
    %855 = vrot.lane.b32.xlu0 %v832, 68
    %v856 = vpop.permute.xlu0 %855
    %vm857 = vcmask 556032
    %v858 = vsel %vm857, %v842, %v844
    %v859 = vsel %vm857, %v844, %v846
    %v860 = vsel %vm857, %v846, %v848
    %v861 = vsel %vm857, %v848, %v850
    %v862 = vsel %vm857, %v850, %v852
    %v863 = vsel %vm857, %v852, %v854
    %v864 = vsel %vm857, %v854, %v856
    %872 = vst [vmem:[#allocation2 + $0x348] sm:$0xff] %v858
    %873 = vst [vmem:[#allocation2 + $0x350] sm:$0xff] %v859
    %874 = vst [vmem:[#allocation2 + $0x358] sm:$0xff] %v860
    %875 = vst [vmem:[#allocation2 + $0x360] sm:$0xff] %v861
    %876 = vst [vmem:[#allocation2 + $0x368] sm:$0xff] %v862
    %877 = vst [vmem:[#allocation2 + $0x370] sm:$0xff] %v863
    %878 = vst [vmem:[#allocation2 + $0x378] sm:$0xff] %v864
    %v879 = vld [vmem:[#allocation5] sm:$0xff]
    %v880 = vld [vmem:[#allocation5 + $0x8] sm:$0xff]
    %v881 = vld [vmem:[#allocation5 + $0x10] sm:$0xff]
    %v882 = vld [vmem:[#allocation5 + $0x18] sm:$0xff]
    %v883 = vld [vmem:[#allocation5 + $0x20] sm:$0xff]
    %v884 = vld [vmem:[#allocation5 + $0x28] sm:$0xff]
    %v885 = vld [vmem:[#allocation5 + $0x30] sm:$0xff]
    %v886 = vld [vmem:[#allocation5 + $0x38] sm:$0xff]
    %895 = vrot.lane.b32.xlu0 %v879, 67
    %v896 = vpop.permute.xlu0 %895
    %897 = vrot.lane.b32.xlu0 %v880, 67
    %v898 = vpop.permute.xlu0 %897
    %899 = vrot.lane.b32.xlu0 %v881, 67
    %v900 = vpop.permute.xlu0 %899
    %901 = vrot.lane.b32.xlu0 %v882, 67
    %v902 = vpop.permute.xlu0 %901
    %903 = vrot.lane.b32.xlu0 %v883, 67
    %v904 = vpop.permute.xlu0 %903
    %905 = vrot.lane.b32.xlu0 %v884, 67
    %v906 = vpop.permute.xlu0 %905
    %907 = vrot.lane.b32.xlu0 %v885, 67
    %v908 = vpop.permute.xlu0 %907
    %909 = vrot.lane.b32.xlu0 %v886, 67
    %v910 = vpop.permute.xlu0 %909
    %vm911 = vcmask 547840
    %v912 = vsel %vm911, %v896, %v898
    %v913 = vsel %vm911, %v898, %v900
    %v914 = vsel %vm911, %v900, %v902
    %v915 = vsel %vm911, %v902, %v904
    %v916 = vsel %vm911, %v904, %v906
    %v917 = vsel %vm911, %v906, %v908
    %v918 = vsel %vm911, %v908, %v910
    %926 = vst [vmem:[#allocation2 + $0x380] sm:$0xff] %v912
    %927 = vst [vmem:[#allocation2 + $0x388] sm:$0xff] %v913
    %928 = vst [vmem:[#allocation2 + $0x390] sm:$0xff] %v914
    %929 = vst [vmem:[#allocation2 + $0x398] sm:$0xff] %v915
    %930 = vst [vmem:[#allocation2 + $0x3a0] sm:$0xff] %v916
    %931 = vst [vmem:[#allocation2 + $0x3a8] sm:$0xff] %v917
    %932 = vst [vmem:[#allocation2 + $0x3b0] sm:$0xff] %v918
    %v933 = vld [vmem:[#allocation5] sm:$0xff]
    %v934 = vld [vmem:[#allocation5 + $0x8] sm:$0xff]
    %v935 = vld [vmem:[#allocation5 + $0x10] sm:$0xff]
    %v936 = vld [vmem:[#allocation5 + $0x18] sm:$0xff]
    %v937 = vld [vmem:[#allocation5 + $0x20] sm:$0xff]
    %v938 = vld [vmem:[#allocation5 + $0x28] sm:$0xff]
    %v939 = vld [vmem:[#allocation5 + $0x30] sm:$0xff]
    %v940 = vld [vmem:[#allocation5 + $0x38] sm:$0xff]
    %949 = vrot.lane.b32.xlu0 %v933, 66
    %v950 = vpop.permute.xlu0 %949
    %951 = vrot.lane.b32.xlu0 %v934, 66
    %v952 = vpop.permute.xlu0 %951
    %953 = vrot.lane.b32.xlu0 %v935, 66
    %v954 = vpop.permute.xlu0 %953
    %955 = vrot.lane.b32.xlu0 %v936, 66
    %v956 = vpop.permute.xlu0 %955
    %957 = vrot.lane.b32.xlu0 %v937, 66
    %v958 = vpop.permute.xlu0 %957
    %959 = vrot.lane.b32.xlu0 %v938, 66
    %v960 = vpop.permute.xlu0 %959
    %961 = vrot.lane.b32.xlu0 %v939, 66
    %v962 = vpop.permute.xlu0 %961
    %963 = vrot.lane.b32.xlu0 %v940, 66
    %v964 = vpop.permute.xlu0 %963
    %vm965 = vcmask 539648
    %v966 = vsel %vm965, %v950, %v952
    %v967 = vsel %vm965, %v952, %v954
    %v968 = vsel %vm965, %v954, %v956
    %v969 = vsel %vm965, %v956, %v958
    %v970 = vsel %vm965, %v958, %v960
    %v971 = vsel %vm965, %v960, %v962
    %v972 = vsel %vm965, %v962, %v964
    %980 = vst [vmem:[#allocation2 + $0x3b8] sm:$0xff] %v966
    %981 = vst [vmem:[#allocation2 + $0x3c0] sm:$0xff] %v967
    %982 = vst [vmem:[#allocation2 + $0x3c8] sm:$0xff] %v968
    %983 = vst [vmem:[#allocation2 + $0x3d0] sm:$0xff] %v969
    %984 = vst [vmem:[#allocation2 + $0x3d8] sm:$0xff] %v970
    %985 = vst [vmem:[#allocation2 + $0x3e0] sm:$0xff] %v971
    %986 = vst [vmem:[#allocation2 + $0x3e8] sm:$0xff] %v972
    %v987 = vld [vmem:[#allocation5] sm:$0xff]
    %v988 = vld [vmem:[#allocation5 + $0x8] sm:$0xff]
    %v989 = vld [vmem:[#allocation5 + $0x10] sm:$0xff]
    %v990 = vld [vmem:[#allocation5 + $0x18] sm:$0xff]
    %v991 = vld [vmem:[#allocation5 + $0x20] sm:$0xff]
    %v992 = vld [vmem:[#allocation5 + $0x28] sm:$0xff]
    %v993 = vld [vmem:[#allocation5 + $0x30] sm:$0xff]
    %v994 = vld [vmem:[#allocation5 + $0x38] sm:$0xff]
    %1003 = vrot.lane.b32.xlu0 %v987, 65
    %v1004 = vpop.permute.xlu0 %1003
    %1005 = vrot.lane.b32.xlu0 %v988, 65
    %v1006 = vpop.permute.xlu0 %1005
    %1007 = vrot.lane.b32.xlu0 %v989, 65
    %v1008 = vpop.permute.xlu0 %1007
    %1009 = vrot.lane.b32.xlu0 %v990, 65
    %v1010 = vpop.permute.xlu0 %1009
    %1011 = vrot.lane.b32.xlu0 %v991, 65
    %v1012 = vpop.permute.xlu0 %1011
    %1013 = vrot.lane.b32.xlu0 %v992, 65
    %v1014 = vpop.permute.xlu0 %1013
    %1015 = vrot.lane.b32.xlu0 %v993, 65
    %v1016 = vpop.permute.xlu0 %1015
    %1017 = vrot.lane.b32.xlu0 %v994, 65
    %v1018 = vpop.permute.xlu0 %1017
    %vm1019 = vcmask 531456
    %v1020 = vsel %vm1019, %v1004, %v1006
    %v1021 = vsel %vm1019, %v1006, %v1008
    %v1022 = vsel %vm1019, %v1008, %v1010
    %v1023 = vsel %vm1019, %v1010, %v1012
    %v1024 = vsel %vm1019, %v1012, %v1014
    %v1025 = vsel %vm1019, %v1014, %v1016
    %v1026 = vsel %vm1019, %v1016, %v1018
    %1034 = vst [vmem:[#allocation2 + $0x3f0] sm:$0xff] %v1020
    %1035 = vst [vmem:[#allocation2 + $0x3f8] sm:$0xff] %v1021
    %1036 = vst [vmem:[#allocation2 + $0x400] sm:$0xff] %v1022
    %1037 = vst [vmem:[#allocation2 + $0x408] sm:$0xff] %v1023
    %1038 = vst [vmem:[#allocation2 + $0x410] sm:$0xff] %v1024
    %1039 = vst [vmem:[#allocation2 + $0x418] sm:$0xff] %v1025
    %1040 = vst [vmem:[#allocation2 + $0x420] sm:$0xff] %v1026
    %v1041 = vld [vmem:[#allocation5] sm:$0xff]
    %v1042 = vld [vmem:[#allocation5 + $0x8] sm:$0xff]
    %v1043 = vld [vmem:[#allocation5 + $0x10] sm:$0xff]
    %v1044 = vld [vmem:[#allocation5 + $0x18] sm:$0xff]
    %v1045 = vld [vmem:[#allocation5 + $0x20] sm:$0xff]
    %v1046 = vld [vmem:[#allocation5 + $0x28] sm:$0xff]
    %v1047 = vld [vmem:[#allocation5 + $0x30] sm:$0xff]
    %v1048 = vld [vmem:[#allocation5 + $0x38] sm:$0xff]
    %1057 = vrot.lane.b32.xlu0 %v1041, 64
    %v1058 = vpop.permute.xlu0 %1057
    %1059 = vrot.lane.b32.xlu0 %v1042, 64
    %v1060 = vpop.permute.xlu0 %1059
    %1061 = vrot.lane.b32.xlu0 %v1043, 64
    %v1062 = vpop.permute.xlu0 %1061
    %1063 = vrot.lane.b32.xlu0 %v1044, 64
    %v1064 = vpop.permute.xlu0 %1063
    %1065 = vrot.lane.b32.xlu0 %v1045, 64
    %v1066 = vpop.permute.xlu0 %1065
    %1067 = vrot.lane.b32.xlu0 %v1046, 64
    %v1068 = vpop.permute.xlu0 %1067
    %1069 = vrot.lane.b32.xlu0 %v1047, 64
    %v1070 = vpop.permute.xlu0 %1069
    %1071 = vrot.lane.b32.xlu0 %v1048, 64
    %v1072 = vpop.permute.xlu0 %1071
    %vm1073 = vcmask 523264
    %v1074 = vsel %vm1073, %v1058, %v1060
    %v1075 = vsel %vm1073, %v1060, %v1062
    %v1076 = vsel %vm1073, %v1062, %v1064
    %v1077 = vsel %vm1073, %v1064, %v1066
    %v1078 = vsel %vm1073, %v1066, %v1068
    %v1079 = vsel %vm1073, %v1068, %v1070
    %v1080 = vsel %vm1073, %v1070, %v1072
    %1088 = vst [vmem:[#allocation2 + $0x428] sm:$0xff] %v1074
    %1089 = vst [vmem:[#allocation2 + $0x430] sm:$0xff] %v1075
    %1090 = vst [vmem:[#allocation2 + $0x438] sm:$0xff] %v1076
    %1091 = vst [vmem:[#allocation2 + $0x440] sm:$0xff] %v1077
    %1092 = vst [vmem:[#allocation2 + $0x448] sm:$0xff] %v1078
    %1093 = vst [vmem:[#allocation2 + $0x450] sm:$0xff] %v1079
    %1094 = vst [vmem:[#allocation2 + $0x458] sm:$0xff] %v1080
    %v1095 = vld [vmem:[#allocation5] sm:$0xff]
    %v1096 = vld [vmem:[#allocation5 + $0x8] sm:$0xff]
    %v1097 = vld [vmem:[#allocation5 + $0x10] sm:$0xff]
    %v1098 = vld [vmem:[#allocation5 + $0x18] sm:$0xff]
    %v1099 = vld [vmem:[#allocation5 + $0x20] sm:$0xff]
    %v1100 = vld [vmem:[#allocation5 + $0x28] sm:$0xff]
    %v1101 = vld [vmem:[#allocation5 + $0x30] sm:$0xff]
    %v1102 = vld [vmem:[#allocation5 + $0x38] sm:$0xff]
    %1111 = vrot.lane.b32.xlu0 %v1095, 48
    %v1112 = vpop.permute.xlu0 %1111
    %1113 = vrot.lane.b32.xlu0 %v1096, 48
    %v1114 = vpop.permute.xlu0 %1113
    %1115 = vrot.lane.b32.xlu0 %v1097, 48
    %v1116 = vpop.permute.xlu0 %1115
    %1117 = vrot.lane.b32.xlu0 %v1098, 48
    %v1118 = vpop.permute.xlu0 %1117
    %1119 = vrot.lane.b32.xlu0 %v1099, 48
    %v1120 = vpop.permute.xlu0 %1119
    %1121 = vrot.lane.b32.xlu0 %v1100, 48
    %v1122 = vpop.permute.xlu0 %1121
    %1123 = vrot.lane.b32.xlu0 %v1101, 48
    %v1124 = vpop.permute.xlu0 %1123
    %1125 = vrot.lane.b32.xlu0 %v1102, 48
    %v1126 = vpop.permute.xlu0 %1125
    %vm1127 = vcmask 392192
    %v1128 = vsel %vm1127, %v1112, %v1114
    %v1129 = vsel %vm1127, %v1114, %v1116
    %v1130 = vsel %vm1127, %v1116, %v1118
    %v1131 = vsel %vm1127, %v1118, %v1120
    %v1132 = vsel %vm1127, %v1120, %v1122
    %v1133 = vsel %vm1127, %v1122, %v1124
    %v1134 = vsel %vm1127, %v1124, %v1126
    %1142 = vst [vmem:[#allocation2 + $0x460] sm:$0xff] %v1128
    %1143 = vst [vmem:[#allocation2 + $0x468] sm:$0xff] %v1129
    %1144 = vst [vmem:[#allocation2 + $0x470] sm:$0xff] %v1130
    %1145 = vst [vmem:[#allocation2 + $0x478] sm:$0xff] %v1131
    %1146 = vst [vmem:[#allocation2 + $0x480] sm:$0xff] %v1132
    %1147 = vst [vmem:[#allocation2 + $0x488] sm:$0xff] %v1133
    %1148 = vst [vmem:[#allocation2 + $0x490] sm:$0xff] %v1134
    %v1149 = vld [vmem:[#allocation5] sm:$0xff]
    %v1150 = vld [vmem:[#allocation5 + $0x8] sm:$0xff]
    %v1151 = vld [vmem:[#allocation5 + $0x10] sm:$0xff]
    %v1152 = vld [vmem:[#allocation5 + $0x18] sm:$0xff]
    %v1153 = vld [vmem:[#allocation5 + $0x20] sm:$0xff]
    %v1154 = vld [vmem:[#allocation5 + $0x28] sm:$0xff]
    %v1155 = vld [vmem:[#allocation5 + $0x30] sm:$0xff]
    %v1156 = vld [vmem:[#allocation5 + $0x38] sm:$0xff]
    %1165 = vrot.lane.b32.xlu0 %v1149, 47
    %v1166 = vpop.permute.xlu0 %1165
    %1167 = vrot.lane.b32.xlu0 %v1150, 47
    %v1168 = vpop.permute.xlu0 %1167
    %1169 = vrot.lane.b32.xlu0 %v1151, 47
    %v1170 = vpop.permute.xlu0 %1169
    %1171 = vrot.lane.b32.xlu0 %v1152, 47
    %v1172 = vpop.permute.xlu0 %1171
    %1173 = vrot.lane.b32.xlu0 %v1153, 47
    %v1174 = vpop.permute.xlu0 %1173
    %1175 = vrot.lane.b32.xlu0 %v1154, 47
    %v1176 = vpop.permute.xlu0 %1175
    %1177 = vrot.lane.b32.xlu0 %v1155, 47
    %v1178 = vpop.permute.xlu0 %1177
    %1179 = vrot.lane.b32.xlu0 %v1156, 47
    %v1180 = vpop.permute.xlu0 %1179
    %vm1181 = vcmask 384000
    %v1182 = vsel %vm1181, %v1166, %v1168
    %v1183 = vsel %vm1181, %v1168, %v1170
    %v1184 = vsel %vm1181, %v1170, %v1172
    %v1185 = vsel %vm1181, %v1172, %v1174
    %v1186 = vsel %vm1181, %v1174, %v1176
    %v1187 = vsel %vm1181, %v1176, %v1178
    %v1188 = vsel %vm1181, %v1178, %v1180
    %1196 = vst [vmem:[#allocation2 + $0x498] sm:$0xff] %v1182
    %1197 = vst [vmem:[#allocation2 + $0x4a0] sm:$0xff] %v1183
    %1198 = vst [vmem:[#allocation2 + $0x4a8] sm:$0xff] %v1184
    %1199 = vst [vmem:[#allocation2 + $0x4b0] sm:$0xff] %v1185
    %1200 = vst [vmem:[#allocation2 + $0x4b8] sm:$0xff] %v1186
    %1201 = vst [vmem:[#allocation2 + $0x4c0] sm:$0xff] %v1187
    %1202 = vst [vmem:[#allocation2 + $0x4c8] sm:$0xff] %v1188
    %v1203 = vld [vmem:[#allocation5] sm:$0xff]
    %v1204 = vld [vmem:[#allocation5 + $0x8] sm:$0xff]
    %v1205 = vld [vmem:[#allocation5 + $0x10] sm:$0xff]
    %v1206 = vld [vmem:[#allocation5 + $0x18] sm:$0xff]
    %v1207 = vld [vmem:[#allocation5 + $0x20] sm:$0xff]
    %v1208 = vld [vmem:[#allocation5 + $0x28] sm:$0xff]
    %v1209 = vld [vmem:[#allocation5 + $0x30] sm:$0xff]
    %v1210 = vld [vmem:[#allocation5 + $0x38] sm:$0xff]
    %1219 = vrot.lane.b32.xlu0 %v1203, 46
    %v1220 = vpop.permute.xlu0 %1219
    %1221 = vrot.lane.b32.xlu0 %v1204, 46
    %v1222 = vpop.permute.xlu0 %1221
    %1223 = vrot.lane.b32.xlu0 %v1205, 46
    %v1224 = vpop.permute.xlu0 %1223
    %1225 = vrot.lane.b32.xlu0 %v1206, 46
    %v1226 = vpop.permute.xlu0 %1225
    %1227 = vrot.lane.b32.xlu0 %v1207, 46
    %v1228 = vpop.permute.xlu0 %1227
    %1229 = vrot.lane.b32.xlu0 %v1208, 46
    %v1230 = vpop.permute.xlu0 %1229
    %1231 = vrot.lane.b32.xlu0 %v1209, 46
    %v1232 = vpop.permute.xlu0 %1231
    %1233 = vrot.lane.b32.xlu0 %v1210, 46
    %v1234 = vpop.permute.xlu0 %1233
    %vm1235 = vcmask 375808
    %v1236 = vsel %vm1235, %v1220, %v1222
    %v1237 = vsel %vm1235, %v1222, %v1224
    %v1238 = vsel %vm1235, %v1224, %v1226
    %v1239 = vsel %vm1235, %v1226, %v1228
    %v1240 = vsel %vm1235, %v1228, %v1230
    %v1241 = vsel %vm1235, %v1230, %v1232
    %v1242 = vsel %vm1235, %v1232, %v1234
    %1250 = vst [vmem:[#allocation2 + $0x4d0] sm:$0xff] %v1236
    %1251 = vst [vmem:[#allocation2 + $0x4d8] sm:$0xff] %v1237
    %1252 = vst [vmem:[#allocation2 + $0x4e0] sm:$0xff] %v1238
    %1253 = vst [vmem:[#allocation2 + $0x4e8] sm:$0xff] %v1239
    %1254 = vst [vmem:[#allocation2 + $0x4f0] sm:$0xff] %v1240
    %1255 = vst [vmem:[#allocation2 + $0x4f8] sm:$0xff] %v1241
    %1256 = vst [vmem:[#allocation2 + $0x500] sm:$0xff] %v1242
    %v1257 = vld [vmem:[#allocation5] sm:$0xff]
    %v1258 = vld [vmem:[#allocation5 + $0x8] sm:$0xff]
    %v1259 = vld [vmem:[#allocation5 + $0x10] sm:$0xff]
    %v1260 = vld [vmem:[#allocation5 + $0x18] sm:$0xff]
    %v1261 = vld [vmem:[#allocation5 + $0x20] sm:$0xff]
    %v1262 = vld [vmem:[#allocation5 + $0x28] sm:$0xff]
    %v1263 = vld [vmem:[#allocation5 + $0x30] sm:$0xff]
    %v1264 = vld [vmem:[#allocation5 + $0x38] sm:$0xff]
    %1273 = vrot.lane.b32.xlu0 %v1257, 45
    %v1274 = vpop.permute.xlu0 %1273
    %1275 = vrot.lane.b32.xlu0 %v1258, 45
    %v1276 = vpop.permute.xlu0 %1275
    %1277 = vrot.lane.b32.xlu0 %v1259, 45
    %v1278 = vpop.permute.xlu0 %1277
    %1279 = vrot.lane.b32.xlu0 %v1260, 45
    %v1280 = vpop.permute.xlu0 %1279
    %1281 = vrot.lane.b32.xlu0 %v1261, 45
    %v1282 = vpop.permute.xlu0 %1281
    %1283 = vrot.lane.b32.xlu0 %v1262, 45
    %v1284 = vpop.permute.xlu0 %1283
    %1285 = vrot.lane.b32.xlu0 %v1263, 45
    %v1286 = vpop.permute.xlu0 %1285
    %1287 = vrot.lane.b32.xlu0 %v1264, 45
    %v1288 = vpop.permute.xlu0 %1287
    %vm1289 = vcmask 367616
    %v1290 = vsel %vm1289, %v1274, %v1276
    %v1291 = vsel %vm1289, %v1276, %v1278
    %v1292 = vsel %vm1289, %v1278, %v1280
    %v1293 = vsel %vm1289, %v1280, %v1282
    %v1294 = vsel %vm1289, %v1282, %v1284
    %v1295 = vsel %vm1289, %v1284, %v1286
    %v1296 = vsel %vm1289, %v1286, %v1288
    %1304 = vst [vmem:[#allocation2 + $0x508] sm:$0xff] %v1290
    %1305 = vst [vmem:[#allocation2 + $0x510] sm:$0xff] %v1291
    %1306 = vst [vmem:[#allocation2 + $0x518] sm:$0xff] %v1292
    %1307 = vst [vmem:[#allocation2 + $0x520] sm:$0xff] %v1293
    %1308 = vst [vmem:[#allocation2 + $0x528] sm:$0xff] %v1294
    %1309 = vst [vmem:[#allocation2 + $0x530] sm:$0xff] %v1295
    %1310 = vst [vmem:[#allocation2 + $0x538] sm:$0xff] %v1296
    %v1311 = vld [vmem:[#allocation5] sm:$0xff]
    %v1312 = vld [vmem:[#allocation5 + $0x8] sm:$0xff]
    %v1313 = vld [vmem:[#allocation5 + $0x10] sm:$0xff]
    %v1314 = vld [vmem:[#allocation5 + $0x18] sm:$0xff]
    %v1315 = vld [vmem:[#allocation5 + $0x20] sm:$0xff]
    %v1316 = vld [vmem:[#allocation5 + $0x28] sm:$0xff]
    %v1317 = vld [vmem:[#allocation5 + $0x30] sm:$0xff]
    %v1318 = vld [vmem:[#allocation5 + $0x38] sm:$0xff]
    %1327 = vrot.lane.b32.xlu0 %v1311, 44
    %v1328 = vpop.permute.xlu0 %1327
    %1329 = vrot.lane.b32.xlu0 %v1312, 44
    %v1330 = vpop.permute.xlu0 %1329
    %1331 = vrot.lane.b32.xlu0 %v1313, 44
    %v1332 = vpop.permute.xlu0 %1331
    %1333 = vrot.lane.b32.xlu0 %v1314, 44
    %v1334 = vpop.permute.xlu0 %1333
    %1335 = vrot.lane.b32.xlu0 %v1315, 44
    %v1336 = vpop.permute.xlu0 %1335
    %1337 = vrot.lane.b32.xlu0 %v1316, 44
    %v1338 = vpop.permute.xlu0 %1337
    %1339 = vrot.lane.b32.xlu0 %v1317, 44
    %v1340 = vpop.permute.xlu0 %1339
    %1341 = vrot.lane.b32.xlu0 %v1318, 44
    %v1342 = vpop.permute.xlu0 %1341
    %vm1343 = vcmask 359424
    %v1344 = vsel %vm1343, %v1328, %v1330
    %v1345 = vsel %vm1343, %v1330, %v1332
    %v1346 = vsel %vm1343, %v1332, %v1334
    %v1347 = vsel %vm1343, %v1334, %v1336
    %v1348 = vsel %vm1343, %v1336, %v1338
    %v1349 = vsel %vm1343, %v1338, %v1340
    %v1350 = vsel %vm1343, %v1340, %v1342
    %1358 = vst [vmem:[#allocation2 + $0x540] sm:$0xff] %v1344
    %1359 = vst [vmem:[#allocation2 + $0x548] sm:$0xff] %v1345
    %1360 = vst [vmem:[#allocation2 + $0x550] sm:$0xff] %v1346
    %1361 = vst [vmem:[#allocation2 + $0x558] sm:$0xff] %v1347
    %1362 = vst [vmem:[#allocation2 + $0x560] sm:$0xff] %v1348
    %1363 = vst [vmem:[#allocation2 + $0x568] sm:$0xff] %v1349
    %1364 = vst [vmem:[#allocation2 + $0x570] sm:$0xff] %v1350
    %v1365 = vld [vmem:[%s2] sm:$0xff]
    %v1366 = vld [vmem:[%s2 + $0x8] sm:$0xff]
    %v1367 = vld [vmem:[%s2 + $0x10] sm:$0xff]
    %v1368 = vld [vmem:[%s2 + $0x18] sm:$0xff]
    %v1369 = vld [vmem:[%s2 + $0x20] sm:$0xff]
    %v1370 = vld [vmem:[%s2 + $0x28] sm:$0xff]
    %v1371 = vld [vmem:[#allocation2] sm:$0xff]
    %v1372 = vld [vmem:[#allocation2 + $0x8] sm:$0xff]
    %v1373 = vld [vmem:[#allocation2 + $0x10] sm:$0xff]
    %v1374 = vld [vmem:[#allocation2 + $0x18] sm:$0xff]
    %v1375 = vld [vmem:[#allocation2 + $0x20] sm:$0xff]
    %v1376 = vld [vmem:[#allocation2 + $0x28] sm:$0xff]
    %v1377 = vld [vmem:[#allocation2 + $0x30] sm:$0xff]
    %v1378 = vld [vmem:[#allocation2 + $0x38] sm:$0xff]
    %v1379 = vld [vmem:[#allocation2 + $0x40] sm:$0xff]
    %v1380 = vld [vmem:[#allocation2 + $0x48] sm:$0xff]
    %v1381 = vld [vmem:[#allocation2 + $0x50] sm:$0xff]
    %v1382 = vld [vmem:[#allocation2 + $0x58] sm:$0xff]
    %v1383 = vld [vmem:[#allocation2 + $0x60] sm:$0xff]
    %v1384 = vld [vmem:[#allocation2 + $0x68] sm:$0xff]
    %v1385 = vld [vmem:[#allocation2 + $0x70] sm:$0xff]
    %v1386 = vld [vmem:[#allocation2 + $0x78] sm:$0xff]
    %v1387 = vld [vmem:[#allocation2 + $0x80] sm:$0xff]
    %v1388 = vld [vmem:[#allocation2 + $0x88] sm:$0xff]
    %v1389 = vld [vmem:[#allocation2 + $0x90] sm:$0xff]
    %v1390 = vld [vmem:[#allocation2 + $0x98] sm:$0xff]
    %v1391 = vld [vmem:[#allocation2 + $0xa0] sm:$0xff]
    %v1392 = vld [vmem:[#allocation2 + $0xa8] sm:$0xff]
    %v1393 = vld [vmem:[#allocation2 + $0xb0] sm:$0xff]
    %v1394 = vld [vmem:[#allocation2 + $0xb8] sm:$0xff]
    %v1395 = vld [vmem:[#allocation2 + $0xc0] sm:$0xff]
    %v1396 = vld [vmem:[#allocation2 + $0xc8] sm:$0xff]
    %v1397 = vld [vmem:[#allocation2 + $0xd0] sm:$0xff]
    %v1398 = vld [vmem:[#allocation2 + $0xd8] sm:$0xff]
    %v1399 = vld [vmem:[#allocation2 + $0xe0] sm:$0xff]
    %v1400 = vld [vmem:[#allocation2 + $0xe8] sm:$0xff]
    %v1401 = vld [vmem:[#allocation2 + $0xf0] sm:$0xff]
    %v1402 = vld [vmem:[#allocation2 + $0xf8] sm:$0xff]
    %v1403 = vld [vmem:[#allocation2 + $0x100] sm:$0xff]
    %v1404 = vld [vmem:[#allocation2 + $0x108] sm:$0xff]
    %v1405 = vld [vmem:[#allocation2 + $0x110] sm:$0xff]
    %v1406 = vld [vmem:[#allocation2 + $0x118] sm:$0xff]
    %v1407 = vld [vmem:[#allocation2 + $0x120] sm:$0xff]
    %v1408 = vld [vmem:[#allocation2 + $0x128] sm:$0xff]
    %v1409 = vld [vmem:[#allocation2 + $0x130] sm:$0xff]
    %v1410 = vld [vmem:[#allocation2 + $0x138] sm:$0xff]
    %v1411 = vld [vmem:[#allocation2 + $0x140] sm:$0xff]
    %v1412 = vld [vmem:[#allocation2 + $0x148] sm:$0xff]
    %v1413 = vld [vmem:[#allocation2 + $0x150] sm:$0xff]
    %v1414 = vld [vmem:[#allocation2 + $0x158] sm:$0xff]
    %v1415 = vld [vmem:[#allocation2 + $0x160] sm:$0xff]
    %v1416 = vld [vmem:[#allocation2 + $0x168] sm:$0xff]
    %v1417 = vld [vmem:[#allocation2 + $0x170] sm:$0xff]
    %v1418 = vld [vmem:[#allocation2 + $0x178] sm:$0xff]
    %v1419 = vld [vmem:[#allocation2 + $0x180] sm:$0xff]
    %v1420 = vld [vmem:[#allocation2 + $0x188] sm:$0xff]
    %v1421 = vld [vmem:[#allocation2 + $0x190] sm:$0xff]
    %v1422 = vld [vmem:[#allocation2 + $0x198] sm:$0xff]
    %v1423 = vld [vmem:[#allocation2 + $0x1a0] sm:$0xff]
    %v1424 = vld [vmem:[#allocation2 + $0x1a8] sm:$0xff]
    %v1425 = vld [vmem:[#allocation2 + $0x1b0] sm:$0xff]
    %v1426 = vld [vmem:[#allocation2 + $0x1b8] sm:$0xff]
    %v1427 = vld [vmem:[#allocation2 + $0x1c0] sm:$0xff]
    %v1428 = vld [vmem:[#allocation2 + $0x1c8] sm:$0xff]
    %v1429 = vld [vmem:[#allocation2 + $0x1d0] sm:$0xff]
    %v1430 = vld [vmem:[#allocation2 + $0x1d8] sm:$0xff]
    %v1431 = vld [vmem:[#allocation2 + $0x1e0] sm:$0xff]
    %v1432 = vld [vmem:[#allocation2 + $0x1e8] sm:$0xff]
    %v1433 = vld [vmem:[#allocation2 + $0x1f0] sm:$0xff]
    %v1434 = vld [vmem:[#allocation2 + $0x1f8] sm:$0xff]
    %v1435 = vld [vmem:[#allocation2 + $0x200] sm:$0xff]
    %v1436 = vld [vmem:[#allocation2 + $0x208] sm:$0xff]
    %v1437 = vld [vmem:[#allocation2 + $0x210] sm:$0xff]
    %v1438 = vld [vmem:[#allocation2 + $0x218] sm:$0xff]
    %v1439 = vld [vmem:[#allocation2 + $0x220] sm:$0xff]
    %v1440 = vld [vmem:[#allocation2 + $0x228] sm:$0xff]
    %v1441 = vld [vmem:[#allocation2 + $0x230] sm:$0xff]
    %v1442 = vld [vmem:[#allocation2 + $0x238] sm:$0xff]
    %v1443 = vld [vmem:[#allocation2 + $0x240] sm:$0xff]
    %v1444 = vld [vmem:[#allocation2 + $0x248] sm:$0xff]
    %v1445 = vld [vmem:[#allocation2 + $0x250] sm:$0xff]
    %v1446 = vld [vmem:[#allocation2 + $0x258] sm:$0xff]
    %v1447 = vld [vmem:[#allocation2 + $0x260] sm:$0xff]
    %v1448 = vld [vmem:[#allocation2 + $0x268] sm:$0xff]
    %v1449 = vld [vmem:[#allocation2 + $0x270] sm:$0xff]
    %v1450 = vld [vmem:[#allocation2 + $0x278] sm:$0xff]
    %v1451 = vld [vmem:[#allocation2 + $0x280] sm:$0xff]
    %v1452 = vld [vmem:[#allocation2 + $0x288] sm:$0xff]
    %v1453 = vld [vmem:[#allocation2 + $0x290] sm:$0xff]
    %v1454 = vld [vmem:[#allocation2 + $0x298] sm:$0xff]
    %v1455 = vld [vmem:[#allocation2 + $0x2a0] sm:$0xff]
    %v1456 = vld [vmem:[#allocation2 + $0x2a8] sm:$0xff]
    %v1457 = vld [vmem:[#allocation2 + $0x2b0] sm:$0xff]
    %v1458 = vld [vmem:[#allocation2 + $0x2b8] sm:$0xff]
    %v1459 = vld [vmem:[#allocation2 + $0x2c0] sm:$0xff]
    %v1460 = vld [vmem:[#allocation2 + $0x2c8] sm:$0xff]
    %v1461 = vld [vmem:[#allocation2 + $0x2d0] sm:$0xff]
    %v1462 = vld [vmem:[#allocation2 + $0x2d8] sm:$0xff]
    %v1463 = vld [vmem:[#allocation2 + $0x2e0] sm:$0xff]
    %v1464 = vld [vmem:[#allocation2 + $0x2e8] sm:$0xff]
    %v1465 = vld [vmem:[#allocation2 + $0x2f0] sm:$0xff]
    %v1466 = vld [vmem:[#allocation2 + $0x2f8] sm:$0xff]
    %v1467 = vld [vmem:[#allocation2 + $0x300] sm:$0xff]
    %v1468 = vld [vmem:[#allocation2 + $0x308] sm:$0xff]
    %v1469 = vld [vmem:[#allocation2 + $0x310] sm:$0xff]
    %v1470 = vld [vmem:[#allocation2 + $0x318] sm:$0xff]
    %v1471 = vld [vmem:[#allocation2 + $0x320] sm:$0xff]
    %v1472 = vld [vmem:[#allocation2 + $0x328] sm:$0xff]
    %v1473 = vld [vmem:[#allocation2 + $0x330] sm:$0xff]
    %v1474 = vld [vmem:[#allocation2 + $0x338] sm:$0xff]
    %v1475 = vld [vmem:[#allocation2 + $0x340] sm:$0xff]
    %v1476 = vld [vmem:[#allocation2 + $0x348] sm:$0xff]
    %v1477 = vld [vmem:[#allocation2 + $0x350] sm:$0xff]
    %v1478 = vld [vmem:[#allocation2 + $0x358] sm:$0xff]
    %v1479 = vld [vmem:[#allocation2 + $0x360] sm:$0xff]
    %v1480 = vld [vmem:[#allocation2 + $0x368] sm:$0xff]
    %v1481 = vld [vmem:[#allocation2 + $0x370] sm:$0xff]
    %v1482 = vld [vmem:[#allocation2 + $0x378] sm:$0xff]
    %v1483 = vld [vmem:[#allocation2 + $0x380] sm:$0xff]
    %v1484 = vld [vmem:[#allocation2 + $0x388] sm:$0xff]
    %v1485 = vld [vmem:[#allocation2 + $0x390] sm:$0xff]
    %v1486 = vld [vmem:[#allocation2 + $0x398] sm:$0xff]
    %v1487 = vld [vmem:[#allocation2 + $0x3a0] sm:$0xff]
    %v1488 = vld [vmem:[#allocation2 + $0x3a8] sm:$0xff]
    %v1489 = vld [vmem:[#allocation2 + $0x3b0] sm:$0xff]
    %v1490 = vld [vmem:[#allocation2 + $0x3b8] sm:$0xff]
    %v1491 = vld [vmem:[#allocation2 + $0x3c0] sm:$0xff]
    %v1492 = vld [vmem:[#allocation2 + $0x3c8] sm:$0xff]
    %v1493 = vld [vmem:[#allocation2 + $0x3d0] sm:$0xff]
    %v1494 = vld [vmem:[#allocation2 + $0x3d8] sm:$0xff]
    %v1495 = vld [vmem:[#allocation2 + $0x3e0] sm:$0xff]
    %v1496 = vld [vmem:[#allocation2 + $0x3e8] sm:$0xff]
    %v1497 = vld [vmem:[#allocation2 + $0x3f0] sm:$0xff]
    %v1498 = vld [vmem:[#allocation2 + $0x3f8] sm:$0xff]
    %v1499 = vld [vmem:[#allocation2 + $0x400] sm:$0xff]
    %v1500 = vld [vmem:[#allocation2 + $0x408] sm:$0xff]
    %v1501 = vld [vmem:[#allocation2 + $0x410] sm:$0xff]
    %v1502 = vld [vmem:[#allocation2 + $0x418] sm:$0xff]
    %v1503 = vld [vmem:[#allocation2 + $0x420] sm:$0xff]
    %v1504 = vld [vmem:[#allocation2 + $0x428] sm:$0xff]
    %v1505 = vld [vmem:[#allocation2 + $0x430] sm:$0xff]
    %v1506 = vld [vmem:[#allocation2 + $0x438] sm:$0xff]
    %v1507 = vld [vmem:[#allocation2 + $0x440] sm:$0xff]
    %v1508 = vld [vmem:[#allocation2 + $0x448] sm:$0xff]
    %v1509 = vld [vmem:[#allocation2 + $0x450] sm:$0xff]
    %v1510 = vld [vmem:[#allocation2 + $0x458] sm:$0xff]
    %v1511 = vld [vmem:[#allocation2 + $0x460] sm:$0xff]
    %v1512 = vld [vmem:[#allocation2 + $0x468] sm:$0xff]
    %v1513 = vld [vmem:[#allocation2 + $0x470] sm:$0xff]
    %v1514 = vld [vmem:[#allocation2 + $0x478] sm:$0xff]
    %v1515 = vld [vmem:[#allocation2 + $0x480] sm:$0xff]
    %v1516 = vld [vmem:[#allocation2 + $0x488] sm:$0xff]
    %v1517 = vld [vmem:[#allocation2 + $0x490] sm:$0xff]
    %v1518 = vld [vmem:[#allocation2 + $0x498] sm:$0xff]
    %v1519 = vld [vmem:[#allocation2 + $0x4a0] sm:$0xff]
    %v1520 = vld [vmem:[#allocation2 + $0x4a8] sm:$0xff]
    %v1521 = vld [vmem:[#allocation2 + $0x4b0] sm:$0xff]
    %v1522 = vld [vmem:[#allocation2 + $0x4b8] sm:$0xff]
    %v1523 = vld [vmem:[#allocation2 + $0x4c0] sm:$0xff]
    %v1524 = vld [vmem:[#allocation2 + $0x4c8] sm:$0xff]
    %v1525 = vld [vmem:[#allocation2 + $0x4d0] sm:$0xff]
    %v1526 = vld [vmem:[#allocation2 + $0x4d8] sm:$0xff]
    %v1527 = vld [vmem:[#allocation2 + $0x4e0] sm:$0xff]
    %v1528 = vld [vmem:[#allocation2 + $0x4e8] sm:$0xff]
    %v1529 = vld [vmem:[#allocation2 + $0x4f0] sm:$0xff]
    %v1530 = vld [vmem:[#allocation2 + $0x4f8] sm:$0xff]
    %v1531 = vld [vmem:[#allocation2 + $0x500] sm:$0xff]
    %v1532 = vld [vmem:[#allocation2 + $0x508] sm:$0xff]
    %v1533 = vld [vmem:[#allocation2 + $0x510] sm:$0xff]
    %v1534 = vld [vmem:[#allocation2 + $0x518] sm:$0xff]
    %v1535 = vld [vmem:[#allocation2 + $0x520] sm:$0xff]
    %v1536 = vld [vmem:[#allocation2 + $0x528] sm:$0xff]
    %v1537 = vld [vmem:[#allocation2 + $0x530] sm:$0xff]
    %v1538 = vld [vmem:[#allocation2 + $0x538] sm:$0xff]
    %v1539 = vld [vmem:[#allocation2 + $0x540] sm:$0xff]
    %v1540 = vld [vmem:[#allocation2 + $0x548] sm:$0xff]
    %v1541 = vld [vmem:[#allocation2 + $0x550] sm:$0xff]
    %v1542 = vld [vmem:[#allocation2 + $0x558] sm:$0xff]
    %v1543 = vld [vmem:[#allocation2 + $0x560] sm:$0xff]
    %v1544 = vld [vmem:[#allocation2 + $0x568] sm:$0xff]
    %v1545 = vld [vmem:[#allocation2 + $0x570] sm:$0xff]
    %v1546 = vld [vmem:[%s3] sm:$0xff]
    %v1547 = vld [vmem:[%s3 + $0x8] sm:$0xff]
    %v1548 = vld [vmem:[%s3 + $0x10] sm:$0xff]
    %1550 = vset.pattern.permute.xlu0 0
    %1551 = vperm.xlu0 %1550, %v1546
    %v1552 = vpop.permute.xlu0 %1551
    %1555 = vset.pattern.permute.xlu0 0
    %1556 = vperm.xlu0 %1555, %v1547
    %v1557 = vpop.permute.xlu0 %1556
    %1560 = vset.pattern.permute.xlu0 0
    %1561 = vperm.xlu0 %1560, %v1548
    %v1562 = vpop.permute.xlu0 %1561
    %vm1564 = vcmask 588800
    %v1566 = vsel %vm1564, %v1366, 0
    %v1569 = vsel %vm1564, %v1368, 0
    %v1572 = vsel %vm1564, %v1370, 0
    %1574 = vmatprep.subr.mxu0 %v1477
    %1575 = vmatpush1.msra.mxu0 %v1476
    %1576 = vmatprep.subr.mxu0 %v1470
    %1577 = vmatpush1.msra.mxu0 %v1469
    %1578 = vmatprep.subr.mxu0 %v1463
    %1579 = vmatpush1.msra.mxu0 %v1462
    %1580 = vmatprep.subr.mxu0 %v1456
    %1581 = vmatpush1.msra.mxu0 %v1455
    %1582 = vmatprep.subr.mxu0 %v1449
    %1583 = vmatpush1.msra.mxu0 %v1448
    %1584 = vmatprep.subr.mxu0 %v1442
    %1585 = vmatpush1.msra.mxu0 %v1441
    %1586 = vmatprep.subr.mxu0 %v1435
    %1587 = vmatpush1.msra.mxu0 %v1434
    %1588 = vmatprep.subr.mxu0 %v1428
    %1589 = vmatpush1.msra.mxu0 %v1427
    %1590 = vmatprep.subr.mxu0 %v1421
    %1591 = vmatpush1.msra.mxu0 %v1420
    %1592 = vmatprep.subr.mxu0 %v1414
    %1593 = vmatpush1.msra.mxu0 %v1413
    %1594 = vmatprep.subr.mxu0 %v1407
    %1595 = vmatpush1.msra.mxu0 %v1406
    %1596 = vmatprep.subr.mxu0 %v1400
    %1597 = vmatpush1.msra.mxu0 %v1399
    %1598 = vmatprep.subr.mxu0 %v1393
    %1599 = vmatpush1.msra.mxu0 %v1392
    %1600 = vmatprep.subr.mxu0 %v1386
    %1601 = vmatpush1.msra.mxu0 %v1385
    %1602 = vmatprep.subr.mxu0 %v1379
    %1603 = vmatpush1.msra.mxu0 %v1378
    %1604 = vmatprep.subr.mxu0 %v1372
    %1605 = vmatpush1.msra.mxu0 %v1371
    %1606 = vmatprep.subr.mxu0 0.0
    %1607 = vmatpush2.msra.mxu0 0.0
    %1608 = vmatprep.subr.mxu0 0.0
    %1609 = vmatpush2.msra.mxu0 0.0
    %1610 = vmatprep.subr.mxu0 0.0
    %1611 = vmatpush2.msra.mxu0 0.0
    %1612 = vmatprep.subr.mxu0 0.0
    %1613 = vmatpush2.msra.mxu0 0.0
    %1614 = vmatprep.subr.mxu0 0.0
    %1615 = vmatpush2.msra.mxu0 0.0
    %1616 = vmatprep.subr.mxu0 0.0
    %1617 = vmatpush2.msra.mxu0 0.0
    %1618 = vmatprep.subr.mxu0 0.0
    %1619 = vmatpush2.msra.mxu0 0.0
    %1620 = vmatprep.subr.mxu0 %v1540
    %1621 = vmatpush2.msra.mxu0 %v1539
    %1622 = vmatprep.subr.mxu0 %v1533
    %1623 = vmatpush2.msra.mxu0 %v1532
    %1624 = vmatprep.subr.mxu0 %v1526
    %1625 = vmatpush2.msra.mxu0 %v1525
    %1626 = vmatprep.subr.mxu0 %v1519
    %1627 = vmatpush2.msra.mxu0 %v1518
    %1628 = vmatprep.subr.mxu0 %v1512
    %1629 = vmatpush2.msra.mxu0 %v1511
    %1630 = vmatprep.subr.mxu0 %v1505
    %1631 = vmatpush2.msra.mxu0 %v1504
    %1632 = vmatprep.subr.mxu0 %v1498
    %1633 = vmatpush2.msra.mxu0 %v1497
    %1634 = vmatprep.subr.mxu0 %v1491
    %1635 = vmatpush2.msra.mxu0 %v1490
    %1636 = vmatprep.subr.mxu0 %v1484
    %1637 = vmatpush2.msra.mxu0 %v1483
    %1638 = vmatprep.mubr.f32.mxu0 %v1566
    %1639 = vmatmul.mubr.f32.gmra.mxu0 %v1365
    %v1640 = vpop.f32.mrf.mxu0
    %v1641 = vadd.f32 %v1552, %v1640
    %v1642 = vpop.f32.mrf.mxu0
    %v1643 = vadd.f32 %v1552, %v1642
    %1644 = vmatprep.mubr.f32.mxu0 %v1569
    %1645 = vmatmul.mubr.f32.gmra.mxu0 %v1367
    %v1646 = vpop.f32.mrf.mxu0
    %v1647 = vadd.f32 %v1557, %v1646
    %v1648 = vpop.f32.mrf.mxu0
    %v1649 = vadd.f32 %v1557, %v1648
    %1650 = vmatprep.mubr.f32.mxu0 %v1572
    %1651 = vmatmul.mubr.f32.gmra.mxu0 %v1369
    %v1652 = vpop.f32.mrf.mxu0
    %v1653 = vadd.f32 %v1562, %v1652
    %v1654 = vpop.f32.mrf.mxu0
    %v1655 = vadd.f32 %v1562, %v1654
    %1656 = vdwg.mxu0
    %1657 = vmatprep.subr.mxu0 %v1479
    %1658 = vmatpush1.msra.mxu0 %v1478
    %1659 = vmatprep.subr.mxu0 %v1472
    %1660 = vmatpush1.msra.mxu0 %v1471
    %1661 = vmatprep.subr.mxu0 %v1465
    %1662 = vmatpush1.msra.mxu0 %v1464
    %1663 = vmatprep.subr.mxu0 %v1458
    %1664 = vmatpush1.msra.mxu0 %v1457
    %1665 = vmatprep.subr.mxu0 %v1451
    %1666 = vmatpush1.msra.mxu0 %v1450
    %1667 = vmatprep.subr.mxu0 %v1444
    %1668 = vmatpush1.msra.mxu0 %v1443
    %1669 = vmatprep.subr.mxu0 %v1437
    %1670 = vmatpush1.msra.mxu0 %v1436
    %1671 = vmatprep.subr.mxu0 %v1430
    %1672 = vmatpush1.msra.mxu0 %v1429
    %1673 = vmatprep.subr.mxu0 %v1423
    %1674 = vmatpush1.msra.mxu0 %v1422
    %1675 = vmatprep.subr.mxu0 %v1416
    %1676 = vmatpush1.msra.mxu0 %v1415
    %1677 = vmatprep.subr.mxu0 %v1409
    %1678 = vmatpush1.msra.mxu0 %v1408
    %1679 = vmatprep.subr.mxu0 %v1402
    %1680 = vmatpush1.msra.mxu0 %v1401
    %1681 = vmatprep.subr.mxu0 %v1395
    %1682 = vmatpush1.msra.mxu0 %v1394
    %1683 = vmatprep.subr.mxu0 %v1388
    %1684 = vmatpush1.msra.mxu0 %v1387
    %1685 = vmatprep.subr.mxu0 %v1381
    %1686 = vmatpush1.msra.mxu0 %v1380
    %1687 = vmatprep.subr.mxu0 %v1374
    %1688 = vmatpush1.msra.mxu0 %v1373
    %1689 = vmatprep.subr.mxu0 0.0
    %1690 = vmatpush2.msra.mxu0 0.0
    %1691 = vmatprep.subr.mxu0 0.0
    %1692 = vmatpush2.msra.mxu0 0.0
    %1693 = vmatprep.subr.mxu0 0.0
    %1694 = vmatpush2.msra.mxu0 0.0
    %1695 = vmatprep.subr.mxu0 0.0
    %1696 = vmatpush2.msra.mxu0 0.0
    %1697 = vmatprep.subr.mxu0 0.0
    %1698 = vmatpush2.msra.mxu0 0.0
    %1699 = vmatprep.subr.mxu0 0.0
    %1700 = vmatpush2.msra.mxu0 0.0
    %1701 = vmatprep.subr.mxu0 0.0
    %1702 = vmatpush2.msra.mxu0 0.0
    %1703 = vmatprep.subr.mxu0 %v1542
    %1704 = vmatpush2.msra.mxu0 %v1541
    %1705 = vmatprep.subr.mxu0 %v1535
    %1706 = vmatpush2.msra.mxu0 %v1534
    %1707 = vmatprep.subr.mxu0 %v1528
    %1708 = vmatpush2.msra.mxu0 %v1527
    %1709 = vmatprep.subr.mxu0 %v1521
    %1710 = vmatpush2.msra.mxu0 %v1520
    %1711 = vmatprep.subr.mxu0 %v1514
    %1712 = vmatpush2.msra.mxu0 %v1513
    %1713 = vmatprep.subr.mxu0 %v1507
    %1714 = vmatpush2.msra.mxu0 %v1506
    %1715 = vmatprep.subr.mxu0 %v1500
    %1716 = vmatpush2.msra.mxu0 %v1499
    %1717 = vmatprep.subr.mxu0 %v1493
    %1718 = vmatpush2.msra.mxu0 %v1492
    %1719 = vmatprep.subr.mxu0 %v1486
    %1720 = vmatpush2.msra.mxu0 %v1485
    %1721 = vmatprep.mubr.f32.mxu0 %v1566
    %1722 = vmatmul.mubr.f32.gmra.mxu0 %v1365
    %v1723 = vpop.f32.mrf.mxu0
    %v1724 = vadd.f32 %v1552, %v1723
    %v1725 = vpop.f32.mrf.mxu0
    %v1726 = vadd.f32 %v1552, %v1725
    %1727 = vmatprep.mubr.f32.mxu0 %v1569
    %1728 = vmatmul.mubr.f32.gmra.mxu0 %v1367
    %v1729 = vpop.f32.mrf.mxu0
    %v1730 = vadd.f32 %v1557, %v1729
    %v1731 = vpop.f32.mrf.mxu0
    %v1732 = vadd.f32 %v1557, %v1731
    %1733 = vmatprep.mubr.f32.mxu0 %v1572
    %1734 = vmatmul.mubr.f32.gmra.mxu0 %v1369
    %v1735 = vpop.f32.mrf.mxu0
    %v1736 = vadd.f32 %v1562, %v1735
    %v1737 = vpop.f32.mrf.mxu0
    %v1738 = vadd.f32 %v1562, %v1737
    %1739 = vdwg.mxu0
    %1740 = vmatprep.subr.mxu0 %v1481
    %1741 = vmatpush1.msra.mxu0 %v1480
    %1742 = vmatprep.subr.mxu0 %v1474
    %1743 = vmatpush1.msra.mxu0 %v1473
    %1744 = vmatprep.subr.mxu0 %v1467
    %1745 = vmatpush1.msra.mxu0 %v1466
    %1746 = vmatprep.subr.mxu0 %v1460
    %1747 = vmatpush1.msra.mxu0 %v1459
    %1748 = vmatprep.subr.mxu0 %v1453
    %1749 = vmatpush1.msra.mxu0 %v1452
    %1750 = vmatprep.subr.mxu0 %v1446
    %1751 = vmatpush1.msra.mxu0 %v1445
    %1752 = vmatprep.subr.mxu0 %v1439
    %1753 = vmatpush1.msra.mxu0 %v1438
    %1754 = vmatprep.subr.mxu0 %v1432
    %1755 = vmatpush1.msra.mxu0 %v1431
    %1756 = vmatprep.subr.mxu0 %v1425
    %1757 = vmatpush1.msra.mxu0 %v1424
    %1758 = vmatprep.subr.mxu0 %v1418
    %1759 = vmatpush1.msra.mxu0 %v1417
    %1760 = vmatprep.subr.mxu0 %v1411
    %1761 = vmatpush1.msra.mxu0 %v1410
    %1762 = vmatprep.subr.mxu0 %v1404
    %1763 = vmatpush1.msra.mxu0 %v1403
    %1764 = vmatprep.subr.mxu0 %v1397
    %1765 = vmatpush1.msra.mxu0 %v1396
    %1766 = vmatprep.subr.mxu0 %v1390
    %1767 = vmatpush1.msra.mxu0 %v1389
    %1768 = vmatprep.subr.mxu0 %v1383
    %1769 = vmatpush1.msra.mxu0 %v1382
    %1770 = vmatprep.subr.mxu0 %v1376
    %1771 = vmatpush1.msra.mxu0 %v1375
    %1772 = vmatprep.subr.mxu0 0.0
    %1773 = vmatpush2.msra.mxu0 0.0
    %1774 = vmatprep.subr.mxu0 0.0
    %1775 = vmatpush2.msra.mxu0 0.0
    %1776 = vmatprep.subr.mxu0 0.0
    %1777 = vmatpush2.msra.mxu0 0.0
    %1778 = vmatprep.subr.mxu0 0.0
    %1779 = vmatpush2.msra.mxu0 0.0
    %1780 = vmatprep.subr.mxu0 0.0
    %1781 = vmatpush2.msra.mxu0 0.0
    %1782 = vmatprep.subr.mxu0 0.0
    %1783 = vmatpush2.msra.mxu0 0.0
    %1784 = vmatprep.subr.mxu0 0.0
    %1785 = vmatpush2.msra.mxu0 0.0
    %1786 = vmatprep.subr.mxu0 %v1544
    %1787 = vmatpush2.msra.mxu0 %v1543
    %1788 = vmatprep.subr.mxu0 %v1537
    %1789 = vmatpush2.msra.mxu0 %v1536
    %1790 = vmatprep.subr.mxu0 %v1530
    %1791 = vmatpush2.msra.mxu0 %v1529
    %1792 = vmatprep.subr.mxu0 %v1523
    %1793 = vmatpush2.msra.mxu0 %v1522
    %1794 = vmatprep.subr.mxu0 %v1516
    %1795 = vmatpush2.msra.mxu0 %v1515
    %1796 = vmatprep.subr.mxu0 %v1509
    %1797 = vmatpush2.msra.mxu0 %v1508
    %1798 = vmatprep.subr.mxu0 %v1502
    %1799 = vmatpush2.msra.mxu0 %v1501
    %1800 = vmatprep.subr.mxu0 %v1495
    %1801 = vmatpush2.msra.mxu0 %v1494
    %1802 = vmatprep.subr.mxu0 %v1488
    %1803 = vmatpush2.msra.mxu0 %v1487
    %1804 = vmatprep.mubr.f32.mxu0 %v1566
    %1805 = vmatmul.mubr.f32.gmra.mxu0 %v1365
    %v1806 = vpop.f32.mrf.mxu0
    %v1807 = vadd.f32 %v1552, %v1806
    %v1808 = vpop.f32.mrf.mxu0
    %v1809 = vadd.f32 %v1552, %v1808
    %1810 = vmatprep.mubr.f32.mxu0 %v1569
    %1811 = vmatmul.mubr.f32.gmra.mxu0 %v1367
    %v1812 = vpop.f32.mrf.mxu0
    %v1813 = vadd.f32 %v1557, %v1812
    %v1814 = vpop.f32.mrf.mxu0
    %v1815 = vadd.f32 %v1557, %v1814
    %1816 = vmatprep.mubr.f32.mxu0 %v1572
    %1817 = vmatmul.mubr.f32.gmra.mxu0 %v1369
    %v1818 = vpop.f32.mrf.mxu0
    %v1819 = vadd.f32 %v1562, %v1818
    %v1820 = vpop.f32.mrf.mxu0
    %v1821 = vadd.f32 %v1562, %v1820
    %1822 = vdwg.mxu0
    %1823 = vmatprep.subr.mxu0 0.0
    %1824 = vmatpush1.msra.mxu0 %v1482
    %1825 = vmatprep.subr.mxu0 0.0
    %1826 = vmatpush1.msra.mxu0 %v1475
    %1827 = vmatprep.subr.mxu0 0.0
    %1828 = vmatpush1.msra.mxu0 %v1468
    %1829 = vmatprep.subr.mxu0 0.0
    %1830 = vmatpush1.msra.mxu0 %v1461
    %1831 = vmatprep.subr.mxu0 0.0
    %1832 = vmatpush1.msra.mxu0 %v1454
    %1833 = vmatprep.subr.mxu0 0.0
    %1834 = vmatpush1.msra.mxu0 %v1447
    %1835 = vmatprep.subr.mxu0 0.0
    %1836 = vmatpush1.msra.mxu0 %v1440
    %1837 = vmatprep.subr.mxu0 0.0
    %1838 = vmatpush1.msra.mxu0 %v1433
    %1839 = vmatprep.subr.mxu0 0.0
    %1840 = vmatpush1.msra.mxu0 %v1426
    %1841 = vmatprep.subr.mxu0 0.0
    %1842 = vmatpush1.msra.mxu0 %v1419
    %1843 = vmatprep.subr.mxu0 0.0
    %1844 = vmatpush1.msra.mxu0 %v1412
    %1845 = vmatprep.subr.mxu0 0.0
    %1846 = vmatpush1.msra.mxu0 %v1405
    %1847 = vmatprep.subr.mxu0 0.0
    %1848 = vmatpush1.msra.mxu0 %v1398
    %1849 = vmatprep.subr.mxu0 0.0
    %1850 = vmatpush1.msra.mxu0 %v1391
    %1851 = vmatprep.subr.mxu0 0.0
    %1852 = vmatpush1.msra.mxu0 %v1384
    %1853 = vmatprep.subr.mxu0 0.0
    %1854 = vmatpush1.msra.mxu0 %v1377
    %1855 = vmatprep.subr.mxu0 0.0
    %1856 = vmatpush2.msra.mxu0 0.0
    %1857 = vmatprep.subr.mxu0 0.0
    %1858 = vmatpush2.msra.mxu0 0.0
    %1859 = vmatprep.subr.mxu0 0.0
    %1860 = vmatpush2.msra.mxu0 0.0
    %1861 = vmatprep.subr.mxu0 0.0
    %1862 = vmatpush2.msra.mxu0 0.0
    %1863 = vmatprep.subr.mxu0 0.0
    %1864 = vmatpush2.msra.mxu0 0.0
    %1865 = vmatprep.subr.mxu0 0.0
    %1866 = vmatpush2.msra.mxu0 0.0
    %1867 = vmatprep.subr.mxu0 0.0
    %1868 = vmatpush2.msra.mxu0 0.0
    %1869 = vmatprep.subr.mxu0 0.0
    %1870 = vmatpush2.msra.mxu0 %v1545
    %1871 = vmatprep.subr.mxu0 0.0
    %1872 = vmatpush2.msra.mxu0 %v1538
    %1873 = vmatprep.subr.mxu0 0.0
    %1874 = vmatpush2.msra.mxu0 %v1531
    %1875 = vmatprep.subr.mxu0 0.0
    %1876 = vmatpush2.msra.mxu0 %v1524
    %1877 = vmatprep.subr.mxu0 0.0
    %1878 = vmatpush2.msra.mxu0 %v1517
    %1879 = vmatprep.subr.mxu0 0.0
    %1880 = vmatpush2.msra.mxu0 %v1510
    %1881 = vmatprep.subr.mxu0 0.0
    %1882 = vmatpush2.msra.mxu0 %v1503
    %1883 = vmatprep.subr.mxu0 0.0
    %1884 = vmatpush2.msra.mxu0 %v1496
    %1885 = vmatprep.subr.mxu0 0.0
    %1886 = vmatpush2.msra.mxu0 %v1489
    %1887 = vmatprep.mubr.f32.mxu0 %v1566
    %1888 = vmatmul.mubr.f32.gmra.mxu0 %v1365
    %v1889 = vpop.f32.mrf.mxu0
    %v1890 = vadd.f32 %v1552, %v1889
    %v1891 = vpop.f32.mrf.mxu0
    %1892 = vmatprep.mubr.f32.mxu0 %v1569
    %1893 = vmatmul.mubr.f32.gmra.mxu0 %v1367
    %v1894 = vpop.f32.mrf.mxu0
    %v1895 = vadd.f32 %v1557, %v1894
    %v1896 = vpop.f32.mrf.mxu0
    %1897 = vmatprep.mubr.f32.mxu0 %v1572
    %1898 = vmatmul.mubr.f32.gmra.mxu0 %v1369
    %v1899 = vpop.f32.mrf.mxu0
    %v1900 = vadd.f32 %v1562, %v1899
    %v1901 = vpop.f32.mrf.mxu0
    %1902 = vdwg.mxu0
    %vm1903 = vcmp.gt.f32.partialorder %v1641, 0.0
    %vm1904 = vcmp.gt.f32.partialorder %v1643, 0.0
    %vm1905 = vcmp.gt.f32.partialorder %v1724, 0.0
    %vm1906 = vcmp.gt.f32.partialorder %v1726, 0.0
    %vm1907 = vcmp.gt.f32.partialorder %v1807, 0.0
    %vm1908 = vcmp.gt.f32.partialorder %v1809, 0.0
    %vm1909 = vcmp.gt.f32.partialorder %v1890, 0.0
    %vm1910 = vcmp.gt.f32.partialorder %v1647, 0.0
    %vm1911 = vcmp.gt.f32.partialorder %v1649, 0.0
    %vm1912 = vcmp.gt.f32.partialorder %v1730, 0.0
    %vm1913 = vcmp.gt.f32.partialorder %v1732, 0.0
    %vm1914 = vcmp.gt.f32.partialorder %v1813, 0.0
    %vm1915 = vcmp.gt.f32.partialorder %v1815, 0.0
    %vm1916 = vcmp.gt.f32.partialorder %v1895, 0.0
    %vm1917 = vcmp.gt.f32.partialorder %v1653, 0.0
    %vm1918 = vcmp.gt.f32.partialorder %v1655, 0.0
    %vm1919 = vcmp.gt.f32.partialorder %v1736, 0.0
    %vm1920 = vcmp.gt.f32.partialorder %v1738, 0.0
    %vm1921 = vcmp.gt.f32.partialorder %v1819, 0.0
    %vm1922 = vcmp.gt.f32.partialorder %v1821, 0.0
    %vm1923 = vcmp.gt.f32.partialorder %v1900, 0.0
    %v1924 = vmul.f32 %v1641, 0.25
    %v1925 = vmul.f32 %v1643, 0.25
    %v1926 = vmul.f32 %v1724, 0.25
    %v1927 = vmul.f32 %v1726, 0.25
    %v1928 = vmul.f32 %v1807, 0.25
    %v1929 = vmul.f32 %v1809, 0.25
    %v1930 = vmul.f32 %v1890, 0.25
    %v1931 = vmul.f32 %v1647, 0.25
    %v1932 = vmul.f32 %v1649, 0.25
    %v1933 = vmul.f32 %v1730, 0.25
    %v1934 = vmul.f32 %v1732, 0.25
    %v1935 = vmul.f32 %v1813, 0.25
    %v1936 = vmul.f32 %v1815, 0.25
    %v1937 = vmul.f32 %v1895, 0.25
    %v1938 = vmul.f32 %v1653, 0.25
    %v1939 = vmul.f32 %v1655, 0.25
    %v1940 = vmul.f32 %v1736, 0.25
    %v1941 = vmul.f32 %v1738, 0.25
    %v1942 = vmul.f32 %v1819, 0.25
    %v1943 = vmul.f32 %v1821, 0.25
    %v1944 = vmul.f32 %v1900, 0.25
    %v1945 = vsel %vm1903, %v1641, %v1924
    %v1946 = vsel %vm1904, %v1643, %v1925
    %v1947 = vsel %vm1905, %v1724, %v1926
    %v1948 = vsel %vm1906, %v1726, %v1927
    %v1949 = vsel %vm1907, %v1807, %v1928
    %v1950 = vsel %vm1908, %v1809, %v1929
    %v1951 = vsel %vm1909, %v1890, %v1930
    %v1952 = vsel %vm1910, %v1647, %v1931
    %v1953 = vsel %vm1911, %v1649, %v1932
    %v1954 = vsel %vm1912, %v1730, %v1933
    %v1955 = vsel %vm1913, %v1732, %v1934
    %v1956 = vsel %vm1914, %v1813, %v1935
    %v1957 = vsel %vm1915, %v1815, %v1936
    %v1958 = vsel %vm1916, %v1895, %v1937
    %v1959 = vsel %vm1917, %v1653, %v1938
    %v1960 = vsel %vm1918, %v1655, %v1939
    %v1961 = vsel %vm1919, %v1736, %v1940
    %v1962 = vsel %vm1920, %v1738, %v1941
    %v1963 = vsel %vm1921, %v1819, %v1942
    %v1964 = vsel %vm1922, %v1821, %v1943
    %v1965 = vsel %vm1923, %v1900, %v1944
    %v1967 = vlaneseq
    %v1968 = vshrl.u32 %v1967, 7
    %v1969 = vsub.s32 0, %v1968
    %v1970 = vrot.slane %v54, %v1969
    %v1971 = vlaneseq
    %v1972 = vshrl.u32 %v1971, 7
    %v1973 = vsub.s32 1, %v1972
    %v1974 = vrot.slane %v54, %v1973
    %v1975 = vlaneseq
    %v1976 = vshrl.u32 %v1975, 7
    %v1977 = vsub.s32 2, %v1976
    %v1978 = vrot.slane %v54, %v1977
    %v1979 = vlaneseq
    %v1980 = vshrl.u32 %v1979, 7
    %v1981 = vsub.s32 3, %v1980
    %v1982 = vrot.slane %v54, %v1981
    %v1983 = vlaneseq
    %v1984 = vshrl.u32 %v1983, 7
    %v1985 = vsub.s32 4, %v1984
    %v1986 = vrot.slane %v54, %v1985
    %v1987 = vlaneseq
    %v1988 = vshrl.u32 %v1987, 7
    %v1989 = vsub.s32 5, %v1988
    %v1990 = vrot.slane %v54, %v1989
    %v1991 = vlaneseq
    %v1992 = vshrl.u32 %v1991, 7
    %v1993 = vsub.s32 6, %v1992
    %v1994 = vrot.slane %v54, %v1993
    %v2002 = vmul.f32 %v1945, %v1970
    %v2003 = vmul.f32 %v1946, %v1974
    %v2004 = vmul.f32 %v1947, %v1978
    %v2005 = vmul.f32 %v1948, %v1982
    %v2006 = vmul.f32 %v1949, %v1986
    %v2007 = vmul.f32 %v1950, %v1990
    %v2008 = vmul.f32 %v1951, %v1994
    %v2009 = vmul.f32 %v1952, %v1970
    %v2010 = vmul.f32 %v1953, %v1974
    %v2011 = vmul.f32 %v1954, %v1978
    %v2012 = vmul.f32 %v1955, %v1982
    %v2013 = vmul.f32 %v1956, %v1986
    %v2014 = vmul.f32 %v1957, %v1990
    %v2015 = vmul.f32 %v1958, %v1994
    %v2016 = vmul.f32 %v1959, %v1970
    %v2017 = vmul.f32 %v1960, %v1974
    %v2018 = vmul.f32 %v1961, %v1978
    %v2019 = vmul.f32 %v1962, %v1982
    %v2020 = vmul.f32 %v1963, %v1986
    %v2021 = vmul.f32 %v1964, %v1990
    %v2022 = vmul.f32 %v1965, %v1994
    %2023 = vst [vmem:[#allocation3] sm:$0xff] 0.0
    %2024 = vst [vmem:[#allocation3 + $0x8] sm:$0xff] 0.0
    %2025 = vst [vmem:[#allocation3 + $0x10] sm:$0xff] 0.0
    %2026 = vst [vmem:[#allocation3 + $0x18] sm:$0xff] 0.0
    %2027 = vst [vmem:[#allocation3 + $0x20] sm:$0xff] 0.0
    %2028 = vst [vmem:[#allocation3 + $0x28] sm:$0xff] 0.0
    %2029 = vst [vmem:[#allocation3 + $0x30] sm:$0xff] 0.0
    %2030 = vst [vmem:[#allocation3 + $0x38] sm:$0xff] 0.0
    %2031 = vst [vmem:[#allocation3 + $0x40] sm:$0xff] 0.0
    %2032 = vst [vmem:[#allocation3 + $0x48] sm:$0xff] 0.0
    %2033 = vst [vmem:[#allocation3 + $0x50] sm:$0xff] 0.0
    %2034 = vst [vmem:[#allocation3 + $0x58] sm:$0xff] 0.0
    %2035 = vst [vmem:[#allocation3 + $0x60] sm:$0xff] 0.0
    %2036 = vst [vmem:[#allocation3 + $0x68] sm:$0xff] 0.0
    %2037 = vst [vmem:[#allocation3 + $0x70] sm:$0xff] 0.0
    %2038 = vst [vmem:[#allocation3 + $0x78] sm:$0xff] 0.0
    %2039 = vst [vmem:[#allocation3 + $0x80] sm:$0xff] 0.0
    %2040 = vst [vmem:[#allocation3 + $0x88] sm:$0xff] 0.0
    %2041 = vst [vmem:[#allocation3 + $0x90] sm:$0xff] 0.0
    %2042 = vst [vmem:[#allocation3 + $0x98] sm:$0xff] 0.0
    %2043 = vst [vmem:[#allocation3 + $0xa0] sm:$0xff] 0.0
    %2044 = vst [vmem:[#allocation3 + $0xa8] sm:$0xff] 0.0
    %2045 = vst [vmem:[#allocation3 + $0xb0] sm:$0xff] 0.0
    %2046 = vst [vmem:[#allocation3 + $0xb8] sm:$0xff] 0.0
    %2047 = vst [vmem:[#allocation3 + $0xc0] sm:$0xff] 0.0
    %2048 = vst [vmem:[#allocation3 + $0xc8] sm:$0xff] 0.0
    %2049 = vst [vmem:[#allocation3 + $0xd0] sm:$0xff] 0.0
    %2050 = vst [vmem:[#allocation3 + $0x8] sm:$0xff] %v2002
    %2051 = vst [vmem:[#allocation3 + $0x10] sm:$0xff] %v2003
    %2052 = vst [vmem:[#allocation3 + $0x18] sm:$0xff] %v2004
    %2053 = vst [vmem:[#allocation3 + $0x20] sm:$0xff] %v2005
    %2054 = vst [vmem:[#allocation3 + $0x28] sm:$0xff] %v2006
    %2055 = vst [vmem:[#allocation3 + $0x30] sm:$0xff] %v2007
    %2056 = vst [vmem:[#allocation3 + $0x38] sm:$0xff] %v2008
    %2057 = vst [vmem:[#allocation3 + $0x50] sm:$0xff] %v2009
    %2058 = vst [vmem:[#allocation3 + $0x58] sm:$0xff] %v2010
    %2059 = vst [vmem:[#allocation3 + $0x60] sm:$0xff] %v2011
    %2060 = vst [vmem:[#allocation3 + $0x68] sm:$0xff] %v2012
    %2061 = vst [vmem:[#allocation3 + $0x70] sm:$0xff] %v2013
    %2062 = vst [vmem:[#allocation3 + $0x78] sm:$0xff] %v2014
    %2063 = vst [vmem:[#allocation3 + $0x80] sm:$0xff] %v2015
    %2064 = vst [vmem:[#allocation3 + $0x98] sm:$0xff] %v2016
    %2065 = vst [vmem:[#allocation3 + $0xa0] sm:$0xff] %v2017
    %2066 = vst [vmem:[#allocation3 + $0xa8] sm:$0xff] %v2018
    %2067 = vst [vmem:[#allocation3 + $0xb0] sm:$0xff] %v2019
    %2068 = vst [vmem:[#allocation3 + $0xb8] sm:$0xff] %v2020
    %2069 = vst [vmem:[#allocation3 + $0xc0] sm:$0xff] %v2021
    %2070 = vst [vmem:[#allocation3 + $0xc8] sm:$0xff] %v2022
    %v2071 = vld [vmem:[#allocation3] sm:$0xff]
    %v2072 = vld [vmem:[#allocation3 + $0x8] sm:$0xff]
    %v2073 = vld [vmem:[#allocation3 + $0x10] sm:$0xff]
    %v2074 = vld [vmem:[#allocation3 + $0x18] sm:$0xff]
    %v2075 = vld [vmem:[#allocation3 + $0x20] sm:$0xff]
    %v2076 = vld [vmem:[#allocation3 + $0x28] sm:$0xff]
    %v2077 = vld [vmem:[#allocation3 + $0x30] sm:$0xff]
    %v2078 = vld [vmem:[#allocation3 + $0x38] sm:$0xff]
    %v2079 = vld [vmem:[#allocation3 + $0x48] sm:$0xff]
    %v2080 = vld [vmem:[#allocation3 + $0x50] sm:$0xff]
    %v2081 = vld [vmem:[#allocation3 + $0x58] sm:$0xff]
    %v2082 = vld [vmem:[#allocation3 + $0x60] sm:$0xff]
    %v2083 = vld [vmem:[#allocation3 + $0x68] sm:$0xff]
    %v2084 = vld [vmem:[#allocation3 + $0x70] sm:$0xff]
    %v2085 = vld [vmem:[#allocation3 + $0x78] sm:$0xff]
    %v2086 = vld [vmem:[#allocation3 + $0x80] sm:$0xff]
    %v2087 = vld [vmem:[#allocation3 + $0x90] sm:$0xff]
    %v2088 = vld [vmem:[#allocation3 + $0x98] sm:$0xff]
    %v2089 = vld [vmem:[#allocation3 + $0xa0] sm:$0xff]
    %v2090 = vld [vmem:[#allocation3 + $0xa8] sm:$0xff]
    %v2091 = vld [vmem:[#allocation3 + $0xb0] sm:$0xff]
    %v2092 = vld [vmem:[#allocation3 + $0xb8] sm:$0xff]
    %v2093 = vld [vmem:[#allocation3 + $0xc0] sm:$0xff]
    %v2094 = vld [vmem:[#allocation3 + $0xc8] sm:$0xff]
    %2119 = vrot.lane.b32.xlu0 %v2071, 21
    %v2120 = vpop.permute.xlu0 %2119
    %2121 = vrot.lane.b32.xlu0 %v2072, 21
    %v2122 = vpop.permute.xlu0 %2121
    %2123 = vrot.lane.b32.xlu0 %v2073, 21
    %v2124 = vpop.permute.xlu0 %2123
    %2125 = vrot.lane.b32.xlu0 %v2074, 21
    %v2126 = vpop.permute.xlu0 %2125
    %2127 = vrot.lane.b32.xlu0 %v2075, 21
    %v2128 = vpop.permute.xlu0 %2127
    %2129 = vrot.lane.b32.xlu0 %v2076, 21
    %v2130 = vpop.permute.xlu0 %2129
    %2131 = vrot.lane.b32.xlu0 %v2077, 21
    %v2132 = vpop.permute.xlu0 %2131
    %2133 = vrot.lane.b32.xlu0 %v2078, 21
    %v2134 = vpop.permute.xlu0 %2133
    %2135 = vrot.lane.b32.xlu0 %v2079, 21
    %v2136 = vpop.permute.xlu0 %2135
    %2137 = vrot.lane.b32.xlu0 %v2080, 21
    %v2138 = vpop.permute.xlu0 %2137
    %2139 = vrot.lane.b32.xlu0 %v2081, 21
    %v2140 = vpop.permute.xlu0 %2139
    %2141 = vrot.lane.b32.xlu0 %v2082, 21
    %v2142 = vpop.permute.xlu0 %2141
    %2143 = vrot.lane.b32.xlu0 %v2083, 21
    %v2144 = vpop.permute.xlu0 %2143
    %2145 = vrot.lane.b32.xlu0 %v2084, 21
    %v2146 = vpop.permute.xlu0 %2145
    %2147 = vrot.lane.b32.xlu0 %v2085, 21
    %v2148 = vpop.permute.xlu0 %2147
    %2149 = vrot.lane.b32.xlu0 %v2086, 21
    %v2150 = vpop.permute.xlu0 %2149
    %2151 = vrot.lane.b32.xlu0 %v2087, 21
    %v2152 = vpop.permute.xlu0 %2151
    %2153 = vrot.lane.b32.xlu0 %v2088, 21
    %v2154 = vpop.permute.xlu0 %2153
    %2155 = vrot.lane.b32.xlu0 %v2089, 21
    %v2156 = vpop.permute.xlu0 %2155
    %2157 = vrot.lane.b32.xlu0 %v2090, 21
    %v2158 = vpop.permute.xlu0 %2157
    %2159 = vrot.lane.b32.xlu0 %v2091, 21
    %v2160 = vpop.permute.xlu0 %2159
    %2161 = vrot.lane.b32.xlu0 %v2092, 21
    %v2162 = vpop.permute.xlu0 %2161
    %2163 = vrot.lane.b32.xlu0 %v2093, 21
    %v2164 = vpop.permute.xlu0 %2163
    %2165 = vrot.lane.b32.xlu0 %v2094, 21
    %v2166 = vpop.permute.xlu0 %2165
    %vm2167 = vcmask 171008
    %v2168 = vsel %vm2167, %v2120, %v2122
    %v2169 = vsel %vm2167, %v2122, %v2124
    %v2170 = vsel %vm2167, %v2124, %v2126
    %v2171 = vsel %vm2167, %v2126, %v2128
    %v2172 = vsel %vm2167, %v2128, %v2130
    %v2173 = vsel %vm2167, %v2130, %v2132
    %v2174 = vsel %vm2167, %v2132, %v2134
    %v2175 = vsel %vm2167, %v2136, %v2138
    %v2176 = vsel %vm2167, %v2138, %v2140
    %v2177 = vsel %vm2167, %v2140, %v2142
    %v2178 = vsel %vm2167, %v2142, %v2144
    %v2179 = vsel %vm2167, %v2144, %v2146
    %v2180 = vsel %vm2167, %v2146, %v2148
    %v2181 = vsel %vm2167, %v2148, %v2150
    %v2182 = vsel %vm2167, %v2152, %v2154
    %v2183 = vsel %vm2167, %v2154, %v2156
    %v2184 = vsel %vm2167, %v2156, %v2158
    %v2185 = vsel %vm2167, %v2158, %v2160
    %v2186 = vsel %vm2167, %v2160, %v2162
    %v2187 = vsel %vm2167, %v2162, %v2164
    %v2188 = vsel %vm2167, %v2164, %v2166
    %2210 = vst [vmem:[#allocation4] sm:$0xff] %v2168
    %2211 = vst [vmem:[#allocation4 + $0x8] sm:$0xff] %v2169
    %2212 = vst [vmem:[#allocation4 + $0x10] sm:$0xff] %v2170
    %2213 = vst [vmem:[#allocation4 + $0x18] sm:$0xff] %v2171
    %2214 = vst [vmem:[#allocation4 + $0x20] sm:$0xff] %v2172
    %2215 = vst [vmem:[#allocation4 + $0x28] sm:$0xff] %v2173
    %2216 = vst [vmem:[#allocation4 + $0x30] sm:$0xff] %v2174
    %2217 = vst [vmem:[#allocation4 + $0x38] sm:$0xff] %v2175
    %2218 = vst [vmem:[#allocation4 + $0x40] sm:$0xff] %v2176
    %2219 = vst [vmem:[#allocation4 + $0x48] sm:$0xff] %v2177
    %2220 = vst [vmem:[#allocation4 + $0x50] sm:$0xff] %v2178
    %2221 = vst [vmem:[#allocation4 + $0x58] sm:$0xff] %v2179
    %2222 = vst [vmem:[#allocation4 + $0x60] sm:$0xff] %v2180
    %2223 = vst [vmem:[#allocation4 + $0x68] sm:$0xff] %v2181
    %2224 = vst [vmem:[#allocation4 + $0x70] sm:$0xff] %v2182
    %2225 = vst [vmem:[#allocation4 + $0x78] sm:$0xff] %v2183
    %2226 = vst [vmem:[#allocation4 + $0x80] sm:$0xff] %v2184
    %2227 = vst [vmem:[#allocation4 + $0x88] sm:$0xff] %v2185
    %2228 = vst [vmem:[#allocation4 + $0x90] sm:$0xff] %v2186
    %2229 = vst [vmem:[#allocation4 + $0x98] sm:$0xff] %v2187
    %2230 = vst [vmem:[#allocation4 + $0xa0] sm:$0xff] %v2188
    %v2231 = vld [vmem:[#allocation3] sm:$0xff]
    %v2232 = vld [vmem:[#allocation3 + $0x8] sm:$0xff]
    %v2233 = vld [vmem:[#allocation3 + $0x10] sm:$0xff]
    %v2234 = vld [vmem:[#allocation3 + $0x18] sm:$0xff]
    %v2235 = vld [vmem:[#allocation3 + $0x20] sm:$0xff]
    %v2236 = vld [vmem:[#allocation3 + $0x28] sm:$0xff]
    %v2237 = vld [vmem:[#allocation3 + $0x30] sm:$0xff]
    %v2238 = vld [vmem:[#allocation3 + $0x38] sm:$0xff]
    %v2239 = vld [vmem:[#allocation3 + $0x48] sm:$0xff]
    %v2240 = vld [vmem:[#allocation3 + $0x50] sm:$0xff]
    %v2241 = vld [vmem:[#allocation3 + $0x58] sm:$0xff]
    %v2242 = vld [vmem:[#allocation3 + $0x60] sm:$0xff]
    %v2243 = vld [vmem:[#allocation3 + $0x68] sm:$0xff]
    %v2244 = vld [vmem:[#allocation3 + $0x70] sm:$0xff]
    %v2245 = vld [vmem:[#allocation3 + $0x78] sm:$0xff]
    %v2246 = vld [vmem:[#allocation3 + $0x80] sm:$0xff]
    %v2247 = vld [vmem:[#allocation3 + $0x90] sm:$0xff]
    %v2248 = vld [vmem:[#allocation3 + $0x98] sm:$0xff]
    %v2249 = vld [vmem:[#allocation3 + $0xa0] sm:$0xff]
    %v2250 = vld [vmem:[#allocation3 + $0xa8] sm:$0xff]
    %v2251 = vld [vmem:[#allocation3 + $0xb0] sm:$0xff]
    %v2252 = vld [vmem:[#allocation3 + $0xb8] sm:$0xff]
    %v2253 = vld [vmem:[#allocation3 + $0xc0] sm:$0xff]
    %v2254 = vld [vmem:[#allocation3 + $0xc8] sm:$0xff]
    %2279 = vrot.lane.b32.xlu0 %v2231, 20
    %v2280 = vpop.permute.xlu0 %2279
    %2281 = vrot.lane.b32.xlu0 %v2232, 20
    %v2282 = vpop.permute.xlu0 %2281
    %2283 = vrot.lane.b32.xlu0 %v2233, 20
    %v2284 = vpop.permute.xlu0 %2283
    %2285 = vrot.lane.b32.xlu0 %v2234, 20
    %v2286 = vpop.permute.xlu0 %2285
    %2287 = vrot.lane.b32.xlu0 %v2235, 20
    %v2288 = vpop.permute.xlu0 %2287
    %2289 = vrot.lane.b32.xlu0 %v2236, 20
    %v2290 = vpop.permute.xlu0 %2289
    %2291 = vrot.lane.b32.xlu0 %v2237, 20
    %v2292 = vpop.permute.xlu0 %2291
    %2293 = vrot.lane.b32.xlu0 %v2238, 20
    %v2294 = vpop.permute.xlu0 %2293
    %2295 = vrot.lane.b32.xlu0 %v2239, 20
    %v2296 = vpop.permute.xlu0 %2295
    %2297 = vrot.lane.b32.xlu0 %v2240, 20
    %v2298 = vpop.permute.xlu0 %2297
    %2299 = vrot.lane.b32.xlu0 %v2241, 20
    %v2300 = vpop.permute.xlu0 %2299
    %2301 = vrot.lane.b32.xlu0 %v2242, 20
    %v2302 = vpop.permute.xlu0 %2301
    %2303 = vrot.lane.b32.xlu0 %v2243, 20
    %v2304 = vpop.permute.xlu0 %2303
    %2305 = vrot.lane.b32.xlu0 %v2244, 20
    %v2306 = vpop.permute.xlu0 %2305
    %2307 = vrot.lane.b32.xlu0 %v2245, 20
    %v2308 = vpop.permute.xlu0 %2307
    %2309 = vrot.lane.b32.xlu0 %v2246, 20
    %v2310 = vpop.permute.xlu0 %2309
    %2311 = vrot.lane.b32.xlu0 %v2247, 20
    %v2312 = vpop.permute.xlu0 %2311
    %2313 = vrot.lane.b32.xlu0 %v2248, 20
    %v2314 = vpop.permute.xlu0 %2313
    %2315 = vrot.lane.b32.xlu0 %v2249, 20
    %v2316 = vpop.permute.xlu0 %2315
    %2317 = vrot.lane.b32.xlu0 %v2250, 20
    %v2318 = vpop.permute.xlu0 %2317
    %2319 = vrot.lane.b32.xlu0 %v2251, 20
    %v2320 = vpop.permute.xlu0 %2319
    %2321 = vrot.lane.b32.xlu0 %v2252, 20
    %v2322 = vpop.permute.xlu0 %2321
    %2323 = vrot.lane.b32.xlu0 %v2253, 20
    %v2324 = vpop.permute.xlu0 %2323
    %2325 = vrot.lane.b32.xlu0 %v2254, 20
    %v2326 = vpop.permute.xlu0 %2325
    %vm2327 = vcmask 162816
    %v2328 = vsel %vm2327, %v2280, %v2282
    %v2329 = vsel %vm2327, %v2282, %v2284
    %v2330 = vsel %vm2327, %v2284, %v2286
    %v2331 = vsel %vm2327, %v2286, %v2288
    %v2332 = vsel %vm2327, %v2288, %v2290
    %v2333 = vsel %vm2327, %v2290, %v2292
    %v2334 = vsel %vm2327, %v2292, %v2294
    %v2335 = vsel %vm2327, %v2296, %v2298
    %v2336 = vsel %vm2327, %v2298, %v2300
    %v2337 = vsel %vm2327, %v2300, %v2302
    %v2338 = vsel %vm2327, %v2302, %v2304
    %v2339 = vsel %vm2327, %v2304, %v2306
    %v2340 = vsel %vm2327, %v2306, %v2308
    %v2341 = vsel %vm2327, %v2308, %v2310
    %v2342 = vsel %vm2327, %v2312, %v2314
    %v2343 = vsel %vm2327, %v2314, %v2316
    %v2344 = vsel %vm2327, %v2316, %v2318
    %v2345 = vsel %vm2327, %v2318, %v2320
    %v2346 = vsel %vm2327, %v2320, %v2322
    %v2347 = vsel %vm2327, %v2322, %v2324
    %v2348 = vsel %vm2327, %v2324, %v2326
    %2370 = vst [vmem:[#allocation4 + $0xa8] sm:$0xff] %v2328
    %2371 = vst [vmem:[#allocation4 + $0xb0] sm:$0xff] %v2329
    %2372 = vst [vmem:[#allocation4 + $0xb8] sm:$0xff] %v2330
    %2373 = vst [vmem:[#allocation4 + $0xc0] sm:$0xff] %v2331
    %2374 = vst [vmem:[#allocation4 + $0xc8] sm:$0xff] %v2332
    %2375 = vst [vmem:[#allocation4 + $0xd0] sm:$0xff] %v2333
    %2376 = vst [vmem:[#allocation4 + $0xd8] sm:$0xff] %v2334
    %2377 = vst [vmem:[#allocation4 + $0xe0] sm:$0xff] %v2335
    %2378 = vst [vmem:[#allocation4 + $0xe8] sm:$0xff] %v2336
    %2379 = vst [vmem:[#allocation4 + $0xf0] sm:$0xff] %v2337
    %2380 = vst [vmem:[#allocation4 + $0xf8] sm:$0xff] %v2338
    %2381 = vst [vmem:[#allocation4 + $0x100] sm:$0xff] %v2339
    %2382 = vst [vmem:[#allocation4 + $0x108] sm:$0xff] %v2340
    %2383 = vst [vmem:[#allocation4 + $0x110] sm:$0xff] %v2341
    %2384 = vst [vmem:[#allocation4 + $0x118] sm:$0xff] %v2342
    %2385 = vst [vmem:[#allocation4 + $0x120] sm:$0xff] %v2343
    %2386 = vst [vmem:[#allocation4 + $0x128] sm:$0xff] %v2344
    %2387 = vst [vmem:[#allocation4 + $0x130] sm:$0xff] %v2345
    %2388 = vst [vmem:[#allocation4 + $0x138] sm:$0xff] %v2346
    %2389 = vst [vmem:[#allocation4 + $0x140] sm:$0xff] %v2347
    %2390 = vst [vmem:[#allocation4 + $0x148] sm:$0xff] %v2348
    %v2391 = vld [vmem:[#allocation3] sm:$0xff]
    %v2392 = vld [vmem:[#allocation3 + $0x8] sm:$0xff]
    %v2393 = vld [vmem:[#allocation3 + $0x10] sm:$0xff]
    %v2394 = vld [vmem:[#allocation3 + $0x18] sm:$0xff]
    %v2395 = vld [vmem:[#allocation3 + $0x20] sm:$0xff]
    %v2396 = vld [vmem:[#allocation3 + $0x28] sm:$0xff]
    %v2397 = vld [vmem:[#allocation3 + $0x30] sm:$0xff]
    %v2398 = vld [vmem:[#allocation3 + $0x38] sm:$0xff]
    %v2399 = vld [vmem:[#allocation3 + $0x48] sm:$0xff]
    %v2400 = vld [vmem:[#allocation3 + $0x50] sm:$0xff]
    %v2401 = vld [vmem:[#allocation3 + $0x58] sm:$0xff]
    %v2402 = vld [vmem:[#allocation3 + $0x60] sm:$0xff]
    %v2403 = vld [vmem:[#allocation3 + $0x68] sm:$0xff]
    %v2404 = vld [vmem:[#allocation3 + $0x70] sm:$0xff]
    %v2405 = vld [vmem:[#allocation3 + $0x78] sm:$0xff]
    %v2406 = vld [vmem:[#allocation3 + $0x80] sm:$0xff]
    %v2407 = vld [vmem:[#allocation3 + $0x90] sm:$0xff]
    %v2408 = vld [vmem:[#allocation3 + $0x98] sm:$0xff]
    %v2409 = vld [vmem:[#allocation3 + $0xa0] sm:$0xff]
    %v2410 = vld [vmem:[#allocation3 + $0xa8] sm:$0xff]
    %v2411 = vld [vmem:[#allocation3 + $0xb0] sm:$0xff]
    %v2412 = vld [vmem:[#allocation3 + $0xb8] sm:$0xff]
    %v2413 = vld [vmem:[#allocation3 + $0xc0] sm:$0xff]
    %v2414 = vld [vmem:[#allocation3 + $0xc8] sm:$0xff]
    %2439 = vrot.lane.b32.xlu0 %v2391, 19
    %v2440 = vpop.permute.xlu0 %2439
    %2441 = vrot.lane.b32.xlu0 %v2392, 19
    %v2442 = vpop.permute.xlu0 %2441
    %2443 = vrot.lane.b32.xlu0 %v2393, 19
    %v2444 = vpop.permute.xlu0 %2443
    %2445 = vrot.lane.b32.xlu0 %v2394, 19
    %v2446 = vpop.permute.xlu0 %2445
    %2447 = vrot.lane.b32.xlu0 %v2395, 19
    %v2448 = vpop.permute.xlu0 %2447
    %2449 = vrot.lane.b32.xlu0 %v2396, 19
    %v2450 = vpop.permute.xlu0 %2449
    %2451 = vrot.lane.b32.xlu0 %v2397, 19
    %v2452 = vpop.permute.xlu0 %2451
    %2453 = vrot.lane.b32.xlu0 %v2398, 19
    %v2454 = vpop.permute.xlu0 %2453
    %2455 = vrot.lane.b32.xlu0 %v2399, 19
    %v2456 = vpop.permute.xlu0 %2455
    %2457 = vrot.lane.b32.xlu0 %v2400, 19
    %v2458 = vpop.permute.xlu0 %2457
    %2459 = vrot.lane.b32.xlu0 %v2401, 19
    %v2460 = vpop.permute.xlu0 %2459
    %2461 = vrot.lane.b32.xlu0 %v2402, 19
    %v2462 = vpop.permute.xlu0 %2461
    %2463 = vrot.lane.b32.xlu0 %v2403, 19
    %v2464 = vpop.permute.xlu0 %2463
    %2465 = vrot.lane.b32.xlu0 %v2404, 19
    %v2466 = vpop.permute.xlu0 %2465
    %2467 = vrot.lane.b32.xlu0 %v2405, 19
    %v2468 = vpop.permute.xlu0 %2467
    %2469 = vrot.lane.b32.xlu0 %v2406, 19
    %v2470 = vpop.permute.xlu0 %2469
    %2471 = vrot.lane.b32.xlu0 %v2407, 19
    %v2472 = vpop.permute.xlu0 %2471
    %2473 = vrot.lane.b32.xlu0 %v2408, 19
    %v2474 = vpop.permute.xlu0 %2473
    %2475 = vrot.lane.b32.xlu0 %v2409, 19
    %v2476 = vpop.permute.xlu0 %2475
    %2477 = vrot.lane.b32.xlu0 %v2410, 19
    %v2478 = vpop.permute.xlu0 %2477
    %2479 = vrot.lane.b32.xlu0 %v2411, 19
    %v2480 = vpop.permute.xlu0 %2479
    %2481 = vrot.lane.b32.xlu0 %v2412, 19
    %v2482 = vpop.permute.xlu0 %2481
    %2483 = vrot.lane.b32.xlu0 %v2413, 19
    %v2484 = vpop.permute.xlu0 %2483
    %2485 = vrot.lane.b32.xlu0 %v2414, 19
    %v2486 = vpop.permute.xlu0 %2485
    %vm2487 = vcmask 154624
    %v2488 = vsel %vm2487, %v2440, %v2442
    %v2489 = vsel %vm2487, %v2442, %v2444
    %v2490 = vsel %vm2487, %v2444, %v2446
    %v2491 = vsel %vm2487, %v2446, %v2448
    %v2492 = vsel %vm2487, %v2448, %v2450
    %v2493 = vsel %vm2487, %v2450, %v2452
    %v2494 = vsel %vm2487, %v2452, %v2454
    %v2495 = vsel %vm2487, %v2456, %v2458
    %v2496 = vsel %vm2487, %v2458, %v2460
    %v2497 = vsel %vm2487, %v2460, %v2462
    %v2498 = vsel %vm2487, %v2462, %v2464
    %v2499 = vsel %vm2487, %v2464, %v2466
    %v2500 = vsel %vm2487, %v2466, %v2468
    %v2501 = vsel %vm2487, %v2468, %v2470
    %v2502 = vsel %vm2487, %v2472, %v2474
    %v2503 = vsel %vm2487, %v2474, %v2476
    %v2504 = vsel %vm2487, %v2476, %v2478
    %v2505 = vsel %vm2487, %v2478, %v2480
    %v2506 = vsel %vm2487, %v2480, %v2482
    %v2507 = vsel %vm2487, %v2482, %v2484
    %v2508 = vsel %vm2487, %v2484, %v2486
    %2530 = vst [vmem:[#allocation4 + $0x150] sm:$0xff] %v2488
    %2531 = vst [vmem:[#allocation4 + $0x158] sm:$0xff] %v2489
    %2532 = vst [vmem:[#allocation4 + $0x160] sm:$0xff] %v2490
    %2533 = vst [vmem:[#allocation4 + $0x168] sm:$0xff] %v2491
    %2534 = vst [vmem:[#allocation4 + $0x170] sm:$0xff] %v2492
    %2535 = vst [vmem:[#allocation4 + $0x178] sm:$0xff] %v2493
    %2536 = vst [vmem:[#allocation4 + $0x180] sm:$0xff] %v2494
    %2537 = vst [vmem:[#allocation4 + $0x188] sm:$0xff] %v2495
    %2538 = vst [vmem:[#allocation4 + $0x190] sm:$0xff] %v2496
    %2539 = vst [vmem:[#allocation4 + $0x198] sm:$0xff] %v2497
    %2540 = vst [vmem:[#allocation4 + $0x1a0] sm:$0xff] %v2498
    %2541 = vst [vmem:[#allocation4 + $0x1a8] sm:$0xff] %v2499
    %2542 = vst [vmem:[#allocation4 + $0x1b0] sm:$0xff] %v2500
    %2543 = vst [vmem:[#allocation4 + $0x1b8] sm:$0xff] %v2501
    %2544 = vst [vmem:[#allocation4 + $0x1c0] sm:$0xff] %v2502
    %2545 = vst [vmem:[#allocation4 + $0x1c8] sm:$0xff] %v2503
    %2546 = vst [vmem:[#allocation4 + $0x1d0] sm:$0xff] %v2504
    %2547 = vst [vmem:[#allocation4 + $0x1d8] sm:$0xff] %v2505
    %2548 = vst [vmem:[#allocation4 + $0x1e0] sm:$0xff] %v2506
    %2549 = vst [vmem:[#allocation4 + $0x1e8] sm:$0xff] %v2507
    %2550 = vst [vmem:[#allocation4 + $0x1f0] sm:$0xff] %v2508
    %v2551 = vld [vmem:[#allocation3] sm:$0xff]
    %v2552 = vld [vmem:[#allocation3 + $0x8] sm:$0xff]
    %v2553 = vld [vmem:[#allocation3 + $0x10] sm:$0xff]
    %v2554 = vld [vmem:[#allocation3 + $0x18] sm:$0xff]
    %v2555 = vld [vmem:[#allocation3 + $0x20] sm:$0xff]
    %v2556 = vld [vmem:[#allocation3 + $0x28] sm:$0xff]
    %v2557 = vld [vmem:[#allocation3 + $0x30] sm:$0xff]
    %v2558 = vld [vmem:[#allocation3 + $0x38] sm:$0xff]
    %v2559 = vld [vmem:[#allocation3 + $0x48] sm:$0xff]
    %v2560 = vld [vmem:[#allocation3 + $0x50] sm:$0xff]
    %v2561 = vld [vmem:[#allocation3 + $0x58] sm:$0xff]
    %v2562 = vld [vmem:[#allocation3 + $0x60] sm:$0xff]
    %v2563 = vld [vmem:[#allocation3 + $0x68] sm:$0xff]
    %v2564 = vld [vmem:[#allocation3 + $0x70] sm:$0xff]
    %v2565 = vld [vmem:[#allocation3 + $0x78] sm:$0xff]
    %v2566 = vld [vmem:[#allocation3 + $0x80] sm:$0xff]
    %v2567 = vld [vmem:[#allocation3 + $0x90] sm:$0xff]
    %v2568 = vld [vmem:[#allocation3 + $0x98] sm:$0xff]
    %v2569 = vld [vmem:[#allocation3 + $0xa0] sm:$0xff]
    %v2570 = vld [vmem:[#allocation3 + $0xa8] sm:$0xff]
    %v2571 = vld [vmem:[#allocation3 + $0xb0] sm:$0xff]
    %v2572 = vld [vmem:[#allocation3 + $0xb8] sm:$0xff]
    %v2573 = vld [vmem:[#allocation3 + $0xc0] sm:$0xff]
    %v2574 = vld [vmem:[#allocation3 + $0xc8] sm:$0xff]
    %2599 = vrot.lane.b32.xlu0 %v2551, 1
    %v2600 = vpop.permute.xlu0 %2599
    %2601 = vrot.lane.b32.xlu0 %v2552, 1
    %v2602 = vpop.permute.xlu0 %2601
    %2603 = vrot.lane.b32.xlu0 %v2553, 1
    %v2604 = vpop.permute.xlu0 %2603
    %2605 = vrot.lane.b32.xlu0 %v2554, 1
    %v2606 = vpop.permute.xlu0 %2605
    %2607 = vrot.lane.b32.xlu0 %v2555, 1
    %v2608 = vpop.permute.xlu0 %2607
    %2609 = vrot.lane.b32.xlu0 %v2556, 1
    %v2610 = vpop.permute.xlu0 %2609
    %2611 = vrot.lane.b32.xlu0 %v2557, 1
    %v2612 = vpop.permute.xlu0 %2611
    %2613 = vrot.lane.b32.xlu0 %v2558, 1
    %v2614 = vpop.permute.xlu0 %2613
    %2615 = vrot.lane.b32.xlu0 %v2559, 1
    %v2616 = vpop.permute.xlu0 %2615
    %2617 = vrot.lane.b32.xlu0 %v2560, 1
    %v2618 = vpop.permute.xlu0 %2617
    %2619 = vrot.lane.b32.xlu0 %v2561, 1
    %v2620 = vpop.permute.xlu0 %2619
    %2621 = vrot.lane.b32.xlu0 %v2562, 1
    %v2622 = vpop.permute.xlu0 %2621
    %2623 = vrot.lane.b32.xlu0 %v2563, 1
    %v2624 = vpop.permute.xlu0 %2623
    %2625 = vrot.lane.b32.xlu0 %v2564, 1
    %v2626 = vpop.permute.xlu0 %2625
    %2627 = vrot.lane.b32.xlu0 %v2565, 1
    %v2628 = vpop.permute.xlu0 %2627
    %2629 = vrot.lane.b32.xlu0 %v2566, 1
    %v2630 = vpop.permute.xlu0 %2629
    %2631 = vrot.lane.b32.xlu0 %v2567, 1
    %v2632 = vpop.permute.xlu0 %2631
    %2633 = vrot.lane.b32.xlu0 %v2568, 1
    %v2634 = vpop.permute.xlu0 %2633
    %2635 = vrot.lane.b32.xlu0 %v2569, 1
    %v2636 = vpop.permute.xlu0 %2635
    %2637 = vrot.lane.b32.xlu0 %v2570, 1
    %v2638 = vpop.permute.xlu0 %2637
    %2639 = vrot.lane.b32.xlu0 %v2571, 1
    %v2640 = vpop.permute.xlu0 %2639
    %2641 = vrot.lane.b32.xlu0 %v2572, 1
    %v2642 = vpop.permute.xlu0 %2641
    %2643 = vrot.lane.b32.xlu0 %v2573, 1
    %v2644 = vpop.permute.xlu0 %2643
    %2645 = vrot.lane.b32.xlu0 %v2574, 1
    %v2646 = vpop.permute.xlu0 %2645
    %vm2647 = vcmask 7168
    %v2648 = vsel %vm2647, %v2600, %v2602
    %v2649 = vsel %vm2647, %v2602, %v2604
    %v2650 = vsel %vm2647, %v2604, %v2606
    %v2651 = vsel %vm2647, %v2606, %v2608
    %v2652 = vsel %vm2647, %v2608, %v2610
    %v2653 = vsel %vm2647, %v2610, %v2612
    %v2654 = vsel %vm2647, %v2612, %v2614
    %v2655 = vsel %vm2647, %v2616, %v2618
    %v2656 = vsel %vm2647, %v2618, %v2620
    %v2657 = vsel %vm2647, %v2620, %v2622
    %v2658 = vsel %vm2647, %v2622, %v2624
    %v2659 = vsel %vm2647, %v2624, %v2626
    %v2660 = vsel %vm2647, %v2626, %v2628
    %v2661 = vsel %vm2647, %v2628, %v2630
    %v2662 = vsel %vm2647, %v2632, %v2634
    %v2663 = vsel %vm2647, %v2634, %v2636
    %v2664 = vsel %vm2647, %v2636, %v2638
    %v2665 = vsel %vm2647, %v2638, %v2640
    %v2666 = vsel %vm2647, %v2640, %v2642
    %v2667 = vsel %vm2647, %v2642, %v2644
    %v2668 = vsel %vm2647, %v2644, %v2646
    %2690 = vst [vmem:[#allocation4 + $0x1f8] sm:$0xff] %v2648
    %2691 = vst [vmem:[#allocation4 + $0x200] sm:$0xff] %v2649
    %2692 = vst [vmem:[#allocation4 + $0x208] sm:$0xff] %v2650
    %2693 = vst [vmem:[#allocation4 + $0x210] sm:$0xff] %v2651
    %2694 = vst [vmem:[#allocation4 + $0x218] sm:$0xff] %v2652
    %2695 = vst [vmem:[#allocation4 + $0x220] sm:$0xff] %v2653
    %2696 = vst [vmem:[#allocation4 + $0x228] sm:$0xff] %v2654
    %2697 = vst [vmem:[#allocation4 + $0x230] sm:$0xff] %v2655
    %2698 = vst [vmem:[#allocation4 + $0x238] sm:$0xff] %v2656
    %2699 = vst [vmem:[#allocation4 + $0x240] sm:$0xff] %v2657
    %2700 = vst [vmem:[#allocation4 + $0x248] sm:$0xff] %v2658
    %2701 = vst [vmem:[#allocation4 + $0x250] sm:$0xff] %v2659
    %2702 = vst [vmem:[#allocation4 + $0x258] sm:$0xff] %v2660
    %2703 = vst [vmem:[#allocation4 + $0x260] sm:$0xff] %v2661
    %2704 = vst [vmem:[#allocation4 + $0x268] sm:$0xff] %v2662
    %2705 = vst [vmem:[#allocation4 + $0x270] sm:$0xff] %v2663
    %2706 = vst [vmem:[#allocation4 + $0x278] sm:$0xff] %v2664
    %2707 = vst [vmem:[#allocation4 + $0x280] sm:$0xff] %v2665
    %2708 = vst [vmem:[#allocation4 + $0x288] sm:$0xff] %v2666
    %2709 = vst [vmem:[#allocation4 + $0x290] sm:$0xff] %v2667
    %2710 = vst [vmem:[#allocation4 + $0x298] sm:$0xff] %v2668
    %v2711 = vld [vmem:[#allocation3 + $0x8] sm:$0xff]
    %v2712 = vld [vmem:[#allocation3 + $0x10] sm:$0xff]
    %v2713 = vld [vmem:[#allocation3 + $0x18] sm:$0xff]
    %v2714 = vld [vmem:[#allocation3 + $0x20] sm:$0xff]
    %v2715 = vld [vmem:[#allocation3 + $0x28] sm:$0xff]
    %v2716 = vld [vmem:[#allocation3 + $0x30] sm:$0xff]
    %v2717 = vld [vmem:[#allocation3 + $0x38] sm:$0xff]
    %v2718 = vld [vmem:[#allocation3 + $0x50] sm:$0xff]
    %v2719 = vld [vmem:[#allocation3 + $0x58] sm:$0xff]
    %v2720 = vld [vmem:[#allocation3 + $0x60] sm:$0xff]
    %v2721 = vld [vmem:[#allocation3 + $0x68] sm:$0xff]
    %v2722 = vld [vmem:[#allocation3 + $0x70] sm:$0xff]
    %v2723 = vld [vmem:[#allocation3 + $0x78] sm:$0xff]
    %v2724 = vld [vmem:[#allocation3 + $0x80] sm:$0xff]
    %v2725 = vld [vmem:[#allocation3 + $0x98] sm:$0xff]
    %v2726 = vld [vmem:[#allocation3 + $0xa0] sm:$0xff]
    %v2727 = vld [vmem:[#allocation3 + $0xa8] sm:$0xff]
    %v2728 = vld [vmem:[#allocation3 + $0xb0] sm:$0xff]
    %v2729 = vld [vmem:[#allocation3 + $0xb8] sm:$0xff]
    %v2730 = vld [vmem:[#allocation3 + $0xc0] sm:$0xff]
    %v2731 = vld [vmem:[#allocation3 + $0xc8] sm:$0xff]
    %2732 = vst [vmem:[#allocation4 + $0x2a0] sm:$0xff] %v2711
    %2733 = vst [vmem:[#allocation4 + $0x2a8] sm:$0xff] %v2712
    %2734 = vst [vmem:[#allocation4 + $0x2b0] sm:$0xff] %v2713
    %2735 = vst [vmem:[#allocation4 + $0x2b8] sm:$0xff] %v2714
    %2736 = vst [vmem:[#allocation4 + $0x2c0] sm:$0xff] %v2715
    %2737 = vst [vmem:[#allocation4 + $0x2c8] sm:$0xff] %v2716
    %2738 = vst [vmem:[#allocation4 + $0x2d0] sm:$0xff] %v2717
    %2739 = vst [vmem:[#allocation4 + $0x2d8] sm:$0xff] %v2718
    %2740 = vst [vmem:[#allocation4 + $0x2e0] sm:$0xff] %v2719
    %2741 = vst [vmem:[#allocation4 + $0x2e8] sm:$0xff] %v2720
    %2742 = vst [vmem:[#allocation4 + $0x2f0] sm:$0xff] %v2721
    %2743 = vst [vmem:[#allocation4 + $0x2f8] sm:$0xff] %v2722
    %2744 = vst [vmem:[#allocation4 + $0x300] sm:$0xff] %v2723
    %2745 = vst [vmem:[#allocation4 + $0x308] sm:$0xff] %v2724
    %2746 = vst [vmem:[#allocation4 + $0x310] sm:$0xff] %v2725
    %2747 = vst [vmem:[#allocation4 + $0x318] sm:$0xff] %v2726
    %2748 = vst [vmem:[#allocation4 + $0x320] sm:$0xff] %v2727
    %2749 = vst [vmem:[#allocation4 + $0x328] sm:$0xff] %v2728
    %2750 = vst [vmem:[#allocation4 + $0x330] sm:$0xff] %v2729
    %2751 = vst [vmem:[#allocation4 + $0x338] sm:$0xff] %v2730
    %2752 = vst [vmem:[#allocation4 + $0x340] sm:$0xff] %v2731
    %v2753 = vld [vmem:[#allocation3 + $0x8] sm:$0xff]
    %v2754 = vld [vmem:[#allocation3 + $0x10] sm:$0xff]
    %v2755 = vld [vmem:[#allocation3 + $0x18] sm:$0xff]
    %v2756 = vld [vmem:[#allocation3 + $0x20] sm:$0xff]
    %v2757 = vld [vmem:[#allocation3 + $0x28] sm:$0xff]
    %v2758 = vld [vmem:[#allocation3 + $0x30] sm:$0xff]
    %v2759 = vld [vmem:[#allocation3 + $0x38] sm:$0xff]
    %v2760 = vld [vmem:[#allocation3 + $0x40] sm:$0xff]
    %v2761 = vld [vmem:[#allocation3 + $0x50] sm:$0xff]
    %v2762 = vld [vmem:[#allocation3 + $0x58] sm:$0xff]
    %v2763 = vld [vmem:[#allocation3 + $0x60] sm:$0xff]
    %v2764 = vld [vmem:[#allocation3 + $0x68] sm:$0xff]
    %v2765 = vld [vmem:[#allocation3 + $0x70] sm:$0xff]
    %v2766 = vld [vmem:[#allocation3 + $0x78] sm:$0xff]
    %v2767 = vld [vmem:[#allocation3 + $0x80] sm:$0xff]
    %v2768 = vld [vmem:[#allocation3 + $0x88] sm:$0xff]
    %v2769 = vld [vmem:[#allocation3 + $0x98] sm:$0xff]
    %v2770 = vld [vmem:[#allocation3 + $0xa0] sm:$0xff]
    %v2771 = vld [vmem:[#allocation3 + $0xa8] sm:$0xff]
    %v2772 = vld [vmem:[#allocation3 + $0xb0] sm:$0xff]
    %v2773 = vld [vmem:[#allocation3 + $0xb8] sm:$0xff]
    %v2774 = vld [vmem:[#allocation3 + $0xc0] sm:$0xff]
    %v2775 = vld [vmem:[#allocation3 + $0xc8] sm:$0xff]
    %v2776 = vld [vmem:[#allocation3 + $0xd0] sm:$0xff]
    %2801 = vrot.lane.b32.xlu0 %v2753, 127
    %v2802 = vpop.permute.xlu0 %2801
    %2803 = vrot.lane.b32.xlu0 %v2754, 127
    %v2804 = vpop.permute.xlu0 %2803
    %2805 = vrot.lane.b32.xlu0 %v2755, 127
    %v2806 = vpop.permute.xlu0 %2805
    %2807 = vrot.lane.b32.xlu0 %v2756, 127
    %v2808 = vpop.permute.xlu0 %2807
    %2809 = vrot.lane.b32.xlu0 %v2757, 127
    %v2810 = vpop.permute.xlu0 %2809
    %2811 = vrot.lane.b32.xlu0 %v2758, 127
    %v2812 = vpop.permute.xlu0 %2811
    %2813 = vrot.lane.b32.xlu0 %v2759, 127
    %v2814 = vpop.permute.xlu0 %2813
    %2815 = vrot.lane.b32.xlu0 %v2760, 127
    %v2816 = vpop.permute.xlu0 %2815
    %2817 = vrot.lane.b32.xlu0 %v2761, 127
    %v2818 = vpop.permute.xlu0 %2817
    %2819 = vrot.lane.b32.xlu0 %v2762, 127
    %v2820 = vpop.permute.xlu0 %2819
    %2821 = vrot.lane.b32.xlu0 %v2763, 127
    %v2822 = vpop.permute.xlu0 %2821
    %2823 = vrot.lane.b32.xlu0 %v2764, 127
    %v2824 = vpop.permute.xlu0 %2823
    %2825 = vrot.lane.b32.xlu0 %v2765, 127
    %v2826 = vpop.permute.xlu0 %2825
    %2827 = vrot.lane.b32.xlu0 %v2766, 127
    %v2828 = vpop.permute.xlu0 %2827
    %2829 = vrot.lane.b32.xlu0 %v2767, 127
    %v2830 = vpop.permute.xlu0 %2829
    %2831 = vrot.lane.b32.xlu0 %v2768, 127
    %v2832 = vpop.permute.xlu0 %2831
    %2833 = vrot.lane.b32.xlu0 %v2769, 127
    %v2834 = vpop.permute.xlu0 %2833
    %2835 = vrot.lane.b32.xlu0 %v2770, 127
    %v2836 = vpop.permute.xlu0 %2835
    %2837 = vrot.lane.b32.xlu0 %v2771, 127
    %v2838 = vpop.permute.xlu0 %2837
    %2839 = vrot.lane.b32.xlu0 %v2772, 127
    %v2840 = vpop.permute.xlu0 %2839
    %2841 = vrot.lane.b32.xlu0 %v2773, 127
    %v2842 = vpop.permute.xlu0 %2841
    %2843 = vrot.lane.b32.xlu0 %v2774, 127
    %v2844 = vpop.permute.xlu0 %2843
    %2845 = vrot.lane.b32.xlu0 %v2775, 127
    %v2846 = vpop.permute.xlu0 %2845
    %2847 = vrot.lane.b32.xlu0 %v2776, 127
    %v2848 = vpop.permute.xlu0 %2847
    %v2849 = vsel %vm101, %v2802, %v2804
    %v2850 = vsel %vm101, %v2804, %v2806
    %v2851 = vsel %vm101, %v2806, %v2808
    %v2852 = vsel %vm101, %v2808, %v2810
    %v2853 = vsel %vm101, %v2810, %v2812
    %v2854 = vsel %vm101, %v2812, %v2814
    %v2855 = vsel %vm101, %v2814, %v2816
    %v2856 = vsel %vm101, %v2818, %v2820
    %v2857 = vsel %vm101, %v2820, %v2822
    %v2858 = vsel %vm101, %v2822, %v2824
    %v2859 = vsel %vm101, %v2824, %v2826
    %v2860 = vsel %vm101, %v2826, %v2828
    %v2861 = vsel %vm101, %v2828, %v2830
    %v2862 = vsel %vm101, %v2830, %v2832
    %v2863 = vsel %vm101, %v2834, %v2836
    %v2864 = vsel %vm101, %v2836, %v2838
    %v2865 = vsel %vm101, %v2838, %v2840
    %v2866 = vsel %vm101, %v2840, %v2842
    %v2867 = vsel %vm101, %v2842, %v2844
    %v2868 = vsel %vm101, %v2844, %v2846
    %v2869 = vsel %vm101, %v2846, %v2848
    %2891 = vst [vmem:[#allocation4 + $0x348] sm:$0xff] %v2849
    %2892 = vst [vmem:[#allocation4 + $0x350] sm:$0xff] %v2850
    %2893 = vst [vmem:[#allocation4 + $0x358] sm:$0xff] %v2851
    %2894 = vst [vmem:[#allocation4 + $0x360] sm:$0xff] %v2852
    %2895 = vst [vmem:[#allocation4 + $0x368] sm:$0xff] %v2853
    %2896 = vst [vmem:[#allocation4 + $0x370] sm:$0xff] %v2854
    %2897 = vst [vmem:[#allocation4 + $0x378] sm:$0xff] %v2855
    %2898 = vst [vmem:[#allocation4 + $0x380] sm:$0xff] %v2856
    %2899 = vst [vmem:[#allocation4 + $0x388] sm:$0xff] %v2857
    %2900 = vst [vmem:[#allocation4 + $0x390] sm:$0xff] %v2858
    %2901 = vst [vmem:[#allocation4 + $0x398] sm:$0xff] %v2859
    %2902 = vst [vmem:[#allocation4 + $0x3a0] sm:$0xff] %v2860
    %2903 = vst [vmem:[#allocation4 + $0x3a8] sm:$0xff] %v2861
    %2904 = vst [vmem:[#allocation4 + $0x3b0] sm:$0xff] %v2862
    %2905 = vst [vmem:[#allocation4 + $0x3b8] sm:$0xff] %v2863
    %2906 = vst [vmem:[#allocation4 + $0x3c0] sm:$0xff] %v2864
    %2907 = vst [vmem:[#allocation4 + $0x3c8] sm:$0xff] %v2865
    %2908 = vst [vmem:[#allocation4 + $0x3d0] sm:$0xff] %v2866
    %2909 = vst [vmem:[#allocation4 + $0x3d8] sm:$0xff] %v2867
    %2910 = vst [vmem:[#allocation4 + $0x3e0] sm:$0xff] %v2868
    %2911 = vst [vmem:[#allocation4 + $0x3e8] sm:$0xff] %v2869
    %v2912 = vld [vmem:[#allocation3 + $0x8] sm:$0xff]
    %v2913 = vld [vmem:[#allocation3 + $0x10] sm:$0xff]
    %v2914 = vld [vmem:[#allocation3 + $0x18] sm:$0xff]
    %v2915 = vld [vmem:[#allocation3 + $0x20] sm:$0xff]
    %v2916 = vld [vmem:[#allocation3 + $0x28] sm:$0xff]
    %v2917 = vld [vmem:[#allocation3 + $0x30] sm:$0xff]
    %v2918 = vld [vmem:[#allocation3 + $0x38] sm:$0xff]
    %v2919 = vld [vmem:[#allocation3 + $0x40] sm:$0xff]
    %v2920 = vld [vmem:[#allocation3 + $0x50] sm:$0xff]
    %v2921 = vld [vmem:[#allocation3 + $0x58] sm:$0xff]
    %v2922 = vld [vmem:[#allocation3 + $0x60] sm:$0xff]
    %v2923 = vld [vmem:[#allocation3 + $0x68] sm:$0xff]
    %v2924 = vld [vmem:[#allocation3 + $0x70] sm:$0xff]
    %v2925 = vld [vmem:[#allocation3 + $0x78] sm:$0xff]
    %v2926 = vld [vmem:[#allocation3 + $0x80] sm:$0xff]
    %v2927 = vld [vmem:[#allocation3 + $0x88] sm:$0xff]
    %v2928 = vld [vmem:[#allocation3 + $0x98] sm:$0xff]
    %v2929 = vld [vmem:[#allocation3 + $0xa0] sm:$0xff]
    %v2930 = vld [vmem:[#allocation3 + $0xa8] sm:$0xff]
    %v2931 = vld [vmem:[#allocation3 + $0xb0] sm:$0xff]
    %v2932 = vld [vmem:[#allocation3 + $0xb8] sm:$0xff]
    %v2933 = vld [vmem:[#allocation3 + $0xc0] sm:$0xff]
    %v2934 = vld [vmem:[#allocation3 + $0xc8] sm:$0xff]
    %v2935 = vld [vmem:[#allocation3 + $0xd0] sm:$0xff]
    %2960 = vrot.lane.b32.xlu0 %v2912, 109
    %v2961 = vpop.permute.xlu0 %2960
    %2962 = vrot.lane.b32.xlu0 %v2913, 109
    %v2963 = vpop.permute.xlu0 %2962
    %2964 = vrot.lane.b32.xlu0 %v2914, 109
    %v2965 = vpop.permute.xlu0 %2964
    %2966 = vrot.lane.b32.xlu0 %v2915, 109
    %v2967 = vpop.permute.xlu0 %2966
    %2968 = vrot.lane.b32.xlu0 %v2916, 109
    %v2969 = vpop.permute.xlu0 %2968
    %2970 = vrot.lane.b32.xlu0 %v2917, 109
    %v2971 = vpop.permute.xlu0 %2970
    %2972 = vrot.lane.b32.xlu0 %v2918, 109
    %v2973 = vpop.permute.xlu0 %2972
    %2974 = vrot.lane.b32.xlu0 %v2919, 109
    %v2975 = vpop.permute.xlu0 %2974
    %2976 = vrot.lane.b32.xlu0 %v2920, 109
    %v2977 = vpop.permute.xlu0 %2976
    %2978 = vrot.lane.b32.xlu0 %v2921, 109
    %v2979 = vpop.permute.xlu0 %2978
    %2980 = vrot.lane.b32.xlu0 %v2922, 109
    %v2981 = vpop.permute.xlu0 %2980
    %2982 = vrot.lane.b32.xlu0 %v2923, 109
    %v2983 = vpop.permute.xlu0 %2982
    %2984 = vrot.lane.b32.xlu0 %v2924, 109
    %v2985 = vpop.permute.xlu0 %2984
    %2986 = vrot.lane.b32.xlu0 %v2925, 109
    %v2987 = vpop.permute.xlu0 %2986
    %2988 = vrot.lane.b32.xlu0 %v2926, 109
    %v2989 = vpop.permute.xlu0 %2988
    %2990 = vrot.lane.b32.xlu0 %v2927, 109
    %v2991 = vpop.permute.xlu0 %2990
    %2992 = vrot.lane.b32.xlu0 %v2928, 109
    %v2993 = vpop.permute.xlu0 %2992
    %2994 = vrot.lane.b32.xlu0 %v2929, 109
    %v2995 = vpop.permute.xlu0 %2994
    %2996 = vrot.lane.b32.xlu0 %v2930, 109
    %v2997 = vpop.permute.xlu0 %2996
    %2998 = vrot.lane.b32.xlu0 %v2931, 109
    %v2999 = vpop.permute.xlu0 %2998
    %3000 = vrot.lane.b32.xlu0 %v2932, 109
    %v3001 = vpop.permute.xlu0 %3000
    %3002 = vrot.lane.b32.xlu0 %v2933, 109
    %v3003 = vpop.permute.xlu0 %3002
    %3004 = vrot.lane.b32.xlu0 %v2934, 109
    %v3005 = vpop.permute.xlu0 %3004
    %3006 = vrot.lane.b32.xlu0 %v2935, 109
    %v3007 = vpop.permute.xlu0 %3006
    %vm3008 = vcmask 891904
    %v3009 = vsel %vm3008, %v2961, %v2963
    %v3010 = vsel %vm3008, %v2963, %v2965
    %v3011 = vsel %vm3008, %v2965, %v2967
    %v3012 = vsel %vm3008, %v2967, %v2969
    %v3013 = vsel %vm3008, %v2969, %v2971
    %v3014 = vsel %vm3008, %v2971, %v2973
    %v3015 = vsel %vm3008, %v2973, %v2975
    %v3016 = vsel %vm3008, %v2977, %v2979
    %v3017 = vsel %vm3008, %v2979, %v2981
    %v3018 = vsel %vm3008, %v2981, %v2983
    %v3019 = vsel %vm3008, %v2983, %v2985
    %v3020 = vsel %vm3008, %v2985, %v2987
    %v3021 = vsel %vm3008, %v2987, %v2989
    %v3022 = vsel %vm3008, %v2989, %v2991
    %v3023 = vsel %vm3008, %v2993, %v2995
    %v3024 = vsel %vm3008, %v2995, %v2997
    %v3025 = vsel %vm3008, %v2997, %v2999
    %v3026 = vsel %vm3008, %v2999, %v3001
    %v3027 = vsel %vm3008, %v3001, %v3003
    %v3028 = vsel %vm3008, %v3003, %v3005
    %v3029 = vsel %vm3008, %v3005, %v3007
    %3051 = vst [vmem:[#allocation4 + $0x3f0] sm:$0xff] %v3009
    %3052 = vst [vmem:[#allocation4 + $0x3f8] sm:$0xff] %v3010
    %3053 = vst [vmem:[#allocation4 + $0x400] sm:$0xff] %v3011
    %3054 = vst [vmem:[#allocation4 + $0x408] sm:$0xff] %v3012
    %3055 = vst [vmem:[#allocation4 + $0x410] sm:$0xff] %v3013
    %3056 = vst [vmem:[#allocation4 + $0x418] sm:$0xff] %v3014
    %3057 = vst [vmem:[#allocation4 + $0x420] sm:$0xff] %v3015
    %3058 = vst [vmem:[#allocation4 + $0x428] sm:$0xff] %v3016
    %3059 = vst [vmem:[#allocation4 + $0x430] sm:$0xff] %v3017
    %3060 = vst [vmem:[#allocation4 + $0x438] sm:$0xff] %v3018
    %3061 = vst [vmem:[#allocation4 + $0x440] sm:$0xff] %v3019
    %3062 = vst [vmem:[#allocation4 + $0x448] sm:$0xff] %v3020
    %3063 = vst [vmem:[#allocation4 + $0x450] sm:$0xff] %v3021
    %3064 = vst [vmem:[#allocation4 + $0x458] sm:$0xff] %v3022
    %3065 = vst [vmem:[#allocation4 + $0x460] sm:$0xff] %v3023
    %3066 = vst [vmem:[#allocation4 + $0x468] sm:$0xff] %v3024
    %3067 = vst [vmem:[#allocation4 + $0x470] sm:$0xff] %v3025
    %3068 = vst [vmem:[#allocation4 + $0x478] sm:$0xff] %v3026
    %3069 = vst [vmem:[#allocation4 + $0x480] sm:$0xff] %v3027
    %3070 = vst [vmem:[#allocation4 + $0x488] sm:$0xff] %v3028
    %3071 = vst [vmem:[#allocation4 + $0x490] sm:$0xff] %v3029
    %v3072 = vld [vmem:[#allocation3 + $0x8] sm:$0xff]
    %v3073 = vld [vmem:[#allocation3 + $0x10] sm:$0xff]
    %v3074 = vld [vmem:[#allocation3 + $0x18] sm:$0xff]
    %v3075 = vld [vmem:[#allocation3 + $0x20] sm:$0xff]
    %v3076 = vld [vmem:[#allocation3 + $0x28] sm:$0xff]
    %v3077 = vld [vmem:[#allocation3 + $0x30] sm:$0xff]
    %v3078 = vld [vmem:[#allocation3 + $0x38] sm:$0xff]
    %v3079 = vld [vmem:[#allocation3 + $0x40] sm:$0xff]
    %v3080 = vld [vmem:[#allocation3 + $0x50] sm:$0xff]
    %v3081 = vld [vmem:[#allocation3 + $0x58] sm:$0xff]
    %v3082 = vld [vmem:[#allocation3 + $0x60] sm:$0xff]
    %v3083 = vld [vmem:[#allocation3 + $0x68] sm:$0xff]
    %v3084 = vld [vmem:[#allocation3 + $0x70] sm:$0xff]
    %v3085 = vld [vmem:[#allocation3 + $0x78] sm:$0xff]
    %v3086 = vld [vmem:[#allocation3 + $0x80] sm:$0xff]
    %v3087 = vld [vmem:[#allocation3 + $0x88] sm:$0xff]
    %v3088 = vld [vmem:[#allocation3 + $0x98] sm:$0xff]
    %v3089 = vld [vmem:[#allocation3 + $0xa0] sm:$0xff]
    %v3090 = vld [vmem:[#allocation3 + $0xa8] sm:$0xff]
    %v3091 = vld [vmem:[#allocation3 + $0xb0] sm:$0xff]
    %v3092 = vld [vmem:[#allocation3 + $0xb8] sm:$0xff]
    %v3093 = vld [vmem:[#allocation3 + $0xc0] sm:$0xff]
    %v3094 = vld [vmem:[#allocation3 + $0xc8] sm:$0xff]
    %v3095 = vld [vmem:[#allocation3 + $0xd0] sm:$0xff]
    %3120 = vrot.lane.b32.xlu0 %v3072, 108
    %v3121 = vpop.permute.xlu0 %3120
    %3122 = vrot.lane.b32.xlu0 %v3073, 108
    %v3123 = vpop.permute.xlu0 %3122
    %3124 = vrot.lane.b32.xlu0 %v3074, 108
    %v3125 = vpop.permute.xlu0 %3124
    %3126 = vrot.lane.b32.xlu0 %v3075, 108
    %v3127 = vpop.permute.xlu0 %3126
    %3128 = vrot.lane.b32.xlu0 %v3076, 108
    %v3129 = vpop.permute.xlu0 %3128
    %3130 = vrot.lane.b32.xlu0 %v3077, 108
    %v3131 = vpop.permute.xlu0 %3130
    %3132 = vrot.lane.b32.xlu0 %v3078, 108
    %v3133 = vpop.permute.xlu0 %3132
    %3134 = vrot.lane.b32.xlu0 %v3079, 108
    %v3135 = vpop.permute.xlu0 %3134
    %3136 = vrot.lane.b32.xlu0 %v3080, 108
    %v3137 = vpop.permute.xlu0 %3136
    %3138 = vrot.lane.b32.xlu0 %v3081, 108
    %v3139 = vpop.permute.xlu0 %3138
    %3140 = vrot.lane.b32.xlu0 %v3082, 108
    %v3141 = vpop.permute.xlu0 %3140
    %3142 = vrot.lane.b32.xlu0 %v3083, 108
    %v3143 = vpop.permute.xlu0 %3142
    %3144 = vrot.lane.b32.xlu0 %v3084, 108
    %v3145 = vpop.permute.xlu0 %3144
    %3146 = vrot.lane.b32.xlu0 %v3085, 108
    %v3147 = vpop.permute.xlu0 %3146
    %3148 = vrot.lane.b32.xlu0 %v3086, 108
    %v3149 = vpop.permute.xlu0 %3148
    %3150 = vrot.lane.b32.xlu0 %v3087, 108
    %v3151 = vpop.permute.xlu0 %3150
    %3152 = vrot.lane.b32.xlu0 %v3088, 108
    %v3153 = vpop.permute.xlu0 %3152
    %3154 = vrot.lane.b32.xlu0 %v3089, 108
    %v3155 = vpop.permute.xlu0 %3154
    %3156 = vrot.lane.b32.xlu0 %v3090, 108
    %v3157 = vpop.permute.xlu0 %3156
    %3158 = vrot.lane.b32.xlu0 %v3091, 108
    %v3159 = vpop.permute.xlu0 %3158
    %3160 = vrot.lane.b32.xlu0 %v3092, 108
    %v3161 = vpop.permute.xlu0 %3160
    %3162 = vrot.lane.b32.xlu0 %v3093, 108
    %v3163 = vpop.permute.xlu0 %3162
    %3164 = vrot.lane.b32.xlu0 %v3094, 108
    %v3165 = vpop.permute.xlu0 %3164
    %3166 = vrot.lane.b32.xlu0 %v3095, 108
    %v3167 = vpop.permute.xlu0 %3166
    %v3168 = vsel %vm317, %v3121, %v3123
    %v3169 = vsel %vm317, %v3123, %v3125
    %v3170 = vsel %vm317, %v3125, %v3127
    %v3171 = vsel %vm317, %v3127, %v3129
    %v3172 = vsel %vm317, %v3129, %v3131
    %v3173 = vsel %vm317, %v3131, %v3133
    %v3174 = vsel %vm317, %v3133, %v3135
    %v3175 = vsel %vm317, %v3137, %v3139
    %v3176 = vsel %vm317, %v3139, %v3141
    %v3177 = vsel %vm317, %v3141, %v3143
    %v3178 = vsel %vm317, %v3143, %v3145
    %v3179 = vsel %vm317, %v3145, %v3147
    %v3180 = vsel %vm317, %v3147, %v3149
    %v3181 = vsel %vm317, %v3149, %v3151
    %v3182 = vsel %vm317, %v3153, %v3155
    %v3183 = vsel %vm317, %v3155, %v3157
    %v3184 = vsel %vm317, %v3157, %v3159
    %v3185 = vsel %vm317, %v3159, %v3161
    %v3186 = vsel %vm317, %v3161, %v3163
    %v3187 = vsel %vm317, %v3163, %v3165
    %v3188 = vsel %vm317, %v3165, %v3167
    %3210 = vst [vmem:[#allocation4 + $0x498] sm:$0xff] %v3168
    %3211 = vst [vmem:[#allocation4 + $0x4a0] sm:$0xff] %v3169
    %3212 = vst [vmem:[#allocation4 + $0x4a8] sm:$0xff] %v3170
    %3213 = vst [vmem:[#allocation4 + $0x4b0] sm:$0xff] %v3171
    %3214 = vst [vmem:[#allocation4 + $0x4b8] sm:$0xff] %v3172
    %3215 = vst [vmem:[#allocation4 + $0x4c0] sm:$0xff] %v3173
    %3216 = vst [vmem:[#allocation4 + $0x4c8] sm:$0xff] %v3174
    %3217 = vst [vmem:[#allocation4 + $0x4d0] sm:$0xff] %v3175
    %3218 = vst [vmem:[#allocation4 + $0x4d8] sm:$0xff] %v3176
    %3219 = vst [vmem:[#allocation4 + $0x4e0] sm:$0xff] %v3177
    %3220 = vst [vmem:[#allocation4 + $0x4e8] sm:$0xff] %v3178
    %3221 = vst [vmem:[#allocation4 + $0x4f0] sm:$0xff] %v3179
    %3222 = vst [vmem:[#allocation4 + $0x4f8] sm:$0xff] %v3180
    %3223 = vst [vmem:[#allocation4 + $0x500] sm:$0xff] %v3181
    %3224 = vst [vmem:[#allocation4 + $0x508] sm:$0xff] %v3182
    %3225 = vst [vmem:[#allocation4 + $0x510] sm:$0xff] %v3183
    %3226 = vst [vmem:[#allocation4 + $0x518] sm:$0xff] %v3184
    %3227 = vst [vmem:[#allocation4 + $0x520] sm:$0xff] %v3185
    %3228 = vst [vmem:[#allocation4 + $0x528] sm:$0xff] %v3186
    %3229 = vst [vmem:[#allocation4 + $0x530] sm:$0xff] %v3187
    %3230 = vst [vmem:[#allocation4 + $0x538] sm:$0xff] %v3188
    %v3231 = vld [vmem:[#allocation3 + $0x8] sm:$0xff]
    %v3232 = vld [vmem:[#allocation3 + $0x10] sm:$0xff]
    %v3233 = vld [vmem:[#allocation3 + $0x18] sm:$0xff]
    %v3234 = vld [vmem:[#allocation3 + $0x20] sm:$0xff]
    %v3235 = vld [vmem:[#allocation3 + $0x28] sm:$0xff]
    %v3236 = vld [vmem:[#allocation3 + $0x30] sm:$0xff]
    %v3237 = vld [vmem:[#allocation3 + $0x38] sm:$0xff]
    %v3238 = vld [vmem:[#allocation3 + $0x40] sm:$0xff]
    %v3239 = vld [vmem:[#allocation3 + $0x50] sm:$0xff]
    %v3240 = vld [vmem:[#allocation3 + $0x58] sm:$0xff]
    %v3241 = vld [vmem:[#allocation3 + $0x60] sm:$0xff]
    %v3242 = vld [vmem:[#allocation3 + $0x68] sm:$0xff]
    %v3243 = vld [vmem:[#allocation3 + $0x70] sm:$0xff]
    %v3244 = vld [vmem:[#allocation3 + $0x78] sm:$0xff]
    %v3245 = vld [vmem:[#allocation3 + $0x80] sm:$0xff]
    %v3246 = vld [vmem:[#allocation3 + $0x88] sm:$0xff]
    %v3247 = vld [vmem:[#allocation3 + $0x98] sm:$0xff]
    %v3248 = vld [vmem:[#allocation3 + $0xa0] sm:$0xff]
    %v3249 = vld [vmem:[#allocation3 + $0xa8] sm:$0xff]
    %v3250 = vld [vmem:[#allocation3 + $0xb0] sm:$0xff]
    %v3251 = vld [vmem:[#allocation3 + $0xb8] sm:$0xff]
    %v3252 = vld [vmem:[#allocation3 + $0xc0] sm:$0xff]
    %v3253 = vld [vmem:[#allocation3 + $0xc8] sm:$0xff]
    %v3254 = vld [vmem:[#allocation3 + $0xd0] sm:$0xff]
    %3279 = vrot.lane.b32.xlu0 %v3231, 107
    %v3280 = vpop.permute.xlu0 %3279
    %3281 = vrot.lane.b32.xlu0 %v3232, 107
    %v3282 = vpop.permute.xlu0 %3281
    %3283 = vrot.lane.b32.xlu0 %v3233, 107
    %v3284 = vpop.permute.xlu0 %3283
    %3285 = vrot.lane.b32.xlu0 %v3234, 107
    %v3286 = vpop.permute.xlu0 %3285
    %3287 = vrot.lane.b32.xlu0 %v3235, 107
    %v3288 = vpop.permute.xlu0 %3287
    %3289 = vrot.lane.b32.xlu0 %v3236, 107
    %v3290 = vpop.permute.xlu0 %3289
    %3291 = vrot.lane.b32.xlu0 %v3237, 107
    %v3292 = vpop.permute.xlu0 %3291
    %3293 = vrot.lane.b32.xlu0 %v3238, 107
    %v3294 = vpop.permute.xlu0 %3293
    %3295 = vrot.lane.b32.xlu0 %v3239, 107
    %v3296 = vpop.permute.xlu0 %3295
    %3297 = vrot.lane.b32.xlu0 %v3240, 107
    %v3298 = vpop.permute.xlu0 %3297
    %3299 = vrot.lane.b32.xlu0 %v3241, 107
    %v3300 = vpop.permute.xlu0 %3299
    %3301 = vrot.lane.b32.xlu0 %v3242, 107
    %v3302 = vpop.permute.xlu0 %3301
    %3303 = vrot.lane.b32.xlu0 %v3243, 107
    %v3304 = vpop.permute.xlu0 %3303
    %3305 = vrot.lane.b32.xlu0 %v3244, 107
    %v3306 = vpop.permute.xlu0 %3305
    %3307 = vrot.lane.b32.xlu0 %v3245, 107
    %v3308 = vpop.permute.xlu0 %3307
    %3309 = vrot.lane.b32.xlu0 %v3246, 107
    %v3310 = vpop.permute.xlu0 %3309
    %3311 = vrot.lane.b32.xlu0 %v3247, 107
    %v3312 = vpop.permute.xlu0 %3311
    %3313 = vrot.lane.b32.xlu0 %v3248, 107
    %v3314 = vpop.permute.xlu0 %3313
    %3315 = vrot.lane.b32.xlu0 %v3249, 107
    %v3316 = vpop.permute.xlu0 %3315
    %3317 = vrot.lane.b32.xlu0 %v3250, 107
    %v3318 = vpop.permute.xlu0 %3317
    %3319 = vrot.lane.b32.xlu0 %v3251, 107
    %v3320 = vpop.permute.xlu0 %3319
    %3321 = vrot.lane.b32.xlu0 %v3252, 107
    %v3322 = vpop.permute.xlu0 %3321
    %3323 = vrot.lane.b32.xlu0 %v3253, 107
    %v3324 = vpop.permute.xlu0 %3323
    %3325 = vrot.lane.b32.xlu0 %v3254, 107
    %v3326 = vpop.permute.xlu0 %3325
    %v3327 = vsel %vm371, %v3280, %v3282
    %v3328 = vsel %vm371, %v3282, %v3284
    %v3329 = vsel %vm371, %v3284, %v3286
    %v3330 = vsel %vm371, %v3286, %v3288
    %v3331 = vsel %vm371, %v3288, %v3290
    %v3332 = vsel %vm371, %v3290, %v3292
    %v3333 = vsel %vm371, %v3292, %v3294
    %v3334 = vsel %vm371, %v3296, %v3298
    %v3335 = vsel %vm371, %v3298, %v3300
    %v3336 = vsel %vm371, %v3300, %v3302
    %v3337 = vsel %vm371, %v3302, %v3304
    %v3338 = vsel %vm371, %v3304, %v3306
    %v3339 = vsel %vm371, %v3306, %v3308
    %v3340 = vsel %vm371, %v3308, %v3310
    %v3341 = vsel %vm371, %v3312, %v3314
    %v3342 = vsel %vm371, %v3314, %v3316
    %v3343 = vsel %vm371, %v3316, %v3318
    %v3344 = vsel %vm371, %v3318, %v3320
    %v3345 = vsel %vm371, %v3320, %v3322
    %v3346 = vsel %vm371, %v3322, %v3324
    %v3347 = vsel %vm371, %v3324, %v3326
    %3369 = vst [vmem:[#allocation4 + $0x540] sm:$0xff] %v3327
    %3370 = vst [vmem:[#allocation4 + $0x548] sm:$0xff] %v3328
    %3371 = vst [vmem:[#allocation4 + $0x550] sm:$0xff] %v3329
    %3372 = vst [vmem:[#allocation4 + $0x558] sm:$0xff] %v3330
    %3373 = vst [vmem:[#allocation4 + $0x560] sm:$0xff] %v3331
    %3374 = vst [vmem:[#allocation4 + $0x568] sm:$0xff] %v3332
    %3375 = vst [vmem:[#allocation4 + $0x570] sm:$0xff] %v3333
    %3376 = vst [vmem:[#allocation4 + $0x578] sm:$0xff] %v3334
    %3377 = vst [vmem:[#allocation4 + $0x580] sm:$0xff] %v3335
    %3378 = vst [vmem:[#allocation4 + $0x588] sm:$0xff] %v3336
    %3379 = vst [vmem:[#allocation4 + $0x590] sm:$0xff] %v3337
    %3380 = vst [vmem:[#allocation4 + $0x598] sm:$0xff] %v3338
    %3381 = vst [vmem:[#allocation4 + $0x5a0] sm:$0xff] %v3339
    %3382 = vst [vmem:[#allocation4 + $0x5a8] sm:$0xff] %v3340
    %3383 = vst [vmem:[#allocation4 + $0x5b0] sm:$0xff] %v3341
    %3384 = vst [vmem:[#allocation4 + $0x5b8] sm:$0xff] %v3342
    %3385 = vst [vmem:[#allocation4 + $0x5c0] sm:$0xff] %v3343
    %3386 = vst [vmem:[#allocation4 + $0x5c8] sm:$0xff] %v3344
    %3387 = vst [vmem:[#allocation4 + $0x5d0] sm:$0xff] %v3345
    %3388 = vst [vmem:[#allocation4 + $0x5d8] sm:$0xff] %v3346
    %3389 = vst [vmem:[#allocation4 + $0x5e0] sm:$0xff] %v3347
    %v3390 = vld [vmem:[#allocation8] sm:$0xff]
    %v3391 = vld [vmem:[#allocation8 + $0x8] sm:$0xff]
    %v3392 = vld [vmem:[#allocation4] sm:$0xff]
    %v3393 = vld [vmem:[#allocation4 + $0x8] sm:$0xff]
    %v3394 = vld [vmem:[#allocation4 + $0x10] sm:$0xff]
    %v3395 = vld [vmem:[#allocation4 + $0x18] sm:$0xff]
    %v3396 = vld [vmem:[#allocation4 + $0x20] sm:$0xff]
    %v3397 = vld [vmem:[#allocation4 + $0x28] sm:$0xff]
    %v3398 = vld [vmem:[#allocation4 + $0x30] sm:$0xff]
    %v3399 = vld [vmem:[#allocation4 + $0x38] sm:$0xff]
    %v3400 = vld [vmem:[#allocation4 + $0x40] sm:$0xff]
    %v3401 = vld [vmem:[#allocation4 + $0x48] sm:$0xff]
    %v3402 = vld [vmem:[#allocation4 + $0x50] sm:$0xff]
    %v3403 = vld [vmem:[#allocation4 + $0x58] sm:$0xff]
    %v3404 = vld [vmem:[#allocation4 + $0x60] sm:$0xff]
    %v3405 = vld [vmem:[#allocation4 + $0x68] sm:$0xff]
    %v3406 = vld [vmem:[#allocation4 + $0x70] sm:$0xff]
    %v3407 = vld [vmem:[#allocation4 + $0x78] sm:$0xff]
    %v3408 = vld [vmem:[#allocation4 + $0x80] sm:$0xff]
    %v3409 = vld [vmem:[#allocation4 + $0x88] sm:$0xff]
    %v3410 = vld [vmem:[#allocation4 + $0x90] sm:$0xff]
    %v3411 = vld [vmem:[#allocation4 + $0x98] sm:$0xff]
    %v3412 = vld [vmem:[#allocation4 + $0xa0] sm:$0xff]
    %v3413 = vld [vmem:[#allocation4 + $0xa8] sm:$0xff]
    %v3414 = vld [vmem:[#allocation4 + $0xb0] sm:$0xff]
    %v3415 = vld [vmem:[#allocation4 + $0xb8] sm:$0xff]
    %v3416 = vld [vmem:[#allocation4 + $0xc0] sm:$0xff]
    %v3417 = vld [vmem:[#allocation4 + $0xc8] sm:$0xff]
    %v3418 = vld [vmem:[#allocation4 + $0xd0] sm:$0xff]
    %v3419 = vld [vmem:[#allocation4 + $0xd8] sm:$0xff]
    %v3420 = vld [vmem:[#allocation4 + $0xe0] sm:$0xff]
    %v3421 = vld [vmem:[#allocation4 + $0xe8] sm:$0xff]
    %v3422 = vld [vmem:[#allocation4 + $0xf0] sm:$0xff]
    %v3423 = vld [vmem:[#allocation4 + $0xf8] sm:$0xff]
    %v3424 = vld [vmem:[#allocation4 + $0x100] sm:$0xff]
    %v3425 = vld [vmem:[#allocation4 + $0x108] sm:$0xff]
    %v3426 = vld [vmem:[#allocation4 + $0x110] sm:$0xff]
    %v3427 = vld [vmem:[#allocation4 + $0x118] sm:$0xff]
    %v3428 = vld [vmem:[#allocation4 + $0x120] sm:$0xff]
    %v3429 = vld [vmem:[#allocation4 + $0x128] sm:$0xff]
    %v3430 = vld [vmem:[#allocation4 + $0x130] sm:$0xff]
    %v3431 = vld [vmem:[#allocation4 + $0x138] sm:$0xff]
    %v3432 = vld [vmem:[#allocation4 + $0x140] sm:$0xff]
    %v3433 = vld [vmem:[#allocation4 + $0x148] sm:$0xff]
    %v3434 = vld [vmem:[#allocation4 + $0x150] sm:$0xff]
    %v3435 = vld [vmem:[#allocation4 + $0x158] sm:$0xff]
    %v3436 = vld [vmem:[#allocation4 + $0x160] sm:$0xff]
    %v3437 = vld [vmem:[#allocation4 + $0x168] sm:$0xff]
    %v3438 = vld [vmem:[#allocation4 + $0x170] sm:$0xff]
    %v3439 = vld [vmem:[#allocation4 + $0x178] sm:$0xff]
    %v3440 = vld [vmem:[#allocation4 + $0x180] sm:$0xff]
    %v3441 = vld [vmem:[#allocation4 + $0x188] sm:$0xff]
    %v3442 = vld [vmem:[#allocation4 + $0x190] sm:$0xff]
    %v3443 = vld [vmem:[#allocation4 + $0x198] sm:$0xff]
    %v3444 = vld [vmem:[#allocation4 + $0x1a0] sm:$0xff]
    %v3445 = vld [vmem:[#allocation4 + $0x1a8] sm:$0xff]
    %v3446 = vld [vmem:[#allocation4 + $0x1b0] sm:$0xff]
    %v3447 = vld [vmem:[#allocation4 + $0x1b8] sm:$0xff]
    %v3448 = vld [vmem:[#allocation4 + $0x1c0] sm:$0xff]
    %v3449 = vld [vmem:[#allocation4 + $0x1c8] sm:$0xff]
    %v3450 = vld [vmem:[#allocation4 + $0x1d0] sm:$0xff]
    %v3451 = vld [vmem:[#allocation4 + $0x1d8] sm:$0xff]
    %v3452 = vld [vmem:[#allocation4 + $0x1e0] sm:$0xff]
    %v3453 = vld [vmem:[#allocation4 + $0x1e8] sm:$0xff]
    %v3454 = vld [vmem:[#allocation4 + $0x1f0] sm:$0xff]
    %v3455 = vld [vmem:[#allocation4 + $0x1f8] sm:$0xff]
    %v3456 = vld [vmem:[#allocation4 + $0x200] sm:$0xff]
    %v3457 = vld [vmem:[#allocation4 + $0x208] sm:$0xff]
    %v3458 = vld [vmem:[#allocation4 + $0x210] sm:$0xff]
    %v3459 = vld [vmem:[#allocation4 + $0x218] sm:$0xff]
    %v3460 = vld [vmem:[#allocation4 + $0x220] sm:$0xff]
    %v3461 = vld [vmem:[#allocation4 + $0x228] sm:$0xff]
    %v3462 = vld [vmem:[#allocation4 + $0x230] sm:$0xff]
    %v3463 = vld [vmem:[#allocation4 + $0x238] sm:$0xff]
    %v3464 = vld [vmem:[#allocation4 + $0x240] sm:$0xff]
    %v3465 = vld [vmem:[#allocation4 + $0x248] sm:$0xff]
    %v3466 = vld [vmem:[#allocation4 + $0x250] sm:$0xff]
    %v3467 = vld [vmem:[#allocation4 + $0x258] sm:$0xff]
    %v3468 = vld [vmem:[#allocation4 + $0x260] sm:$0xff]
    %v3469 = vld [vmem:[#allocation4 + $0x268] sm:$0xff]
    %v3470 = vld [vmem:[#allocation4 + $0x270] sm:$0xff]
    %v3471 = vld [vmem:[#allocation4 + $0x278] sm:$0xff]
    %v3472 = vld [vmem:[#allocation4 + $0x280] sm:$0xff]
    %v3473 = vld [vmem:[#allocation4 + $0x288] sm:$0xff]
    %v3474 = vld [vmem:[#allocation4 + $0x290] sm:$0xff]
    %v3475 = vld [vmem:[#allocation4 + $0x298] sm:$0xff]
    %v3476 = vld [vmem:[#allocation4 + $0x2a0] sm:$0xff]
    %v3477 = vld [vmem:[#allocation4 + $0x2a8] sm:$0xff]
    %v3478 = vld [vmem:[#allocation4 + $0x2b0] sm:$0xff]
    %v3479 = vld [vmem:[#allocation4 + $0x2b8] sm:$0xff]
    %v3480 = vld [vmem:[#allocation4 + $0x2c0] sm:$0xff]
    %v3481 = vld [vmem:[#allocation4 + $0x2c8] sm:$0xff]
    %v3482 = vld [vmem:[#allocation4 + $0x2d0] sm:$0xff]
    %v3483 = vld [vmem:[#allocation4 + $0x2d8] sm:$0xff]
    %v3484 = vld [vmem:[#allocation4 + $0x2e0] sm:$0xff]
    %v3485 = vld [vmem:[#allocation4 + $0x2e8] sm:$0xff]
    %v3486 = vld [vmem:[#allocation4 + $0x2f0] sm:$0xff]
    %v3487 = vld [vmem:[#allocation4 + $0x2f8] sm:$0xff]
    %v3488 = vld [vmem:[#allocation4 + $0x300] sm:$0xff]
    %v3489 = vld [vmem:[#allocation4 + $0x308] sm:$0xff]
    %v3490 = vld [vmem:[#allocation4 + $0x310] sm:$0xff]
    %v3491 = vld [vmem:[#allocation4 + $0x318] sm:$0xff]
    %v3492 = vld [vmem:[#allocation4 + $0x320] sm:$0xff]
    %v3493 = vld [vmem:[#allocation4 + $0x328] sm:$0xff]
    %v3494 = vld [vmem:[#allocation4 + $0x330] sm:$0xff]
    %v3495 = vld [vmem:[#allocation4 + $0x338] sm:$0xff]
    %v3496 = vld [vmem:[#allocation4 + $0x340] sm:$0xff]
    %v3497 = vld [vmem:[#allocation4 + $0x348] sm:$0xff]
    %v3498 = vld [vmem:[#allocation4 + $0x350] sm:$0xff]
    %v3499 = vld [vmem:[#allocation4 + $0x358] sm:$0xff]
    %v3500 = vld [vmem:[#allocation4 + $0x360] sm:$0xff]
    %v3501 = vld [vmem:[#allocation4 + $0x368] sm:$0xff]
    %v3502 = vld [vmem:[#allocation4 + $0x370] sm:$0xff]
    %v3503 = vld [vmem:[#allocation4 + $0x378] sm:$0xff]
    %v3504 = vld [vmem:[#allocation4 + $0x380] sm:$0xff]
    %v3505 = vld [vmem:[#allocation4 + $0x388] sm:$0xff]
    %v3506 = vld [vmem:[#allocation4 + $0x390] sm:$0xff]
    %v3507 = vld [vmem:[#allocation4 + $0x398] sm:$0xff]
    %v3508 = vld [vmem:[#allocation4 + $0x3a0] sm:$0xff]
    %v3509 = vld [vmem:[#allocation4 + $0x3a8] sm:$0xff]
    %v3510 = vld [vmem:[#allocation4 + $0x3b0] sm:$0xff]
    %v3511 = vld [vmem:[#allocation4 + $0x3b8] sm:$0xff]
    %v3512 = vld [vmem:[#allocation4 + $0x3c0] sm:$0xff]
    %v3513 = vld [vmem:[#allocation4 + $0x3c8] sm:$0xff]
    %v3514 = vld [vmem:[#allocation4 + $0x3d0] sm:$0xff]
    %v3515 = vld [vmem:[#allocation4 + $0x3d8] sm:$0xff]
    %v3516 = vld [vmem:[#allocation4 + $0x3e0] sm:$0xff]
    %v3517 = vld [vmem:[#allocation4 + $0x3e8] sm:$0xff]
    %v3518 = vld [vmem:[#allocation4 + $0x3f0] sm:$0xff]
    %v3519 = vld [vmem:[#allocation4 + $0x3f8] sm:$0xff]
    %v3520 = vld [vmem:[#allocation4 + $0x400] sm:$0xff]
    %v3521 = vld [vmem:[#allocation4 + $0x408] sm:$0xff]
    %v3522 = vld [vmem:[#allocation4 + $0x410] sm:$0xff]
    %v3523 = vld [vmem:[#allocation4 + $0x418] sm:$0xff]
    %v3524 = vld [vmem:[#allocation4 + $0x420] sm:$0xff]
    %v3525 = vld [vmem:[#allocation4 + $0x428] sm:$0xff]
    %v3526 = vld [vmem:[#allocation4 + $0x430] sm:$0xff]
    %v3527 = vld [vmem:[#allocation4 + $0x438] sm:$0xff]
    %v3528 = vld [vmem:[#allocation4 + $0x440] sm:$0xff]
    %v3529 = vld [vmem:[#allocation4 + $0x448] sm:$0xff]
    %v3530 = vld [vmem:[#allocation4 + $0x450] sm:$0xff]
    %v3531 = vld [vmem:[#allocation4 + $0x458] sm:$0xff]
    %v3532 = vld [vmem:[#allocation4 + $0x460] sm:$0xff]
    %v3533 = vld [vmem:[#allocation4 + $0x468] sm:$0xff]
    %v3534 = vld [vmem:[#allocation4 + $0x470] sm:$0xff]
    %v3535 = vld [vmem:[#allocation4 + $0x478] sm:$0xff]
    %v3536 = vld [vmem:[#allocation4 + $0x480] sm:$0xff]
    %v3537 = vld [vmem:[#allocation4 + $0x488] sm:$0xff]
    %v3538 = vld [vmem:[#allocation4 + $0x490] sm:$0xff]
    %v3539 = vld [vmem:[#allocation4 + $0x498] sm:$0xff]
    %v3540 = vld [vmem:[#allocation4 + $0x4a0] sm:$0xff]
    %v3541 = vld [vmem:[#allocation4 + $0x4a8] sm:$0xff]
    %v3542 = vld [vmem:[#allocation4 + $0x4b0] sm:$0xff]
    %v3543 = vld [vmem:[#allocation4 + $0x4b8] sm:$0xff]
    %v3544 = vld [vmem:[#allocation4 + $0x4c0] sm:$0xff]
    %v3545 = vld [vmem:[#allocation4 + $0x4c8] sm:$0xff]
    %v3546 = vld [vmem:[#allocation4 + $0x4d0] sm:$0xff]
    %v3547 = vld [vmem:[#allocation4 + $0x4d8] sm:$0xff]
    %v3548 = vld [vmem:[#allocation4 + $0x4e0] sm:$0xff]
    %v3549 = vld [vmem:[#allocation4 + $0x4e8] sm:$0xff]
    %v3550 = vld [vmem:[#allocation4 + $0x4f0] sm:$0xff]
    %v3551 = vld [vmem:[#allocation4 + $0x4f8] sm:$0xff]
    %v3552 = vld [vmem:[#allocation4 + $0x500] sm:$0xff]
    %v3553 = vld [vmem:[#allocation4 + $0x508] sm:$0xff]
    %v3554 = vld [vmem:[#allocation4 + $0x510] sm:$0xff]
    %v3555 = vld [vmem:[#allocation4 + $0x518] sm:$0xff]
    %v3556 = vld [vmem:[#allocation4 + $0x520] sm:$0xff]
    %v3557 = vld [vmem:[#allocation4 + $0x528] sm:$0xff]
    %v3558 = vld [vmem:[#allocation4 + $0x530] sm:$0xff]
    %v3559 = vld [vmem:[#allocation4 + $0x538] sm:$0xff]
    %v3560 = vld [vmem:[#allocation4 + $0x540] sm:$0xff]
    %v3561 = vld [vmem:[#allocation4 + $0x548] sm:$0xff]
    %v3562 = vld [vmem:[#allocation4 + $0x550] sm:$0xff]
    %v3563 = vld [vmem:[#allocation4 + $0x558] sm:$0xff]
    %v3564 = vld [vmem:[#allocation4 + $0x560] sm:$0xff]
    %v3565 = vld [vmem:[#allocation4 + $0x568] sm:$0xff]
    %v3566 = vld [vmem:[#allocation4 + $0x570] sm:$0xff]
    %v3567 = vld [vmem:[#allocation4 + $0x578] sm:$0xff]
    %v3568 = vld [vmem:[#allocation4 + $0x580] sm:$0xff]
    %v3569 = vld [vmem:[#allocation4 + $0x588] sm:$0xff]
    %v3570 = vld [vmem:[#allocation4 + $0x590] sm:$0xff]
    %v3571 = vld [vmem:[#allocation4 + $0x598] sm:$0xff]
    %v3572 = vld [vmem:[#allocation4 + $0x5a0] sm:$0xff]
    %v3573 = vld [vmem:[#allocation4 + $0x5a8] sm:$0xff]
    %v3574 = vld [vmem:[#allocation4 + $0x5b0] sm:$0xff]
    %v3575 = vld [vmem:[#allocation4 + $0x5b8] sm:$0xff]
    %v3576 = vld [vmem:[#allocation4 + $0x5c0] sm:$0xff]
    %v3577 = vld [vmem:[#allocation4 + $0x5c8] sm:$0xff]
    %v3578 = vld [vmem:[#allocation4 + $0x5d0] sm:$0xff]
    %v3579 = vld [vmem:[#allocation4 + $0x5d8] sm:$0xff]
    %v3580 = vld [vmem:[#allocation4 + $0x5e0] sm:$0xff]
    %v3581 = vld [vmem:[%s5] sm:$0xff]
    %3583 = vset.pattern.permute.xlu0 0
    %3584 = vperm.xlu0 %3583, %v3581
    %v3585 = vpop.permute.xlu0 %3584
    %v3588 = vsel %vm587, %v3391, 0
    %3590 = vmatprep.subr.mxu0 %v3498
    %3591 = vmatpush1.msra.mxu0 %v3497
    %3592 = vmatprep.subr.mxu0 %v3491
    %3593 = vmatpush1.msra.mxu0 %v3490
    %3594 = vmatprep.subr.mxu0 %v3484
    %3595 = vmatpush1.msra.mxu0 %v3483
    %3596 = vmatprep.subr.mxu0 %v3477
    %3597 = vmatpush1.msra.mxu0 %v3476
    %3598 = vmatprep.subr.mxu0 %v3470
    %3599 = vmatpush1.msra.mxu0 %v3469
    %3600 = vmatprep.subr.mxu0 %v3463
    %3601 = vmatpush1.msra.mxu0 %v3462
    %3602 = vmatprep.subr.mxu0 %v3456
    %3603 = vmatpush1.msra.mxu0 %v3455
    %3604 = vmatprep.subr.mxu0 %v3449
    %3605 = vmatpush1.msra.mxu0 %v3448
    %3606 = vmatprep.subr.mxu0 %v3442
    %3607 = vmatpush1.msra.mxu0 %v3441
    %3608 = vmatprep.subr.mxu0 %v3435
    %3609 = vmatpush1.msra.mxu0 %v3434
    %3610 = vmatprep.subr.mxu0 %v3428
    %3611 = vmatpush1.msra.mxu0 %v3427
    %3612 = vmatprep.subr.mxu0 %v3421
    %3613 = vmatpush1.msra.mxu0 %v3420
    %3614 = vmatprep.subr.mxu0 %v3414
    %3615 = vmatpush1.msra.mxu0 %v3413
    %3616 = vmatprep.subr.mxu0 %v3407
    %3617 = vmatpush1.msra.mxu0 %v3406
    %3618 = vmatprep.subr.mxu0 %v3400
    %3619 = vmatpush1.msra.mxu0 %v3399
    %3620 = vmatprep.subr.mxu0 %v3393
    %3621 = vmatpush1.msra.mxu0 %v3392
    %3622 = vmatprep.subr.mxu0 0.0
    %3623 = vmatpush2.msra.mxu0 0.0
    %3624 = vmatprep.subr.mxu0 0.0
    %3625 = vmatpush2.msra.mxu0 0.0
    %3626 = vmatprep.subr.mxu0 0.0
    %3627 = vmatpush2.msra.mxu0 0.0
    %3628 = vmatprep.subr.mxu0 0.0
    %3629 = vmatpush2.msra.mxu0 0.0
    %3630 = vmatprep.subr.mxu0 0.0
    %3631 = vmatpush2.msra.mxu0 0.0
    %3632 = vmatprep.subr.mxu0 %v3575
    %3633 = vmatpush2.msra.mxu0 %v3574
    %3634 = vmatprep.subr.mxu0 %v3568
    %3635 = vmatpush2.msra.mxu0 %v3567
    %3636 = vmatprep.subr.mxu0 %v3561
    %3637 = vmatpush2.msra.mxu0 %v3560
    %3638 = vmatprep.subr.mxu0 %v3554
    %3639 = vmatpush2.msra.mxu0 %v3553
    %3640 = vmatprep.subr.mxu0 %v3547
    %3641 = vmatpush2.msra.mxu0 %v3546
    %3642 = vmatprep.subr.mxu0 %v3540
    %3643 = vmatpush2.msra.mxu0 %v3539
    %3644 = vmatprep.subr.mxu0 %v3533
    %3645 = vmatpush2.msra.mxu0 %v3532
    %3646 = vmatprep.subr.mxu0 %v3526
    %3647 = vmatpush2.msra.mxu0 %v3525
    %3648 = vmatprep.subr.mxu0 %v3519
    %3649 = vmatpush2.msra.mxu0 %v3518
    %3650 = vmatprep.subr.mxu0 %v3512
    %3651 = vmatpush2.msra.mxu0 %v3511
    %3652 = vmatprep.subr.mxu0 %v3505
    %3653 = vmatpush2.msra.mxu0 %v3504
    %3654 = vmatprep.mubr.f32.mxu0 %v3588
    %3655 = vmatmul.mubr.f32.gmra.mxu0 %v3390
    %v3656 = vpop.f32.mrf.mxu0
    %v3657 = vadd.f32 %v3585, %v3656
    %v3658 = vpop.f32.mrf.mxu0
    %v3659 = vadd.f32 %v3585, %v3658
    %3660 = vdwg.mxu0
    %3661 = vmatprep.subr.mxu0 %v3500
    %3662 = vmatpush1.msra.mxu0 %v3499
    %3663 = vmatprep.subr.mxu0 %v3493
    %3664 = vmatpush1.msra.mxu0 %v3492
    %3665 = vmatprep.subr.mxu0 %v3486
    %3666 = vmatpush1.msra.mxu0 %v3485
    %3667 = vmatprep.subr.mxu0 %v3479
    %3668 = vmatpush1.msra.mxu0 %v3478
    %3669 = vmatprep.subr.mxu0 %v3472
    %3670 = vmatpush1.msra.mxu0 %v3471
    %3671 = vmatprep.subr.mxu0 %v3465
    %3672 = vmatpush1.msra.mxu0 %v3464
    %3673 = vmatprep.subr.mxu0 %v3458
    %3674 = vmatpush1.msra.mxu0 %v3457
    %3675 = vmatprep.subr.mxu0 %v3451
    %3676 = vmatpush1.msra.mxu0 %v3450
    %3677 = vmatprep.subr.mxu0 %v3444
    %3678 = vmatpush1.msra.mxu0 %v3443
    %3679 = vmatprep.subr.mxu0 %v3437
    %3680 = vmatpush1.msra.mxu0 %v3436
    %3681 = vmatprep.subr.mxu0 %v3430
    %3682 = vmatpush1.msra.mxu0 %v3429
    %3683 = vmatprep.subr.mxu0 %v3423
    %3684 = vmatpush1.msra.mxu0 %v3422
    %3685 = vmatprep.subr.mxu0 %v3416
    %3686 = vmatpush1.msra.mxu0 %v3415
    %3687 = vmatprep.subr.mxu0 %v3409
    %3688 = vmatpush1.msra.mxu0 %v3408
    %3689 = vmatprep.subr.mxu0 %v3402
    %3690 = vmatpush1.msra.mxu0 %v3401
    %3691 = vmatprep.subr.mxu0 %v3395
    %3692 = vmatpush1.msra.mxu0 %v3394
    %3693 = vmatprep.subr.mxu0 0.0
    %3694 = vmatpush2.msra.mxu0 0.0
    %3695 = vmatprep.subr.mxu0 0.0
    %3696 = vmatpush2.msra.mxu0 0.0
    %3697 = vmatprep.subr.mxu0 0.0
    %3698 = vmatpush2.msra.mxu0 0.0
    %3699 = vmatprep.subr.mxu0 0.0
    %3700 = vmatpush2.msra.mxu0 0.0
    %3701 = vmatprep.subr.mxu0 0.0
    %3702 = vmatpush2.msra.mxu0 0.0
    %3703 = vmatprep.subr.mxu0 %v3577
    %3704 = vmatpush2.msra.mxu0 %v3576
    %3705 = vmatprep.subr.mxu0 %v3570
    %3706 = vmatpush2.msra.mxu0 %v3569
    %3707 = vmatprep.subr.mxu0 %v3563
    %3708 = vmatpush2.msra.mxu0 %v3562
    %3709 = vmatprep.subr.mxu0 %v3556
    %3710 = vmatpush2.msra.mxu0 %v3555
    %3711 = vmatprep.subr.mxu0 %v3549
    %3712 = vmatpush2.msra.mxu0 %v3548
    %3713 = vmatprep.subr.mxu0 %v3542
    %3714 = vmatpush2.msra.mxu0 %v3541
    %3715 = vmatprep.subr.mxu0 %v3535
    %3716 = vmatpush2.msra.mxu0 %v3534
    %3717 = vmatprep.subr.mxu0 %v3528
    %3718 = vmatpush2.msra.mxu0 %v3527
    %3719 = vmatprep.subr.mxu0 %v3521
    %3720 = vmatpush2.msra.mxu0 %v3520
    %3721 = vmatprep.subr.mxu0 %v3514
    %3722 = vmatpush2.msra.mxu0 %v3513
    %3723 = vmatprep.subr.mxu0 %v3507
    %3724 = vmatpush2.msra.mxu0 %v3506
    %3725 = vmatprep.mubr.f32.mxu0 %v3588
    %3726 = vmatmul.mubr.f32.gmra.mxu0 %v3390
    %v3727 = vpop.f32.mrf.mxu0
    %v3728 = vadd.f32 %v3585, %v3727
    %v3729 = vpop.f32.mrf.mxu0
    %v3730 = vadd.f32 %v3585, %v3729
    %3731 = vdwg.mxu0
    %3732 = vmatprep.subr.mxu0 %v3502
    %3733 = vmatpush1.msra.mxu0 %v3501
    %3734 = vmatprep.subr.mxu0 %v3495
    %3735 = vmatpush1.msra.mxu0 %v3494
    %3736 = vmatprep.subr.mxu0 %v3488
    %3737 = vmatpush1.msra.mxu0 %v3487
    %3738 = vmatprep.subr.mxu0 %v3481
    %3739 = vmatpush1.msra.mxu0 %v3480
    %3740 = vmatprep.subr.mxu0 %v3474
    %3741 = vmatpush1.msra.mxu0 %v3473
    %3742 = vmatprep.subr.mxu0 %v3467
    %3743 = vmatpush1.msra.mxu0 %v3466
    %3744 = vmatprep.subr.mxu0 %v3460
    %3745 = vmatpush1.msra.mxu0 %v3459
    %3746 = vmatprep.subr.mxu0 %v3453
    %3747 = vmatpush1.msra.mxu0 %v3452
    %3748 = vmatprep.subr.mxu0 %v3446
    %3749 = vmatpush1.msra.mxu0 %v3445
    %3750 = vmatprep.subr.mxu0 %v3439
    %3751 = vmatpush1.msra.mxu0 %v3438
    %3752 = vmatprep.subr.mxu0 %v3432
    %3753 = vmatpush1.msra.mxu0 %v3431
    %3754 = vmatprep.subr.mxu0 %v3425
    %3755 = vmatpush1.msra.mxu0 %v3424
    %3756 = vmatprep.subr.mxu0 %v3418
    %3757 = vmatpush1.msra.mxu0 %v3417
    %3758 = vmatprep.subr.mxu0 %v3411
    %3759 = vmatpush1.msra.mxu0 %v3410
    %3760 = vmatprep.subr.mxu0 %v3404
    %3761 = vmatpush1.msra.mxu0 %v3403
    %3762 = vmatprep.subr.mxu0 %v3397
    %3763 = vmatpush1.msra.mxu0 %v3396
    %3764 = vmatprep.subr.mxu0 0.0
    %3765 = vmatpush2.msra.mxu0 0.0
    %3766 = vmatprep.subr.mxu0 0.0
    %3767 = vmatpush2.msra.mxu0 0.0
    %3768 = vmatprep.subr.mxu0 0.0
    %3769 = vmatpush2.msra.mxu0 0.0
    %3770 = vmatprep.subr.mxu0 0.0
    %3771 = vmatpush2.msra.mxu0 0.0
    %3772 = vmatprep.subr.mxu0 0.0
    %3773 = vmatpush2.msra.mxu0 0.0
    %3774 = vmatprep.subr.mxu0 %v3579
    %3775 = vmatpush2.msra.mxu0 %v3578
    %3776 = vmatprep.subr.mxu0 %v3572
    %3777 = vmatpush2.msra.mxu0 %v3571
    %3778 = vmatprep.subr.mxu0 %v3565
    %3779 = vmatpush2.msra.mxu0 %v3564
    %3780 = vmatprep.subr.mxu0 %v3558
    %3781 = vmatpush2.msra.mxu0 %v3557
    %3782 = vmatprep.subr.mxu0 %v3551
    %3783 = vmatpush2.msra.mxu0 %v3550
    %3784 = vmatprep.subr.mxu0 %v3544
    %3785 = vmatpush2.msra.mxu0 %v3543
    %3786 = vmatprep.subr.mxu0 %v3537
    %3787 = vmatpush2.msra.mxu0 %v3536
    %3788 = vmatprep.subr.mxu0 %v3530
    %3789 = vmatpush2.msra.mxu0 %v3529
    %3790 = vmatprep.subr.mxu0 %v3523
    %3791 = vmatpush2.msra.mxu0 %v3522
    %3792 = vmatprep.subr.mxu0 %v3516
    %3793 = vmatpush2.msra.mxu0 %v3515
    %3794 = vmatprep.subr.mxu0 %v3509
    %3795 = vmatpush2.msra.mxu0 %v3508
    %3796 = vmatprep.mubr.f32.mxu0 %v3588
    %3797 = vmatmul.mubr.f32.gmra.mxu0 %v3390
    %v3798 = vpop.f32.mrf.mxu0
    %v3799 = vadd.f32 %v3585, %v3798
    %v3800 = vpop.f32.mrf.mxu0
    %v3801 = vadd.f32 %v3585, %v3800
    %3802 = vdwg.mxu0
    %3803 = vmatprep.subr.mxu0 0.0
    %3804 = vmatpush1.msra.mxu0 %v3503
    %3805 = vmatprep.subr.mxu0 0.0
    %3806 = vmatpush1.msra.mxu0 %v3496
    %3807 = vmatprep.subr.mxu0 0.0
    %3808 = vmatpush1.msra.mxu0 %v3489
    %3809 = vmatprep.subr.mxu0 0.0
    %3810 = vmatpush1.msra.mxu0 %v3482
    %3811 = vmatprep.subr.mxu0 0.0
    %3812 = vmatpush1.msra.mxu0 %v3475
    %3813 = vmatprep.subr.mxu0 0.0
    %3814 = vmatpush1.msra.mxu0 %v3468
    %3815 = vmatprep.subr.mxu0 0.0
    %3816 = vmatpush1.msra.mxu0 %v3461
    %3817 = vmatprep.subr.mxu0 0.0
    %3818 = vmatpush1.msra.mxu0 %v3454
    %3819 = vmatprep.subr.mxu0 0.0
    %3820 = vmatpush1.msra.mxu0 %v3447
    %3821 = vmatprep.subr.mxu0 0.0
    %3822 = vmatpush1.msra.mxu0 %v3440
    %3823 = vmatprep.subr.mxu0 0.0
    %3824 = vmatpush1.msra.mxu0 %v3433
    %3825 = vmatprep.subr.mxu0 0.0
    %3826 = vmatpush1.msra.mxu0 %v3426
    %3827 = vmatprep.subr.mxu0 0.0
    %3828 = vmatpush1.msra.mxu0 %v3419
    %3829 = vmatprep.subr.mxu0 0.0
    %3830 = vmatpush1.msra.mxu0 %v3412
    %3831 = vmatprep.subr.mxu0 0.0
    %3832 = vmatpush1.msra.mxu0 %v3405
    %3833 = vmatprep.subr.mxu0 0.0
    %3834 = vmatpush1.msra.mxu0 %v3398
    %3835 = vmatprep.subr.mxu0 0.0
    %3836 = vmatpush2.msra.mxu0 0.0
    %3837 = vmatprep.subr.mxu0 0.0
    %3838 = vmatpush2.msra.mxu0 0.0
    %3839 = vmatprep.subr.mxu0 0.0
    %3840 = vmatpush2.msra.mxu0 0.0
    %3841 = vmatprep.subr.mxu0 0.0
    %3842 = vmatpush2.msra.mxu0 0.0
    %3843 = vmatprep.subr.mxu0 0.0
    %3844 = vmatpush2.msra.mxu0 0.0
    %3845 = vmatprep.subr.mxu0 0.0
    %3846 = vmatpush2.msra.mxu0 %v3580
    %3847 = vmatprep.subr.mxu0 0.0
    %3848 = vmatpush2.msra.mxu0 %v3573
    %3849 = vmatprep.subr.mxu0 0.0
    %3850 = vmatpush2.msra.mxu0 %v3566
    %3851 = vmatprep.subr.mxu0 0.0
    %3852 = vmatpush2.msra.mxu0 %v3559
    %3853 = vmatprep.subr.mxu0 0.0
    %3854 = vmatpush2.msra.mxu0 %v3552
    %3855 = vmatprep.subr.mxu0 0.0
    %3856 = vmatpush2.msra.mxu0 %v3545
    %3857 = vmatprep.subr.mxu0 0.0
    %3858 = vmatpush2.msra.mxu0 %v3538
    %3859 = vmatprep.subr.mxu0 0.0
    %3860 = vmatpush2.msra.mxu0 %v3531
    %3861 = vmatprep.subr.mxu0 0.0
    %3862 = vmatpush2.msra.mxu0 %v3524
    %3863 = vmatprep.subr.mxu0 0.0
    %3864 = vmatpush2.msra.mxu0 %v3517
    %3865 = vmatprep.subr.mxu0 0.0
    %3866 = vmatpush2.msra.mxu0 %v3510
    %3867 = vmatprep.mubr.f32.mxu0 %v3588
    %3868 = vmatmul.mubr.f32.gmra.mxu0 %v3390
    %v3869 = vpop.f32.mrf.mxu0
    %v3870 = vadd.f32 %v3585, %v3869
    %v3871 = vpop.f32.mrf.mxu0
    %3872 = vdwg.mxu0
    %v3873 = vmul.f32 %v3657, %v1970
    %v3874 = vmul.f32 %v3659, %v1974
    %v3875 = vmul.f32 %v3728, %v1978
    %v3876 = vmul.f32 %v3730, %v1982
    %v3877 = vmul.f32 %v3799, %v1986
    %v3878 = vmul.f32 %v3801, %v1990
    %v3879 = vmul.f32 %v3870, %v1994
    %v3880 = vadd.f32 %v3873, %v3874
    %v3881 = vadd.f32 %v3880, %v3875
    %v3882 = vadd.f32 %v3881, %v3876
    %v3883 = vadd.f32 %v3882, %v3877
    %v3884 = vadd.f32 %v3883, %v3878
    %v3885 = vadd.f32 %v3884, %v3879
    %3886 = vadd.xlane.f32.xlu0 %v3885
    %v3887 = vpop.xlane.xlu0 %3886
    %v3888 = vmul.f32 %v3887, 0.001953125
    %v3889 = vsub.f32 %v3657, %v3888
    %v3890 = vsub.f32 %v3659, %v3888
    %v3891 = vsub.f32 %v3728, %v3888
    %v3892 = vsub.f32 %v3730, %v3888
    %v3893 = vsub.f32 %v3799, %v3888
    %v3894 = vsub.f32 %v3801, %v3888
    %v3895 = vsub.f32 %v3870, %v3888
    %v3896 = vmul.f32 %v3889, %v1970
    %v3897 = vmul.f32 %v3890, %v1974
    %v3898 = vmul.f32 %v3891, %v1978
    %v3899 = vmul.f32 %v3892, %v1982
    %v3900 = vmul.f32 %v3893, %v1986
    %v3901 = vmul.f32 %v3894, %v1990
    %v3902 = vmul.f32 %v3895, %v1994
    %v3903 = vmul.f32 %v3896, %v3896
    %v3904 = vmul.f32 %v3897, %v3897
    %v3905 = vmul.f32 %v3898, %v3898
    %v3906 = vmul.f32 %v3899, %v3899
    %v3907 = vmul.f32 %v3900, %v3900
    %v3908 = vmul.f32 %v3901, %v3901
    %v3909 = vmul.f32 %v3902, %v3902
    %v3910 = vadd.f32 %v3903, %v3904
    %v3911 = vadd.f32 %v3910, %v3905
    %v3912 = vadd.f32 %v3911, %v3906
    %v3913 = vadd.f32 %v3912, %v3907
    %v3914 = vadd.f32 %v3913, %v3908
    %v3915 = vadd.f32 %v3914, %v3909
    %3916 = vadd.xlane.f32.xlu0 %v3915
    %v3917 = vpop.xlane.xlu0 %3916
    %v3918 = vmul.f32 %v3917, 0.001953125
    %v3919 = vadd.f32 %v3918, 1e-05
    %v3920 = vrsqrt.pop %v3919
    %v3921 = vmul.f32 %v3889, %v3920
    %v3922 = vmul.f32 %v3890, %v3920
    %v3923 = vmul.f32 %v3891, %v3920
    %v3924 = vmul.f32 %v3892, %v3920
    %v3925 = vmul.f32 %v3893, %v3920
    %v3926 = vmul.f32 %v3894, %v3920
    %v3927 = vmul.f32 %v3895, %v3920
    %v3928 = vld [vmem:[%s6] sm:$0xff]
    %3930 = vset.pattern.permute.xlu0 0
    %3931 = vperm.xlu0 %3930, %v3928
    %v3932 = vpop.permute.xlu0 %3931
    %v3934 = vmul.f32 %v3921, %v3932
    %v3935 = vmul.f32 %v3922, %v3932
    %v3936 = vmul.f32 %v3923, %v3932
    %v3937 = vmul.f32 %v3924, %v3932
    %v3938 = vmul.f32 %v3925, %v3932
    %v3939 = vmul.f32 %v3926, %v3932
    %v3940 = vmul.f32 %v3927, %v3932
    %v3941 = vld [vmem:[%s7] sm:$0xff]
    %3943 = vset.pattern.permute.xlu0 0
    %3944 = vperm.xlu0 %3943, %v3941
    %v3945 = vpop.permute.xlu0 %3944
    %v3947 = vadd.f32 %v3934, %v3945
    %v3948 = vadd.f32 %v3935, %v3945
    %v3949 = vadd.f32 %v3936, %v3945
    %v3950 = vadd.f32 %v3937, %v3945
    %v3951 = vadd.f32 %v3938, %v3945
    %v3952 = vadd.f32 %v3939, %v3945
    %v3953 = vadd.f32 %v3940, %v3945
    %vm3954 = vcmp.gt.f32.partialorder %v3947, 0.0
    %vm3955 = vcmp.gt.f32.partialorder %v3948, 0.0
    %vm3956 = vcmp.gt.f32.partialorder %v3949, 0.0
    %vm3957 = vcmp.gt.f32.partialorder %v3950, 0.0
    %vm3958 = vcmp.gt.f32.partialorder %v3951, 0.0
    %vm3959 = vcmp.gt.f32.partialorder %v3952, 0.0
    %vm3960 = vcmp.gt.f32.partialorder %v3953, 0.0
    %v3961 = vmul.f32 %v3947, 0.25
    %v3962 = vmul.f32 %v3948, 0.25
    %v3963 = vmul.f32 %v3949, 0.25
    %v3964 = vmul.f32 %v3950, 0.25
    %v3965 = vmul.f32 %v3951, 0.25
    %v3966 = vmul.f32 %v3952, 0.25
    %v3967 = vmul.f32 %v3953, 0.25
    %v3968 = vsel %vm3954, %v3947, %v3961
    %v3969 = vsel %vm3955, %v3948, %v3962
    %v3970 = vsel %vm3956, %v3949, %v3963
    %v3971 = vsel %vm3957, %v3950, %v3964
    %v3972 = vsel %vm3958, %v3951, %v3965
    %v3973 = vsel %vm3959, %v3952, %v3966
    %v3974 = vsel %vm3960, %v3953, %v3967
    %3975 = vst [vmem:[#allocation10] sm:$0xff] %v3968
    %3976 = vst [vmem:[#allocation10 + $0x8] sm:$0xff] %v3969
    %3977 = vst [vmem:[#allocation10 + $0x10] sm:$0xff] %v3970
    %3978 = vst [vmem:[#allocation10 + $0x18] sm:$0xff] %v3971
    %3979 = vst [vmem:[#allocation10 + $0x20] sm:$0xff] %v3972
    %3980 = vst [vmem:[#allocation10 + $0x28] sm:$0xff] %v3973
    %3981 = vst [vmem:[#allocation10 + $0x30] sm:$0xff] %v3974
    // Predicated region
    $region42: #{tpu_custom_call.1} parent=1 // pred_check
      _
    $region43: #{tpu_custom_call.1} parent=1 // pred_check_branch
      %3983 = sbr.rel (0) target = $region45
    $region44: #{tpu_custom_call.1} parent=1 // pred_region
      %s3985 = ssub.s32 896, 896
      %3986 = vsyncadd [#allocation7], %s3985
      %s3988 = sshll.u32 [#allocation10], 4
      %s3989 = int_to_ptr.vmem [resolvable:$true] %s3988
      %3991 = dma.vmem_to_hbm [thread:$0]  %s3989, 896, %s8, [#allocation7]
    $region45: #{tpu_custom_call.1} parent=1 // pred_fallthru
      _
    // Predicated region
    $region46: #{tpu_custom_call.1} parent=1 // pred_check
      _
    $region47: #{tpu_custom_call.1} parent=1 // pred_check_branch
      %3993 = sbr.rel (0) target = $region49
    $region48: #{tpu_custom_call.1} parent=1 // pred_region
      %3994 = dma.done [#allocation7], 896
    $region49: #{tpu_custom_call.1} parent=1 // pred_fallthru
      _
    %3995 = vsyncpa [#allocation6], 1
    %3996 = vsyncpa [#allocation9], 1
    %3997 = vsyncpa [#allocation7], 1

</llo_original>
